<compile_context>
chip_gen: v7x
topology: tpu7x:2x2x1
jax: 0.10.0
libtpu: 0.0.40
codegen_flags: <defaults>
</compile_context>

<pallas_src>
import functools

import jax
import jax.numpy as jnp
from jax.experimental import pallas as pl
from jax.experimental.pallas import tpu as pltpu

# Model dims (torch module: 4 inputs, hiddenLayerWidths=(8, 5), 2 outputs)
IN_DIM = 4
H0 = 8
H1 = 5
OUT_DIM = 2

H1_PAD = 128   # lane padding for the single MXU layer (lane-dense, known-good tile)


def _mlp_softmax_kernel(x_ref, w0_ref, b0_ref, w1_ref, b1_ref, w2_ref, b2_ref,
                        o_ref, *, batch_per_group, groups_per_step):
    """One grid step = `groups_per_step` independent CartPole batches.

    Layers 0 and 2 are VPU broadcast-FMA chains (tiny K / tiny output width),
    layer 1 is one MXU pass over all groups_per_step*batch_per_group rows.
    Softmax is applied per group over its own batch axis (torch's dim=0).
    """
    x = x_ref[...]                                       # (R, 4) f32

    # ---- layer 0: Linear(4->8) + ReLU  (VPU broadcast-FMA, no MXU pass) ----
    w0 = w0_ref[...]                                     # (4, 8)
    h0 = b0_ref[...]                                     # (1, 8) -> broadcasts
    for k in range(IN_DIM):
        h0 = h0 + x[:, k:k + 1] * w0[k:k + 1, :]         # (R,1)*(1,8) -> (R,8)
    h0 = jnp.maximum(h0, 0.0)                            # (R, 8)

    # ---- layer 1: Linear(8->5) + ReLU  (single MXU pass over all rows) -----
    h1 = jnp.dot(h0, w1_ref[...],
                 preferred_element_type=jnp.float32) + b1_ref[...]
    h1 = jnp.maximum(h1, 0.0)                            # (R, 128); lanes >= 5 are 0

    # ---- layer 2: Linear(5->2) + ReLU  (VPU broadcast-FMA) -----------------
    w2 = w2_ref[...]                                     # (5, 2)
    h2 = b2_ref[...]                                     # (1, 2) -> broadcasts
    for k in range(H1):
        h2 = h2 + h1[:, k:k + 1] * w2[k:k + 1, :]        # (R,1)*(1,2) -> (R,2)
    h2 = jnp.maximum(h2, 0.0)                            # (R, 2)

    # ---- per-group softmax over dim=0 (the group's batch axis) -------------
    B = batch_per_group
    for g in range(groups_per_step):                     # static, fully unrolled
        rows = h2[g * B:(g + 1) * B, :]                  # (B, 2)
        m = jnp.max(rows, axis=0, keepdims=True)
        e = jnp.exp(rows - m)
        s = jnp.sum(e, axis=0, keepdims=True)
        o_ref[g * B:(g + 1) * B, :] = e / s              # exact divide: rows sum to 1


def init_params(key):
    """Deterministic synthetic init, un-padded.

    Weights: Xavier-uniform (as in init_weights), stored as (in, out).
    Biases: torch Linear default U(-1/sqrt(fan_in), 1/sqrt(fan_in)).
    """
    dims = [(IN_DIM, H0), (H0, H1), (H1, OUT_DIM)]
    params = []
    for fan_in, fan_out in dims:
        key, kw, kb = jax.random.split(key, 3)
        limit = (6.0 / (fan_in + fan_out)) ** 0.5
        w = jax.random.uniform(kw, (fan_in, fan_out), jnp.float32, -limit, limit)
        bb = 1.0 / (fan_in ** 0.5)
        b = jax.random.uniform(kb, (fan_out,), jnp.float32, -bb, bb)
        params.append((w, b))
    return params


def prepare_kernel_params(params):
    """One-time layout prep (hoisted out of the forward).

    Only the MXU layer (layer 1) is lane-padded to 128; layers 0 and 2 are used
    as VPU operands and stay at their true (tiny) shapes.
    """
    (w0, b0), (w1, b1), (w2, b2) = params
    w1_p = jnp.zeros((H0, H1_PAD), jnp.float32).at[:, :H1].set(w1)
    b1_p = jnp.zeros((1, H1_PAD), jnp.float32).at[0, :H1].set(b1)
    return (w0, b0.reshape(1, H0), w1_p, b1_p, w2, b2.reshape(1, OUT_DIM))


def neural_net_forward(x, kparams, *, groups_per_step=32):
    """x: (G, B, 4) float32 -- G independent batches of B rescaled observations.

    Returns (G, B, 2): for each group g, softmax over axis 0 (its batch axis) of
    the 3-layer ReLU MLP output, matching the torch module's forward per group.
    """
    G, B, d = x.shape
    assert d == IN_DIM
    w0, b0, w1, b1, w2, b2 = kparams

    # Pick how many groups each grid step handles (divides G; rows 8-aligned).
    gps = min(groups_per_step, G)
    while G % gps:
        gps -= 1
    if (gps * B) % 8 != 0:
        gps = G                      # fall back to one full-extent block
    rows = gps * B
    n_rows = G * B
    steps = G // gps

    x2 = x.reshape(n_rows, IN_DIM).astype(jnp.float32)

    # Weights/biases: full-array blocks with a constant index_map -> VMEM-resident
    # across the whole grid (no per-step re-DMA of the parameter set).
    full = lambda arr: pl.BlockSpec(arr.shape, lambda t: (0,) * arr.ndim)

    out = pl.pallas_call(
        functools.partial(_mlp_softmax_kernel,
                          batch_per_group=B, groups_per_step=gps),
        out_shape=jax.ShapeDtypeStruct((n_rows, OUT_DIM), jnp.float32),
        grid=(steps,),
        in_specs=[
            pl.BlockSpec((rows, IN_DIM), lambda t: (t, 0)),   # x rows advance
            full(w0), full(b0), full(w1), full(b1), full(w2), full(b2),
        ],
        out_specs=pl.BlockSpec((rows, OUT_DIM), lambda t: (t, 0)),
        compiler_params=pltpu.CompilerParams(
            dimension_semantics=("parallel",)),   # shards across v7x's 2 TCs
    )(x2, w0, b0, w1, b1, w2, b2)

    return out.reshape(G, B, OUT_DIM)


def _reference(x, params):
    h = x.astype(jnp.float32)
    for w, b in params:
        h = jnp.maximum(jnp.einsum("gbi,io->gbo", h, w) + b, 0.0)
    return jax.nn.softmax(h, axis=1)   # dim=0 of each group's (B, 2) tensor


if __name__ == "__main__":
    key = jax.random.PRNGKey(0)
    kp, kx = jax.random.split(key)
    params = init_params(kp)
    kparams = prepare_kernel_params(params)   # layout prep done once

    # 64 independent CartPole batches of 8 observations each (rescaled obs in [0,1]).
    G, B = 64, 8
    x = jax.random.uniform(kx, (G, B, IN_DIM), jnp.float32)

    fwd = jax.jit(neural_net_forward)
    out = jax.block_until_ready(fwd(x, kparams))

    ref = _reference(x, params)
    assert out.shape == (G, B, OUT_DIM)
    assert jnp.allclose(out, ref, atol=1e-5, rtol=1e-4), (
        float(jnp.max(jnp.abs(out - ref))))

    print("KERNEL_OK")
</pallas_src>

<mosaic_0001>
module attributes {stable_mosaic.version = 11 : i64} {
  func.func @_mlp_softmax_kernel(%arg0: i32, %arg1: memref<256x4xf32, #tpu.memory_space<vmem>>, %arg2: memref<4x8xf32, #tpu.memory_space<vmem>>, %arg3: memref<1x8xf32, #tpu.memory_space<vmem>>, %arg4: memref<8x128xf32, #tpu.memory_space<vmem>>, %arg5: memref<1x128xf32, #tpu.memory_space<vmem>>, %arg6: memref<5x2xf32, #tpu.memory_space<vmem>>, %arg7: memref<1x2xf32, #tpu.memory_space<vmem>>, %arg8: memref<256x2xf32, #tpu.memory_space<vmem>>) attributes {dimension_semantics = [#tpu.dimension_semantics<parallel>], iteration_bounds = array<i64: 2>, scalar_prefetch = 0 : i64, scratch_operands = 0 : i64, tpu.core_type = #tpu.core_type<tc>, window_params = [{transform_indices = @transform_0, window_bounds = array<i64: 256, 4>}, {pipeline_mode = #tpu.pipeline_mode<synchronous>, transform_indices = @transform_1, window_bounds = array<i64: 4, 8>}, {pipeline_mode = #tpu.pipeline_mode<synchronous>, transform_indices = @transform_2, window_bounds = array<i64: 1, 8>}, {pipeline_mode = #tpu.pipeline_mode<synchronous>, transform_indices = @transform_3, window_bounds = array<i64: 8, 128>}, {pipeline_mode = #tpu.pipeline_mode<synchronous>, transform_indices = @transform_4, window_bounds = array<i64: 1, 128>}, {pipeline_mode = #tpu.pipeline_mode<synchronous>, transform_indices = @transform_5, window_bounds = array<i64: 5, 2>}, {pipeline_mode = #tpu.pipeline_mode<synchronous>, transform_indices = @transform_6, window_bounds = array<i64: 1, 2>}, {transform_indices = @transform_7, window_bounds = array<i64: 256, 2>}]} {
    %c0 = arith.constant 0 : index
    %c0_0 = arith.constant 0 : index
    %0 = vector.load %arg1[%c0, %c0_0] : memref<256x4xf32, #tpu.memory_space<vmem>>, vector<256x4xf32>
    %c0_1 = arith.constant 0 : index
    %c0_2 = arith.constant 0 : index
    %1 = vector.load %arg2[%c0_1, %c0_2] : memref<4x8xf32, #tpu.memory_space<vmem>>, vector<4x8xf32>
    %c0_3 = arith.constant 0 : index
    %c0_4 = arith.constant 0 : index
    %2 = vector.load %arg3[%c0_3, %c0_4] : memref<1x8xf32, #tpu.memory_space<vmem>>, vector<1x8xf32>
    %3 = vector.extract_strided_slice %0 {offsets = [0, 0], sizes = [256, 1], strides = [1, 1]} : vector<256x4xf32> to vector<256x1xf32>
    %4 = vector.extract_strided_slice %1 {offsets = [0, 0], sizes = [1, 8], strides = [1, 1]} : vector<4x8xf32> to vector<1x8xf32>
    %5 = vector.broadcast %3 : vector<256x1xf32> to vector<256x8xf32>
    %6 = vector.broadcast %4 : vector<1x8xf32> to vector<256x8xf32>
    %7 = arith.mulf %5, %6 : vector<256x8xf32>
    %8 = vector.broadcast %2 : vector<1x8xf32> to vector<256x8xf32>
    %9 = arith.addf %8, %7 : vector<256x8xf32>
    %10 = vector.extract_strided_slice %0 {offsets = [0, 1], sizes = [256, 1], strides = [1, 1]} : vector<256x4xf32> to vector<256x1xf32>
    %11 = vector.extract_strided_slice %1 {offsets = [1, 0], sizes = [1, 8], strides = [1, 1]} : vector<4x8xf32> to vector<1x8xf32>
    %12 = vector.broadcast %10 : vector<256x1xf32> to vector<256x8xf32>
    %13 = vector.broadcast %11 : vector<1x8xf32> to vector<256x8xf32>
    %14 = arith.mulf %12, %13 : vector<256x8xf32>
    %15 = arith.addf %9, %14 : vector<256x8xf32>
    %16 = vector.extract_strided_slice %0 {offsets = [0, 2], sizes = [256, 1], strides = [1, 1]} : vector<256x4xf32> to vector<256x1xf32>
    %17 = vector.extract_strided_slice %1 {offsets = [2, 0], sizes = [1, 8], strides = [1, 1]} : vector<4x8xf32> to vector<1x8xf32>
    %18 = vector.broadcast %16 : vector<256x1xf32> to vector<256x8xf32>
    %19 = vector.broadcast %17 : vector<1x8xf32> to vector<256x8xf32>
    %20 = arith.mulf %18, %19 : vector<256x8xf32>
    %21 = arith.addf %15, %20 : vector<256x8xf32>
    %22 = vector.extract_strided_slice %0 {offsets = [0, 3], sizes = [256, 1], strides = [1, 1]} : vector<256x4xf32> to vector<256x1xf32>
    %23 = vector.extract_strided_slice %1 {offsets = [3, 0], sizes = [1, 8], strides = [1, 1]} : vector<4x8xf32> to vector<1x8xf32>
    %24 = vector.broadcast %22 : vector<256x1xf32> to vector<256x8xf32>
    %25 = vector.broadcast %23 : vector<1x8xf32> to vector<256x8xf32>
    %26 = arith.mulf %24, %25 : vector<256x8xf32>
    %27 = arith.addf %21, %26 : vector<256x8xf32>
    %cst = arith.constant 0.000000e+00 : f32
    %28 = vector.broadcast %cst : f32 to vector<256x8xf32>
    %29 = arith.maximumf %27, %28 : vector<256x8xf32>
    %c0_5 = arith.constant 0 : index
    %c0_6 = arith.constant 0 : index
    %30 = vector.load %arg4[%c0_5, %c0_6] : memref<8x128xf32, #tpu.memory_space<vmem>>, vector<8x128xf32>
    %cst_7 = arith.constant dense<0.000000e+00> : vector<256x128xf32>
    %31 = tpu.matmul %29, %30, %cst_7 {dimension_numbers = #tpu.dot_dimension_numbers<[1], [0], [0], [1], [0, 0, 1, 1], [], []>} : vector<256x8xf32>, vector<8x128xf32>, vector<256x128xf32> -> vector<256x128xf32>
    %c0_8 = arith.constant 0 : index
    %c0_9 = arith.constant 0 : index
    %32 = vector.load %arg5[%c0_8, %c0_9] : memref<1x128xf32, #tpu.memory_space<vmem>>, vector<1x128xf32>
    %33 = vector.broadcast %32 : vector<1x128xf32> to vector<256x128xf32>
    %34 = arith.addf %31, %33 : vector<256x128xf32>
    %cst_10 = arith.constant 0.000000e+00 : f32
    %35 = vector.broadcast %cst_10 : f32 to vector<256x128xf32>
    %36 = arith.maximumf %34, %35 : vector<256x128xf32>
    %c0_11 = arith.constant 0 : index
    %c0_12 = arith.constant 0 : index
    %37 = vector.load %arg6[%c0_11, %c0_12] : memref<5x2xf32, #tpu.memory_space<vmem>>, vector<5x2xf32>
    %c0_13 = arith.constant 0 : index
    %c0_14 = arith.constant 0 : index
    %38 = vector.load %arg7[%c0_13, %c0_14] : memref<1x2xf32, #tpu.memory_space<vmem>>, vector<1x2xf32>
    %39 = vector.extract_strided_slice %36 {offsets = [0, 0], sizes = [256, 1], strides = [1, 1]} : vector<256x128xf32> to vector<256x1xf32>
    %40 = vector.extract_strided_slice %37 {offsets = [0, 0], sizes = [1, 2], strides = [1, 1]} : vector<5x2xf32> to vector<1x2xf32>
    %41 = vector.broadcast %39 : vector<256x1xf32> to vector<256x2xf32>
    %42 = vector.broadcast %40 : vector<1x2xf32> to vector<256x2xf32>
    %43 = arith.mulf %41, %42 : vector<256x2xf32>
    %44 = vector.broadcast %38 : vector<1x2xf32> to vector<256x2xf32>
    %45 = arith.addf %44, %43 : vector<256x2xf32>
    %46 = vector.extract_strided_slice %36 {offsets = [0, 1], sizes = [256, 1], strides = [1, 1]} : vector<256x128xf32> to vector<256x1xf32>
    %47 = vector.extract_strided_slice %37 {offsets = [1, 0], sizes = [1, 2], strides = [1, 1]} : vector<5x2xf32> to vector<1x2xf32>
    %48 = vector.broadcast %46 : vector<256x1xf32> to vector<256x2xf32>
    %49 = vector.broadcast %47 : vector<1x2xf32> to vector<256x2xf32>
    %50 = arith.mulf %48, %49 : vector<256x2xf32>
    %51 = arith.addf %45, %50 : vector<256x2xf32>
    %52 = vector.extract_strided_slice %36 {offsets = [0, 2], sizes = [256, 1], strides = [1, 1]} : vector<256x128xf32> to vector<256x1xf32>
    %53 = vector.extract_strided_slice %37 {offsets = [2, 0], sizes = [1, 2], strides = [1, 1]} : vector<5x2xf32> to vector<1x2xf32>
    %54 = vector.broadcast %52 : vector<256x1xf32> to vector<256x2xf32>
    %55 = vector.broadcast %53 : vector<1x2xf32> to vector<256x2xf32>
    %56 = arith.mulf %54, %55 : vector<256x2xf32>
    %57 = arith.addf %51, %56 : vector<256x2xf32>
    %58 = vector.extract_strided_slice %36 {offsets = [0, 3], sizes = [256, 1], strides = [1, 1]} : vector<256x128xf32> to vector<256x1xf32>
    %59 = vector.extract_strided_slice %37 {offsets = [3, 0], sizes = [1, 2], strides = [1, 1]} : vector<5x2xf32> to vector<1x2xf32>
    %60 = vector.broadcast %58 : vector<256x1xf32> to vector<256x2xf32>
    %61 = vector.broadcast %59 : vector<1x2xf32> to vector<256x2xf32>
    %62 = arith.mulf %60, %61 : vector<256x2xf32>
    %63 = arith.addf %57, %62 : vector<256x2xf32>
    %64 = vector.extract_strided_slice %36 {offsets = [0, 4], sizes = [256, 1], strides = [1, 1]} : vector<256x128xf32> to vector<256x1xf32>
    %65 = vector.extract_strided_slice %37 {offsets = [4, 0], sizes = [1, 2], strides = [1, 1]} : vector<5x2xf32> to vector<1x2xf32>
    %66 = vector.broadcast %64 : vector<256x1xf32> to vector<256x2xf32>
    %67 = vector.broadcast %65 : vector<1x2xf32> to vector<256x2xf32>
    %68 = arith.mulf %66, %67 : vector<256x2xf32>
    %69 = arith.addf %63, %68 : vector<256x2xf32>
    %cst_15 = arith.constant 0.000000e+00 : f32
    %70 = vector.broadcast %cst_15 : f32 to vector<256x2xf32>
    %71 = arith.maximumf %69, %70 : vector<256x2xf32>
    %72 = vector.extract_strided_slice %71 {offsets = [0, 0], sizes = [8, 2], strides = [1, 1]} : vector<256x2xf32> to vector<8x2xf32>
    %cst_16 = arith.constant dense<0xFF800000> : vector<2xf32>
    %73 = vector.multi_reduction <maximumf>, %72, %cst_16 [0] : vector<8x2xf32> to vector<2xf32>
    %74 = vector.shape_cast %73 : vector<2xf32> to vector<1x2xf32>
    %75 = vector.broadcast %74 : vector<1x2xf32> to vector<8x2xf32>
    %76 = arith.subf %72, %75 : vector<8x2xf32>
    %77 = math.exp %76 : vector<8x2xf32>
    %cst_17 = arith.constant dense<0.000000e+00> : vector<2xf32>
    %78 = vector.multi_reduction <add>, %77, %cst_17 [0] : vector<8x2xf32> to vector<2xf32>
    %79 = vector.shape_cast %78 : vector<2xf32> to vector<1x2xf32>
    %80 = vector.broadcast %79 : vector<1x2xf32> to vector<8x2xf32>
    %81 = arith.divf %77, %80 : vector<8x2xf32>
    %c0_18 = arith.constant 0 : index
    %c0_19 = arith.constant 0 : index
    %82 = vector.load %arg8[%c0_18, %c0_19] : memref<256x2xf32, #tpu.memory_space<vmem>>, vector<8x2xf32>
    tpu.vector_store %arg8[%c0_18, %c0_19], %81 {strides = array<i32>} : memref<256x2xf32, #tpu.memory_space<vmem>>, vector<8x2xf32>,
    %83 = vector.extract_strided_slice %71 {offsets = [8, 0], sizes = [8, 2], strides = [1, 1]} : vector<256x2xf32> to vector<8x2xf32>
    %cst_20 = arith.constant dense<0xFF800000> : vector<2xf32>
    %84 = vector.multi_reduction <maximumf>, %83, %cst_20 [0] : vector<8x2xf32> to vector<2xf32>
    %85 = vector.shape_cast %84 : vector<2xf32> to vector<1x2xf32>
    %86 = vector.broadcast %85 : vector<1x2xf32> to vector<8x2xf32>
    %87 = arith.subf %83, %86 : vector<8x2xf32>
    %88 = math.exp %87 : vector<8x2xf32>
    %cst_21 = arith.constant dense<0.000000e+00> : vector<2xf32>
    %89 = vector.multi_reduction <add>, %88, %cst_21 [0] : vector<8x2xf32> to vector<2xf32>
    %90 = vector.shape_cast %89 : vector<2xf32> to vector<1x2xf32>
    %91 = vector.broadcast %90 : vector<1x2xf32> to vector<8x2xf32>
    %92 = arith.divf %88, %91 : vector<8x2xf32>
    %c8 = arith.constant 8 : index
    %c0_22 = arith.constant 0 : index
    %93 = vector.load %arg8[%c8, %c0_22] : memref<256x2xf32, #tpu.memory_space<vmem>>, vector<8x2xf32>
    tpu.vector_store %arg8[%c8, %c0_22], %92 {strides = array<i32>} : memref<256x2xf32, #tpu.memory_space<vmem>>, vector<8x2xf32>,
    %94 = vector.extract_strided_slice %71 {offsets = [16, 0], sizes = [8, 2], strides = [1, 1]} : vector<256x2xf32> to vector<8x2xf32>
    %cst_23 = arith.constant dense<0xFF800000> : vector<2xf32>
    %95 = vector.multi_reduction <maximumf>, %94, %cst_23 [0] : vector<8x2xf32> to vector<2xf32>
    %96 = vector.shape_cast %95 : vector<2xf32> to vector<1x2xf32>
    %97 = vector.broadcast %96 : vector<1x2xf32> to vector<8x2xf32>
    %98 = arith.subf %94, %97 : vector<8x2xf32>
    %99 = math.exp %98 : vector<8x2xf32>
    %cst_24 = arith.constant dense<0.000000e+00> : vector<2xf32>
    %100 = vector.multi_reduction <add>, %99, %cst_24 [0] : vector<8x2xf32> to vector<2xf32>
    %101 = vector.shape_cast %100 : vector<2xf32> to vector<1x2xf32>
    %102 = vector.broadcast %101 : vector<1x2xf32> to vector<8x2xf32>
    %103 = arith.divf %99, %102 : vector<8x2xf32>
    %c16 = arith.constant 16 : index
    %c0_25 = arith.constant 0 : index
    %104 = vector.load %arg8[%c16, %c0_25] : memref<256x2xf32, #tpu.memory_space<vmem>>, vector<8x2xf32>
    tpu.vector_store %arg8[%c16, %c0_25], %103 {strides = array<i32>} : memref<256x2xf32, #tpu.memory_space<vmem>>, vector<8x2xf32>,
    %105 = vector.extract_strided_slice %71 {offsets = [24, 0], sizes = [8, 2], strides = [1, 1]} : vector<256x2xf32> to vector<8x2xf32>
    %cst_26 = arith.constant dense<0xFF800000> : vector<2xf32>
    %106 = vector.multi_reduction <maximumf>, %105, %cst_26 [0] : vector<8x2xf32> to vector<2xf32>
    %107 = vector.shape_cast %106 : vector<2xf32> to vector<1x2xf32>
    %108 = vector.broadcast %107 : vector<1x2xf32> to vector<8x2xf32>
    %109 = arith.subf %105, %108 : vector<8x2xf32>
    %110 = math.exp %109 : vector<8x2xf32>
    %cst_27 = arith.constant dense<0.000000e+00> : vector<2xf32>
    %111 = vector.multi_reduction <add>, %110, %cst_27 [0] : vector<8x2xf32> to vector<2xf32>
    %112 = vector.shape_cast %111 : vector<2xf32> to vector<1x2xf32>
    %113 = vector.broadcast %112 : vector<1x2xf32> to vector<8x2xf32>
    %114 = arith.divf %110, %113 : vector<8x2xf32>
    %c24 = arith.constant 24 : index
    %c0_28 = arith.constant 0 : index
    %115 = vector.load %arg8[%c24, %c0_28] : memref<256x2xf32, #tpu.memory_space<vmem>>, vector<8x2xf32>
    tpu.vector_store %arg8[%c24, %c0_28], %114 {strides = array<i32>} : memref<256x2xf32, #tpu.memory_space<vmem>>, vector<8x2xf32>,
    %116 = vector.extract_strided_slice %71 {offsets = [32, 0], sizes = [8, 2], strides = [1, 1]} : vector<256x2xf32> to vector<8x2xf32>
    %cst_29 = arith.constant dense<0xFF800000> : vector<2xf32>
    %117 = vector.multi_reduction <maximumf>, %116, %cst_29 [0] : vector<8x2xf32> to vector<2xf32>
    %118 = vector.shape_cast %117 : vector<2xf32> to vector<1x2xf32>
    %119 = vector.broadcast %118 : vector<1x2xf32> to vector<8x2xf32>
    %120 = arith.subf %116, %119 : vector<8x2xf32>
    %121 = math.exp %120 : vector<8x2xf32>
    %cst_30 = arith.constant dense<0.000000e+00> : vector<2xf32>
    %122 = vector.multi_reduction <add>, %121, %cst_30 [0] : vector<8x2xf32> to vector<2xf32>
    %123 = vector.shape_cast %122 : vector<2xf32> to vector<1x2xf32>
    %124 = vector.broadcast %123 : vector<1x2xf32> to vector<8x2xf32>
    %125 = arith.divf %121, %124 : vector<8x2xf32>
    %c32 = arith.constant 32 : index
    %c0_31 = arith.constant 0 : index
    %126 = vector.load %arg8[%c32, %c0_31] : memref<256x2xf32, #tpu.memory_space<vmem>>, vector<8x2xf32>
    tpu.vector_store %arg8[%c32, %c0_31], %125 {strides = array<i32>} : memref<256x2xf32, #tpu.memory_space<vmem>>, vector<8x2xf32>,
    %127 = vector.extract_strided_slice %71 {offsets = [40, 0], sizes = [8, 2], strides = [1, 1]} : vector<256x2xf32> to vector<8x2xf32>
    %cst_32 = arith.constant dense<0xFF800000> : vector<2xf32>
    %128 = vector.multi_reduction <maximumf>, %127, %cst_32 [0] : vector<8x2xf32> to vector<2xf32>
    %129 = vector.shape_cast %128 : vector<2xf32> to vector<1x2xf32>
    %130 = vector.broadcast %129 : vector<1x2xf32> to vector<8x2xf32>
    %131 = arith.subf %127, %130 : vector<8x2xf32>
    %132 = math.exp %131 : vector<8x2xf32>
    %cst_33 = arith.constant dense<0.000000e+00> : vector<2xf32>
    %133 = vector.multi_reduction <add>, %132, %cst_33 [0] : vector<8x2xf32> to vector<2xf32>
    %134 = vector.shape_cast %133 : vector<2xf32> to vector<1x2xf32>
    %135 = vector.broadcast %134 : vector<1x2xf32> to vector<8x2xf32>
    %136 = arith.divf %132, %135 : vector<8x2xf32>
    %c40 = arith.constant 40 : index
    %c0_34 = arith.constant 0 : index
    %137 = vector.load %arg8[%c40, %c0_34] : memref<256x2xf32, #tpu.memory_space<vmem>>, vector<8x2xf32>
    tpu.vector_store %arg8[%c40, %c0_34], %136 {strides = array<i32>} : memref<256x2xf32, #tpu.memory_space<vmem>>, vector<8x2xf32>,
    %138 = vector.extract_strided_slice %71 {offsets = [48, 0], sizes = [8, 2], strides = [1, 1]} : vector<256x2xf32> to vector<8x2xf32>
    %cst_35 = arith.constant dense<0xFF800000> : vector<2xf32>
    %139 = vector.multi_reduction <maximumf>, %138, %cst_35 [0] : vector<8x2xf32> to vector<2xf32>
    %140 = vector.shape_cast %139 : vector<2xf32> to vector<1x2xf32>
    %141 = vector.broadcast %140 : vector<1x2xf32> to vector<8x2xf32>
    %142 = arith.subf %138, %141 : vector<8x2xf32>
    %143 = math.exp %142 : vector<8x2xf32>
    %cst_36 = arith.constant dense<0.000000e+00> : vector<2xf32>
    %144 = vector.multi_reduction <add>, %143, %cst_36 [0] : vector<8x2xf32> to vector<2xf32>
    %145 = vector.shape_cast %144 : vector<2xf32> to vector<1x2xf32>
    %146 = vector.broadcast %145 : vector<1x2xf32> to vector<8x2xf32>
    %147 = arith.divf %143, %146 : vector<8x2xf32>
    %c48 = arith.constant 48 : index
    %c0_37 = arith.constant 0 : index
    %148 = vector.load %arg8[%c48, %c0_37] : memref<256x2xf32, #tpu.memory_space<vmem>>, vector<8x2xf32>
    tpu.vector_store %arg8[%c48, %c0_37], %147 {strides = array<i32>} : memref<256x2xf32, #tpu.memory_space<vmem>>, vector<8x2xf32>,
    %149 = vector.extract_strided_slice %71 {offsets = [56, 0], sizes = [8, 2], strides = [1, 1]} : vector<256x2xf32> to vector<8x2xf32>
    %cst_38 = arith.constant dense<0xFF800000> : vector<2xf32>
    %150 = vector.multi_reduction <maximumf>, %149, %cst_38 [0] : vector<8x2xf32> to vector<2xf32>
    %151 = vector.shape_cast %150 : vector<2xf32> to vector<1x2xf32>
    %152 = vector.broadcast %151 : vector<1x2xf32> to vector<8x2xf32>
    %153 = arith.subf %149, %152 : vector<8x2xf32>
    %154 = math.exp %153 : vector<8x2xf32>
    %cst_39 = arith.constant dense<0.000000e+00> : vector<2xf32>
    %155 = vector.multi_reduction <add>, %154, %cst_39 [0] : vector<8x2xf32> to vector<2xf32>
    %156 = vector.shape_cast %155 : vector<2xf32> to vector<1x2xf32>
    %157 = vector.broadcast %156 : vector<1x2xf32> to vector<8x2xf32>
    %158 = arith.divf %154, %157 : vector<8x2xf32>
    %c56 = arith.constant 56 : index
    %c0_40 = arith.constant 0 : index
    %159 = vector.load %arg8[%c56, %c0_40] : memref<256x2xf32, #tpu.memory_space<vmem>>, vector<8x2xf32>
    tpu.vector_store %arg8[%c56, %c0_40], %158 {strides = array<i32>} : memref<256x2xf32, #tpu.memory_space<vmem>>, vector<8x2xf32>,
    %160 = vector.extract_strided_slice %71 {offsets = [64, 0], sizes = [8, 2], strides = [1, 1]} : vector<256x2xf32> to vector<8x2xf32>
    %cst_41 = arith.constant dense<0xFF800000> : vector<2xf32>
    %161 = vector.multi_reduction <maximumf>, %160, %cst_41 [0] : vector<8x2xf32> to vector<2xf32>
    %162 = vector.shape_cast %161 : vector<2xf32> to vector<1x2xf32>
    %163 = vector.broadcast %162 : vector<1x2xf32> to vector<8x2xf32>
    %164 = arith.subf %160, %163 : vector<8x2xf32>
    %165 = math.exp %164 : vector<8x2xf32>
    %cst_42 = arith.constant dense<0.000000e+00> : vector<2xf32>
    %166 = vector.multi_reduction <add>, %165, %cst_42 [0] : vector<8x2xf32> to vector<2xf32>
    %167 = vector.shape_cast %166 : vector<2xf32> to vector<1x2xf32>
    %168 = vector.broadcast %167 : vector<1x2xf32> to vector<8x2xf32>
    %169 = arith.divf %165, %168 : vector<8x2xf32>
    %c64 = arith.constant 64 : index
    %c0_43 = arith.constant 0 : index
    %170 = vector.load %arg8[%c64, %c0_43] : memref<256x2xf32, #tpu.memory_space<vmem>>, vector<8x2xf32>
    tpu.vector_store %arg8[%c64, %c0_43], %169 {strides = array<i32>} : memref<256x2xf32, #tpu.memory_space<vmem>>, vector<8x2xf32>,
    %171 = vector.extract_strided_slice %71 {offsets = [72, 0], sizes = [8, 2], strides = [1, 1]} : vector<256x2xf32> to vector<8x2xf32>
    %cst_44 = arith.constant dense<0xFF800000> : vector<2xf32>
    %172 = vector.multi_reduction <maximumf>, %171, %cst_44 [0] : vector<8x2xf32> to vector<2xf32>
    %173 = vector.shape_cast %172 : vector<2xf32> to vector<1x2xf32>
    %174 = vector.broadcast %173 : vector<1x2xf32> to vector<8x2xf32>
    %175 = arith.subf %171, %174 : vector<8x2xf32>
    %176 = math.exp %175 : vector<8x2xf32>
    %cst_45 = arith.constant dense<0.000000e+00> : vector<2xf32>
    %177 = vector.multi_reduction <add>, %176, %cst_45 [0] : vector<8x2xf32> to vector<2xf32>
    %178 = vector.shape_cast %177 : vector<2xf32> to vector<1x2xf32>
    %179 = vector.broadcast %178 : vector<1x2xf32> to vector<8x2xf32>
    %180 = arith.divf %176, %179 : vector<8x2xf32>
    %c72 = arith.constant 72 : index
    %c0_46 = arith.constant 0 : index
    %181 = vector.load %arg8[%c72, %c0_46] : memref<256x2xf32, #tpu.memory_space<vmem>>, vector<8x2xf32>
    tpu.vector_store %arg8[%c72, %c0_46], %180 {strides = array<i32>} : memref<256x2xf32, #tpu.memory_space<vmem>>, vector<8x2xf32>,
    %182 = vector.extract_strided_slice %71 {offsets = [80, 0], sizes = [8, 2], strides = [1, 1]} : vector<256x2xf32> to vector<8x2xf32>
    %cst_47 = arith.constant dense<0xFF800000> : vector<2xf32>
    %183 = vector.multi_reduction <maximumf>, %182, %cst_47 [0] : vector<8x2xf32> to vector<2xf32>
    %184 = vector.shape_cast %183 : vector<2xf32> to vector<1x2xf32>
    %185 = vector.broadcast %184 : vector<1x2xf32> to vector<8x2xf32>
    %186 = arith.subf %182, %185 : vector<8x2xf32>
    %187 = math.exp %186 : vector<8x2xf32>
    %cst_48 = arith.constant dense<0.000000e+00> : vector<2xf32>
    %188 = vector.multi_reduction <add>, %187, %cst_48 [0] : vector<8x2xf32> to vector<2xf32>
    %189 = vector.shape_cast %188 : vector<2xf32> to vector<1x2xf32>
    %190 = vector.broadcast %189 : vector<1x2xf32> to vector<8x2xf32>
    %191 = arith.divf %187, %190 : vector<8x2xf32>
    %c80 = arith.constant 80 : index
    %c0_49 = arith.constant 0 : index
    %192 = vector.load %arg8[%c80, %c0_49] : memref<256x2xf32, #tpu.memory_space<vmem>>, vector<8x2xf32>
    tpu.vector_store %arg8[%c80, %c0_49], %191 {strides = array<i32>} : memref<256x2xf32, #tpu.memory_space<vmem>>, vector<8x2xf32>,
    %193 = vector.extract_strided_slice %71 {offsets = [88, 0], sizes = [8, 2], strides = [1, 1]} : vector<256x2xf32> to vector<8x2xf32>
    %cst_50 = arith.constant dense<0xFF800000> : vector<2xf32>
    %194 = vector.multi_reduction <maximumf>, %193, %cst_50 [0] : vector<8x2xf32> to vector<2xf32>
    %195 = vector.shape_cast %194 : vector<2xf32> to vector<1x2xf32>
    %196 = vector.broadcast %195 : vector<1x2xf32> to vector<8x2xf32>
    %197 = arith.subf %193, %196 : vector<8x2xf32>
    %198 = math.exp %197 : vector<8x2xf32>
    %cst_51 = arith.constant dense<0.000000e+00> : vector<2xf32>
    %199 = vector.multi_reduction <add>, %198, %cst_51 [0] : vector<8x2xf32> to vector<2xf32>
    %200 = vector.shape_cast %199 : vector<2xf32> to vector<1x2xf32>
    %201 = vector.broadcast %200 : vector<1x2xf32> to vector<8x2xf32>
    %202 = arith.divf %198, %201 : vector<8x2xf32>
    %c88 = arith.constant 88 : index
    %c0_52 = arith.constant 0 : index
    %203 = vector.load %arg8[%c88, %c0_52] : memref<256x2xf32, #tpu.memory_space<vmem>>, vector<8x2xf32>
    tpu.vector_store %arg8[%c88, %c0_52], %202 {strides = array<i32>} : memref<256x2xf32, #tpu.memory_space<vmem>>, vector<8x2xf32>,
    %204 = vector.extract_strided_slice %71 {offsets = [96, 0], sizes = [8, 2], strides = [1, 1]} : vector<256x2xf32> to vector<8x2xf32>
    %cst_53 = arith.constant dense<0xFF800000> : vector<2xf32>
    %205 = vector.multi_reduction <maximumf>, %204, %cst_53 [0] : vector<8x2xf32> to vector<2xf32>
    %206 = vector.shape_cast %205 : vector<2xf32> to vector<1x2xf32>
    %207 = vector.broadcast %206 : vector<1x2xf32> to vector<8x2xf32>
    %208 = arith.subf %204, %207 : vector<8x2xf32>
    %209 = math.exp %208 : vector<8x2xf32>
    %cst_54 = arith.constant dense<0.000000e+00> : vector<2xf32>
    %210 = vector.multi_reduction <add>, %209, %cst_54 [0] : vector<8x2xf32> to vector<2xf32>
    %211 = vector.shape_cast %210 : vector<2xf32> to vector<1x2xf32>
    %212 = vector.broadcast %211 : vector<1x2xf32> to vector<8x2xf32>
    %213 = arith.divf %209, %212 : vector<8x2xf32>
    %c96 = arith.constant 96 : index
    %c0_55 = arith.constant 0 : index
    %214 = vector.load %arg8[%c96, %c0_55] : memref<256x2xf32, #tpu.memory_space<vmem>>, vector<8x2xf32>
    tpu.vector_store %arg8[%c96, %c0_55], %213 {strides = array<i32>} : memref<256x2xf32, #tpu.memory_space<vmem>>, vector<8x2xf32>,
    %215 = vector.extract_strided_slice %71 {offsets = [104, 0], sizes = [8, 2], strides = [1, 1]} : vector<256x2xf32> to vector<8x2xf32>
    %cst_56 = arith.constant dense<0xFF800000> : vector<2xf32>
    %216 = vector.multi_reduction <maximumf>, %215, %cst_56 [0] : vector<8x2xf32> to vector<2xf32>
    %217 = vector.shape_cast %216 : vector<2xf32> to vector<1x2xf32>
    %218 = vector.broadcast %217 : vector<1x2xf32> to vector<8x2xf32>
    %219 = arith.subf %215, %218 : vector<8x2xf32>
    %220 = math.exp %219 : vector<8x2xf32>
    %cst_57 = arith.constant dense<0.000000e+00> : vector<2xf32>
    %221 = vector.multi_reduction <add>, %220, %cst_57 [0] : vector<8x2xf32> to vector<2xf32>
    %222 = vector.shape_cast %221 : vector<2xf32> to vector<1x2xf32>
    %223 = vector.broadcast %222 : vector<1x2xf32> to vector<8x2xf32>
    %224 = arith.divf %220, %223 : vector<8x2xf32>
    %c104 = arith.constant 104 : index
    %c0_58 = arith.constant 0 : index
    %225 = vector.load %arg8[%c104, %c0_58] : memref<256x2xf32, #tpu.memory_space<vmem>>, vector<8x2xf32>
    tpu.vector_store %arg8[%c104, %c0_58], %224 {strides = array<i32>} : memref<256x2xf32, #tpu.memory_space<vmem>>, vector<8x2xf32>,
    %226 = vector.extract_strided_slice %71 {offsets = [112, 0], sizes = [8, 2], strides = [1, 1]} : vector<256x2xf32> to vector<8x2xf32>
    %cst_59 = arith.constant dense<0xFF800000> : vector<2xf32>
    %227 = vector.multi_reduction <maximumf>, %226, %cst_59 [0] : vector<8x2xf32> to vector<2xf32>
    %228 = vector.shape_cast %227 : vector<2xf32> to vector<1x2xf32>
    %229 = vector.broadcast %228 : vector<1x2xf32> to vector<8x2xf32>
    %230 = arith.subf %226, %229 : vector<8x2xf32>
    %231 = math.exp %230 : vector<8x2xf32>
    %cst_60 = arith.constant dense<0.000000e+00> : vector<2xf32>
    %232 = vector.multi_reduction <add>, %231, %cst_60 [0] : vector<8x2xf32> to vector<2xf32>
    %233 = vector.shape_cast %232 : vector<2xf32> to vector<1x2xf32>
    %234 = vector.broadcast %233 : vector<1x2xf32> to vector<8x2xf32>
    %235 = arith.divf %231, %234 : vector<8x2xf32>
    %c112 = arith.constant 112 : index
    %c0_61 = arith.constant 0 : index
    %236 = vector.load %arg8[%c112, %c0_61] : memref<256x2xf32, #tpu.memory_space<vmem>>, vector<8x2xf32>
    tpu.vector_store %arg8[%c112, %c0_61], %235 {strides = array<i32>} : memref<256x2xf32, #tpu.memory_space<vmem>>, vector<8x2xf32>,
    %237 = vector.extract_strided_slice %71 {offsets = [120, 0], sizes = [8, 2], strides = [1, 1]} : vector<256x2xf32> to vector<8x2xf32>
    %cst_62 = arith.constant dense<0xFF800000> : vector<2xf32>
    %238 = vector.multi_reduction <maximumf>, %237, %cst_62 [0] : vector<8x2xf32> to vector<2xf32>
    %239 = vector.shape_cast %238 : vector<2xf32> to vector<1x2xf32>
    %240 = vector.broadcast %239 : vector<1x2xf32> to vector<8x2xf32>
    %241 = arith.subf %237, %240 : vector<8x2xf32>
    %242 = math.exp %241 : vector<8x2xf32>
    %cst_63 = arith.constant dense<0.000000e+00> : vector<2xf32>
    %243 = vector.multi_reduction <add>, %242, %cst_63 [0] : vector<8x2xf32> to vector<2xf32>
    %244 = vector.shape_cast %243 : vector<2xf32> to vector<1x2xf32>
    %245 = vector.broadcast %244 : vector<1x2xf32> to vector<8x2xf32>
    %246 = arith.divf %242, %245 : vector<8x2xf32>
    %c120 = arith.constant 120 : index
    %c0_64 = arith.constant 0 : index
    %247 = vector.load %arg8[%c120, %c0_64] : memref<256x2xf32, #tpu.memory_space<vmem>>, vector<8x2xf32>
    tpu.vector_store %arg8[%c120, %c0_64], %246 {strides = array<i32>} : memref<256x2xf32, #tpu.memory_space<vmem>>, vector<8x2xf32>,
    %248 = vector.extract_strided_slice %71 {offsets = [128, 0], sizes = [8, 2], strides = [1, 1]} : vector<256x2xf32> to vector<8x2xf32>
    %cst_65 = arith.constant dense<0xFF800000> : vector<2xf32>
    %249 = vector.multi_reduction <maximumf>, %248, %cst_65 [0] : vector<8x2xf32> to vector<2xf32>
    %250 = vector.shape_cast %249 : vector<2xf32> to vector<1x2xf32>
    %251 = vector.broadcast %250 : vector<1x2xf32> to vector<8x2xf32>
    %252 = arith.subf %248, %251 : vector<8x2xf32>
    %253 = math.exp %252 : vector<8x2xf32>
    %cst_66 = arith.constant dense<0.000000e+00> : vector<2xf32>
    %254 = vector.multi_reduction <add>, %253, %cst_66 [0] : vector<8x2xf32> to vector<2xf32>
    %255 = vector.shape_cast %254 : vector<2xf32> to vector<1x2xf32>
    %256 = vector.broadcast %255 : vector<1x2xf32> to vector<8x2xf32>
    %257 = arith.divf %253, %256 : vector<8x2xf32>
    %c128 = arith.constant 128 : index
    %c0_67 = arith.constant 0 : index
    %258 = vector.load %arg8[%c128, %c0_67] : memref<256x2xf32, #tpu.memory_space<vmem>>, vector<8x2xf32>
    tpu.vector_store %arg8[%c128, %c0_67], %257 {strides = array<i32>} : memref<256x2xf32, #tpu.memory_space<vmem>>, vector<8x2xf32>,
    %259 = vector.extract_strided_slice %71 {offsets = [136, 0], sizes = [8, 2], strides = [1, 1]} : vector<256x2xf32> to vector<8x2xf32>
    %cst_68 = arith.constant dense<0xFF800000> : vector<2xf32>
    %260 = vector.multi_reduction <maximumf>, %259, %cst_68 [0] : vector<8x2xf32> to vector<2xf32>
    %261 = vector.shape_cast %260 : vector<2xf32> to vector<1x2xf32>
    %262 = vector.broadcast %261 : vector<1x2xf32> to vector<8x2xf32>
    %263 = arith.subf %259, %262 : vector<8x2xf32>
    %264 = math.exp %263 : vector<8x2xf32>
    %cst_69 = arith.constant dense<0.000000e+00> : vector<2xf32>
    %265 = vector.multi_reduction <add>, %264, %cst_69 [0] : vector<8x2xf32> to vector<2xf32>
    %266 = vector.shape_cast %265 : vector<2xf32> to vector<1x2xf32>
    %267 = vector.broadcast %266 : vector<1x2xf32> to vector<8x2xf32>
    %268 = arith.divf %264, %267 : vector<8x2xf32>
    %c136 = arith.constant 136 : index
    %c0_70 = arith.constant 0 : index
    %269 = vector.load %arg8[%c136, %c0_70] : memref<256x2xf32, #tpu.memory_space<vmem>>, vector<8x2xf32>
    tpu.vector_store %arg8[%c136, %c0_70], %268 {strides = array<i32>} : memref<256x2xf32, #tpu.memory_space<vmem>>, vector<8x2xf32>,
    %270 = vector.extract_strided_slice %71 {offsets = [144, 0], sizes = [8, 2], strides = [1, 1]} : vector<256x2xf32> to vector<8x2xf32>
    %cst_71 = arith.constant dense<0xFF800000> : vector<2xf32>
    %271 = vector.multi_reduction <maximumf>, %270, %cst_71 [0] : vector<8x2xf32> to vector<2xf32>
    %272 = vector.shape_cast %271 : vector<2xf32> to vector<1x2xf32>
    %273 = vector.broadcast %272 : vector<1x2xf32> to vector<8x2xf32>
    %274 = arith.subf %270, %273 : vector<8x2xf32>
    %275 = math.exp %274 : vector<8x2xf32>
    %cst_72 = arith.constant dense<0.000000e+00> : vector<2xf32>
    %276 = vector.multi_reduction <add>, %275, %cst_72 [0] : vector<8x2xf32> to vector<2xf32>
    %277 = vector.shape_cast %276 : vector<2xf32> to vector<1x2xf32>
    %278 = vector.broadcast %277 : vector<1x2xf32> to vector<8x2xf32>
    %279 = arith.divf %275, %278 : vector<8x2xf32>
    %c144 = arith.constant 144 : index
    %c0_73 = arith.constant 0 : index
    %280 = vector.load %arg8[%c144, %c0_73] : memref<256x2xf32, #tpu.memory_space<vmem>>, vector<8x2xf32>
    tpu.vector_store %arg8[%c144, %c0_73], %279 {strides = array<i32>} : memref<256x2xf32, #tpu.memory_space<vmem>>, vector<8x2xf32>,
    %281 = vector.extract_strided_slice %71 {offsets = [152, 0], sizes = [8, 2], strides = [1, 1]} : vector<256x2xf32> to vector<8x2xf32>
    %cst_74 = arith.constant dense<0xFF800000> : vector<2xf32>
    %282 = vector.multi_reduction <maximumf>, %281, %cst_74 [0] : vector<8x2xf32> to vector<2xf32>
    %283 = vector.shape_cast %282 : vector<2xf32> to vector<1x2xf32>
    %284 = vector.broadcast %283 : vector<1x2xf32> to vector<8x2xf32>
    %285 = arith.subf %281, %284 : vector<8x2xf32>
    %286 = math.exp %285 : vector<8x2xf32>
    %cst_75 = arith.constant dense<0.000000e+00> : vector<2xf32>
    %287 = vector.multi_reduction <add>, %286, %cst_75 [0] : vector<8x2xf32> to vector<2xf32>
    %288 = vector.shape_cast %287 : vector<2xf32> to vector<1x2xf32>
    %289 = vector.broadcast %288 : vector<1x2xf32> to vector<8x2xf32>
    %290 = arith.divf %286, %289 : vector<8x2xf32>
    %c152 = arith.constant 152 : index
    %c0_76 = arith.constant 0 : index
    %291 = vector.load %arg8[%c152, %c0_76] : memref<256x2xf32, #tpu.memory_space<vmem>>, vector<8x2xf32>
    tpu.vector_store %arg8[%c152, %c0_76], %290 {strides = array<i32>} : memref<256x2xf32, #tpu.memory_space<vmem>>, vector<8x2xf32>,
    %292 = vector.extract_strided_slice %71 {offsets = [160, 0], sizes = [8, 2], strides = [1, 1]} : vector<256x2xf32> to vector<8x2xf32>
    %cst_77 = arith.constant dense<0xFF800000> : vector<2xf32>
    %293 = vector.multi_reduction <maximumf>, %292, %cst_77 [0] : vector<8x2xf32> to vector<2xf32>
    %294 = vector.shape_cast %293 : vector<2xf32> to vector<1x2xf32>
    %295 = vector.broadcast %294 : vector<1x2xf32> to vector<8x2xf32>
    %296 = arith.subf %292, %295 : vector<8x2xf32>
    %297 = math.exp %296 : vector<8x2xf32>
    %cst_78 = arith.constant dense<0.000000e+00> : vector<2xf32>
    %298 = vector.multi_reduction <add>, %297, %cst_78 [0] : vector<8x2xf32> to vector<2xf32>
    %299 = vector.shape_cast %298 : vector<2xf32> to vector<1x2xf32>
    %300 = vector.broadcast %299 : vector<1x2xf32> to vector<8x2xf32>
    %301 = arith.divf %297, %300 : vector<8x2xf32>
    %c160 = arith.constant 160 : index
    %c0_79 = arith.constant 0 : index
    %302 = vector.load %arg8[%c160, %c0_79] : memref<256x2xf32, #tpu.memory_space<vmem>>, vector<8x2xf32>
    tpu.vector_store %arg8[%c160, %c0_79], %301 {strides = array<i32>} : memref<256x2xf32, #tpu.memory_space<vmem>>, vector<8x2xf32>,
    %303 = vector.extract_strided_slice %71 {offsets = [168, 0], sizes = [8, 2], strides = [1, 1]} : vector<256x2xf32> to vector<8x2xf32>
    %cst_80 = arith.constant dense<0xFF800000> : vector<2xf32>
    %304 = vector.multi_reduction <maximumf>, %303, %cst_80 [0] : vector<8x2xf32> to vector<2xf32>
    %305 = vector.shape_cast %304 : vector<2xf32> to vector<1x2xf32>
    %306 = vector.broadcast %305 : vector<1x2xf32> to vector<8x2xf32>
    %307 = arith.subf %303, %306 : vector<8x2xf32>
    %308 = math.exp %307 : vector<8x2xf32>
    %cst_81 = arith.constant dense<0.000000e+00> : vector<2xf32>
    %309 = vector.multi_reduction <add>, %308, %cst_81 [0] : vector<8x2xf32> to vector<2xf32>
    %310 = vector.shape_cast %309 : vector<2xf32> to vector<1x2xf32>
    %311 = vector.broadcast %310 : vector<1x2xf32> to vector<8x2xf32>
    %312 = arith.divf %308, %311 : vector<8x2xf32>
    %c168 = arith.constant 168 : index
    %c0_82 = arith.constant 0 : index
    %313 = vector.load %arg8[%c168, %c0_82] : memref<256x2xf32, #tpu.memory_space<vmem>>, vector<8x2xf32>
    tpu.vector_store %arg8[%c168, %c0_82], %312 {strides = array<i32>} : memref<256x2xf32, #tpu.memory_space<vmem>>, vector<8x2xf32>,
    %314 = vector.extract_strided_slice %71 {offsets = [176, 0], sizes = [8, 2], strides = [1, 1]} : vector<256x2xf32> to vector<8x2xf32>
    %cst_83 = arith.constant dense<0xFF800000> : vector<2xf32>
    %315 = vector.multi_reduction <maximumf>, %314, %cst_83 [0] : vector<8x2xf32> to vector<2xf32>
    %316 = vector.shape_cast %315 : vector<2xf32> to vector<1x2xf32>
    %317 = vector.broadcast %316 : vector<1x2xf32> to vector<8x2xf32>
    %318 = arith.subf %314, %317 : vector<8x2xf32>
    %319 = math.exp %318 : vector<8x2xf32>
    %cst_84 = arith.constant dense<0.000000e+00> : vector<2xf32>
    %320 = vector.multi_reduction <add>, %319, %cst_84 [0] : vector<8x2xf32> to vector<2xf32>
    %321 = vector.shape_cast %320 : vector<2xf32> to vector<1x2xf32>
    %322 = vector.broadcast %321 : vector<1x2xf32> to vector<8x2xf32>
    %323 = arith.divf %319, %322 : vector<8x2xf32>
    %c176 = arith.constant 176 : index
    %c0_85 = arith.constant 0 : index
    %324 = vector.load %arg8[%c176, %c0_85] : memref<256x2xf32, #tpu.memory_space<vmem>>, vector<8x2xf32>
    tpu.vector_store %arg8[%c176, %c0_85], %323 {strides = array<i32>} : memref<256x2xf32, #tpu.memory_space<vmem>>, vector<8x2xf32>,
    %325 = vector.extract_strided_slice %71 {offsets = [184, 0], sizes = [8, 2], strides = [1, 1]} : vector<256x2xf32> to vector<8x2xf32>
    %cst_86 = arith.constant dense<0xFF800000> : vector<2xf32>
    %326 = vector.multi_reduction <maximumf>, %325, %cst_86 [0] : vector<8x2xf32> to vector<2xf32>
    %327 = vector.shape_cast %326 : vector<2xf32> to vector<1x2xf32>
    %328 = vector.broadcast %327 : vector<1x2xf32> to vector<8x2xf32>
    %329 = arith.subf %325, %328 : vector<8x2xf32>
    %330 = math.exp %329 : vector<8x2xf32>
    %cst_87 = arith.constant dense<0.000000e+00> : vector<2xf32>
    %331 = vector.multi_reduction <add>, %330, %cst_87 [0] : vector<8x2xf32> to vector<2xf32>
    %332 = vector.shape_cast %331 : vector<2xf32> to vector<1x2xf32>
    %333 = vector.broadcast %332 : vector<1x2xf32> to vector<8x2xf32>
    %334 = arith.divf %330, %333 : vector<8x2xf32>
    %c184 = arith.constant 184 : index
    %c0_88 = arith.constant 0 : index
    %335 = vector.load %arg8[%c184, %c0_88] : memref<256x2xf32, #tpu.memory_space<vmem>>, vector<8x2xf32>
    tpu.vector_store %arg8[%c184, %c0_88], %334 {strides = array<i32>} : memref<256x2xf32, #tpu.memory_space<vmem>>, vector<8x2xf32>,
    %336 = vector.extract_strided_slice %71 {offsets = [192, 0], sizes = [8, 2], strides = [1, 1]} : vector<256x2xf32> to vector<8x2xf32>
    %cst_89 = arith.constant dense<0xFF800000> : vector<2xf32>
    %337 = vector.multi_reduction <maximumf>, %336, %cst_89 [0] : vector<8x2xf32> to vector<2xf32>
    %338 = vector.shape_cast %337 : vector<2xf32> to vector<1x2xf32>
    %339 = vector.broadcast %338 : vector<1x2xf32> to vector<8x2xf32>
    %340 = arith.subf %336, %339 : vector<8x2xf32>
    %341 = math.exp %340 : vector<8x2xf32>
    %cst_90 = arith.constant dense<0.000000e+00> : vector<2xf32>
    %342 = vector.multi_reduction <add>, %341, %cst_90 [0] : vector<8x2xf32> to vector<2xf32>
    %343 = vector.shape_cast %342 : vector<2xf32> to vector<1x2xf32>
    %344 = vector.broadcast %343 : vector<1x2xf32> to vector<8x2xf32>
    %345 = arith.divf %341, %344 : vector<8x2xf32>
    %c192 = arith.constant 192 : index
    %c0_91 = arith.constant 0 : index
    %346 = vector.load %arg8[%c192, %c0_91] : memref<256x2xf32, #tpu.memory_space<vmem>>, vector<8x2xf32>
    tpu.vector_store %arg8[%c192, %c0_91], %345 {strides = array<i32>} : memref<256x2xf32, #tpu.memory_space<vmem>>, vector<8x2xf32>,
    %347 = vector.extract_strided_slice %71 {offsets = [200, 0], sizes = [8, 2], strides = [1, 1]} : vector<256x2xf32> to vector<8x2xf32>
    %cst_92 = arith.constant dense<0xFF800000> : vector<2xf32>
    %348 = vector.multi_reduction <maximumf>, %347, %cst_92 [0] : vector<8x2xf32> to vector<2xf32>
    %349 = vector.shape_cast %348 : vector<2xf32> to vector<1x2xf32>
    %350 = vector.broadcast %349 : vector<1x2xf32> to vector<8x2xf32>
    %351 = arith.subf %347, %350 : vector<8x2xf32>
    %352 = math.exp %351 : vector<8x2xf32>
    %cst_93 = arith.constant dense<0.000000e+00> : vector<2xf32>
    %353 = vector.multi_reduction <add>, %352, %cst_93 [0] : vector<8x2xf32> to vector<2xf32>
    %354 = vector.shape_cast %353 : vector<2xf32> to vector<1x2xf32>
    %355 = vector.broadcast %354 : vector<1x2xf32> to vector<8x2xf32>
    %356 = arith.divf %352, %355 : vector<8x2xf32>
    %c200 = arith.constant 200 : index
    %c0_94 = arith.constant 0 : index
    %357 = vector.load %arg8[%c200, %c0_94] : memref<256x2xf32, #tpu.memory_space<vmem>>, vector<8x2xf32>
    tpu.vector_store %arg8[%c200, %c0_94], %356 {strides = array<i32>} : memref<256x2xf32, #tpu.memory_space<vmem>>, vector<8x2xf32>,
    %358 = vector.extract_strided_slice %71 {offsets = [208, 0], sizes = [8, 2], strides = [1, 1]} : vector<256x2xf32> to vector<8x2xf32>
    %cst_95 = arith.constant dense<0xFF800000> : vector<2xf32>
    %359 = vector.multi_reduction <maximumf>, %358, %cst_95 [0] : vector<8x2xf32> to vector<2xf32>
    %360 = vector.shape_cast %359 : vector<2xf32> to vector<1x2xf32>
    %361 = vector.broadcast %360 : vector<1x2xf32> to vector<8x2xf32>
    %362 = arith.subf %358, %361 : vector<8x2xf32>
    %363 = math.exp %362 : vector<8x2xf32>
    %cst_96 = arith.constant dense<0.000000e+00> : vector<2xf32>
    %364 = vector.multi_reduction <add>, %363, %cst_96 [0] : vector<8x2xf32> to vector<2xf32>
    %365 = vector.shape_cast %364 : vector<2xf32> to vector<1x2xf32>
    %366 = vector.broadcast %365 : vector<1x2xf32> to vector<8x2xf32>
    %367 = arith.divf %363, %366 : vector<8x2xf32>
    %c208 = arith.constant 208 : index
    %c0_97 = arith.constant 0 : index
    %368 = vector.load %arg8[%c208, %c0_97] : memref<256x2xf32, #tpu.memory_space<vmem>>, vector<8x2xf32>
    tpu.vector_store %arg8[%c208, %c0_97], %367 {strides = array<i32>} : memref<256x2xf32, #tpu.memory_space<vmem>>, vector<8x2xf32>,
    %369 = vector.extract_strided_slice %71 {offsets = [216, 0], sizes = [8, 2], strides = [1, 1]} : vector<256x2xf32> to vector<8x2xf32>
    %cst_98 = arith.constant dense<0xFF800000> : vector<2xf32>
    %370 = vector.multi_reduction <maximumf>, %369, %cst_98 [0] : vector<8x2xf32> to vector<2xf32>
    %371 = vector.shape_cast %370 : vector<2xf32> to vector<1x2xf32>
    %372 = vector.broadcast %371 : vector<1x2xf32> to vector<8x2xf32>
    %373 = arith.subf %369, %372 : vector<8x2xf32>
    %374 = math.exp %373 : vector<8x2xf32>
    %cst_99 = arith.constant dense<0.000000e+00> : vector<2xf32>
    %375 = vector.multi_reduction <add>, %374, %cst_99 [0] : vector<8x2xf32> to vector<2xf32>
    %376 = vector.shape_cast %375 : vector<2xf32> to vector<1x2xf32>
    %377 = vector.broadcast %376 : vector<1x2xf32> to vector<8x2xf32>
    %378 = arith.divf %374, %377 : vector<8x2xf32>
    %c216 = arith.constant 216 : index
    %c0_100 = arith.constant 0 : index
    %379 = vector.load %arg8[%c216, %c0_100] : memref<256x2xf32, #tpu.memory_space<vmem>>, vector<8x2xf32>
    tpu.vector_store %arg8[%c216, %c0_100], %378 {strides = array<i32>} : memref<256x2xf32, #tpu.memory_space<vmem>>, vector<8x2xf32>,
    %380 = vector.extract_strided_slice %71 {offsets = [224, 0], sizes = [8, 2], strides = [1, 1]} : vector<256x2xf32> to vector<8x2xf32>
    %cst_101 = arith.constant dense<0xFF800000> : vector<2xf32>
    %381 = vector.multi_reduction <maximumf>, %380, %cst_101 [0] : vector<8x2xf32> to vector<2xf32>
    %382 = vector.shape_cast %381 : vector<2xf32> to vector<1x2xf32>
    %383 = vector.broadcast %382 : vector<1x2xf32> to vector<8x2xf32>
    %384 = arith.subf %380, %383 : vector<8x2xf32>
    %385 = math.exp %384 : vector<8x2xf32>
    %cst_102 = arith.constant dense<0.000000e+00> : vector<2xf32>
    %386 = vector.multi_reduction <add>, %385, %cst_102 [0] : vector<8x2xf32> to vector<2xf32>
    %387 = vector.shape_cast %386 : vector<2xf32> to vector<1x2xf32>
    %388 = vector.broadcast %387 : vector<1x2xf32> to vector<8x2xf32>
    %389 = arith.divf %385, %388 : vector<8x2xf32>
    %c224 = arith.constant 224 : index
    %c0_103 = arith.constant 0 : index
    %390 = vector.load %arg8[%c224, %c0_103] : memref<256x2xf32, #tpu.memory_space<vmem>>, vector<8x2xf32>
    tpu.vector_store %arg8[%c224, %c0_103], %389 {strides = array<i32>} : memref<256x2xf32, #tpu.memory_space<vmem>>, vector<8x2xf32>,
    %391 = vector.extract_strided_slice %71 {offsets = [232, 0], sizes = [8, 2], strides = [1, 1]} : vector<256x2xf32> to vector<8x2xf32>
    %cst_104 = arith.constant dense<0xFF800000> : vector<2xf32>
    %392 = vector.multi_reduction <maximumf>, %391, %cst_104 [0] : vector<8x2xf32> to vector<2xf32>
    %393 = vector.shape_cast %392 : vector<2xf32> to vector<1x2xf32>
    %394 = vector.broadcast %393 : vector<1x2xf32> to vector<8x2xf32>
    %395 = arith.subf %391, %394 : vector<8x2xf32>
    %396 = math.exp %395 : vector<8x2xf32>
    %cst_105 = arith.constant dense<0.000000e+00> : vector<2xf32>
    %397 = vector.multi_reduction <add>, %396, %cst_105 [0] : vector<8x2xf32> to vector<2xf32>
    %398 = vector.shape_cast %397 : vector<2xf32> to vector<1x2xf32>
    %399 = vector.broadcast %398 : vector<1x2xf32> to vector<8x2xf32>
    %400 = arith.divf %396, %399 : vector<8x2xf32>
    %c232 = arith.constant 232 : index
    %c0_106 = arith.constant 0 : index
    %401 = vector.load %arg8[%c232, %c0_106] : memref<256x2xf32, #tpu.memory_space<vmem>>, vector<8x2xf32>
    tpu.vector_store %arg8[%c232, %c0_106], %400 {strides = array<i32>} : memref<256x2xf32, #tpu.memory_space<vmem>>, vector<8x2xf32>,
    %402 = vector.extract_strided_slice %71 {offsets = [240, 0], sizes = [8, 2], strides = [1, 1]} : vector<256x2xf32> to vector<8x2xf32>
    %cst_107 = arith.constant dense<0xFF800000> : vector<2xf32>
    %403 = vector.multi_reduction <maximumf>, %402, %cst_107 [0] : vector<8x2xf32> to vector<2xf32>
    %404 = vector.shape_cast %403 : vector<2xf32> to vector<1x2xf32>
    %405 = vector.broadcast %404 : vector<1x2xf32> to vector<8x2xf32>
    %406 = arith.subf %402, %405 : vector<8x2xf32>
    %407 = math.exp %406 : vector<8x2xf32>
    %cst_108 = arith.constant dense<0.000000e+00> : vector<2xf32>
    %408 = vector.multi_reduction <add>, %407, %cst_108 [0] : vector<8x2xf32> to vector<2xf32>
    %409 = vector.shape_cast %408 : vector<2xf32> to vector<1x2xf32>
    %410 = vector.broadcast %409 : vector<1x2xf32> to vector<8x2xf32>
    %411 = arith.divf %407, %410 : vector<8x2xf32>
    %c240 = arith.constant 240 : index
    %c0_109 = arith.constant 0 : index
    %412 = vector.load %arg8[%c240, %c0_109] : memref<256x2xf32, #tpu.memory_space<vmem>>, vector<8x2xf32>
    tpu.vector_store %arg8[%c240, %c0_109], %411 {strides = array<i32>} : memref<256x2xf32, #tpu.memory_space<vmem>>, vector<8x2xf32>,
    %413 = vector.extract_strided_slice %71 {offsets = [248, 0], sizes = [8, 2], strides = [1, 1]} : vector<256x2xf32> to vector<8x2xf32>
    %cst_110 = arith.constant dense<0xFF800000> : vector<2xf32>
    %414 = vector.multi_reduction <maximumf>, %413, %cst_110 [0] : vector<8x2xf32> to vector<2xf32>
    %415 = vector.shape_cast %414 : vector<2xf32> to vector<1x2xf32>
    %416 = vector.broadcast %415 : vector<1x2xf32> to vector<8x2xf32>
    %417 = arith.subf %413, %416 : vector<8x2xf32>
    %418 = math.exp %417 : vector<8x2xf32>
    %cst_111 = arith.constant dense<0.000000e+00> : vector<2xf32>
    %419 = vector.multi_reduction <add>, %418, %cst_111 [0] : vector<8x2xf32> to vector<2xf32>
    %420 = vector.shape_cast %419 : vector<2xf32> to vector<1x2xf32>
    %421 = vector.broadcast %420 : vector<1x2xf32> to vector<8x2xf32>
    %422 = arith.divf %418, %421 : vector<8x2xf32>
    %c248 = arith.constant 248 : index
    %c0_112 = arith.constant 0 : index
    %423 = vector.load %arg8[%c248, %c0_112] : memref<256x2xf32, #tpu.memory_space<vmem>>, vector<8x2xf32>
    tpu.vector_store %arg8[%c248, %c0_112], %422 {strides = array<i32>} : memref<256x2xf32, #tpu.memory_space<vmem>>, vector<8x2xf32>,
    return
  }
  func.func @transform_0(%arg0: i32) -> (i32, i32) {
    %c0_i32 = arith.constant 0 : i32
    %c0_i32_0 = arith.constant 0 : i32
    return %arg0, %c0_i32 : i32, i32
  }
  func.func @transform_1(%arg0: i32) -> (i32, i32) {
    %c0_i32 = arith.constant 0 : i32
    %c0_i32_0 = arith.constant 0 : i32
    %c0_i32_1 = arith.constant 0 : i32
    return %c0_i32, %c0_i32_0 : i32, i32
  }
  func.func @transform_2(%arg0: i32) -> (i32, i32) {
    %c0_i32 = arith.constant 0 : i32
    %c0_i32_0 = arith.constant 0 : i32
    %c0_i32_1 = arith.constant 0 : i32
    return %c0_i32, %c0_i32_0 : i32, i32
  }
  func.func @transform_3(%arg0: i32) -> (i32, i32) {
    %c0_i32 = arith.constant 0 : i32
    %c0_i32_0 = arith.constant 0 : i32
    %c0_i32_1 = arith.constant 0 : i32
    return %c0_i32, %c0_i32_0 : i32, i32
  }
  func.func @transform_4(%arg0: i32) -> (i32, i32) {
    %c0_i32 = arith.constant 0 : i32
    %c0_i32_0 = arith.constant 0 : i32
    %c0_i32_1 = arith.constant 0 : i32
    return %c0_i32, %c0_i32_0 : i32, i32
  }
  func.func @transform_5(%arg0: i32) -> (i32, i32) {
    %c0_i32 = arith.constant 0 : i32
    %c0_i32_0 = arith.constant 0 : i32
    %c0_i32_1 = arith.constant 0 : i32
    return %c0_i32, %c0_i32_0 : i32, i32
  }
  func.func @transform_6(%arg0: i32) -> (i32, i32) {
    %c0_i32 = arith.constant 0 : i32
    %c0_i32_0 = arith.constant 0 : i32
    %c0_i32_1 = arith.constant 0 : i32
    return %c0_i32, %c0_i32_0 : i32, i32
  }
  func.func @transform_7(%arg0: i32) -> (i32, i32) {
    %c0_i32 = arith.constant 0 : i32
    %c0_i32_0 = arith.constant 0 : i32
    return %arg0, %c0_i32 : i32, i32
  }
}

</mosaic_0001>

<llo_original>
// kernel: neural_net_forward.1
$region0: #{neural_net_forward.1}
  #allocation0 [shape = 'u32[]', space=smem, size = 0x4, offset = 0x4, fixed_abs, tag = 'smem constant byte address 0x4 - core index']
  #allocation1 [shape = 'u32[144,128]{1,0:T(1,128)}', space=vmem, size = 0x12000, scoped, tag = 'internal scratch']
  %s0 = inlined_call_operand.vmem [shape: f32[512,4], index: 0, kind: input, shape index: {}]
  %s1 = inlined_call_operand.vmem [shape: f32[4,8], index: 1, kind: input, shape index: {}]
  %s2 = inlined_call_operand.vmem [shape: f32[1,8], index: 2, kind: input, shape index: {}]
  %s3 = inlined_call_operand.vmem [shape: f32[8,128], index: 3, kind: input, shape index: {}]
  %s4 = inlined_call_operand.vmem [shape: f32[1,128], index: 4, kind: input, shape index: {}]
  %s5 = inlined_call_operand.vmem [shape: f32[5,2], index: 5, kind: input, shape index: {}]
  %s6 = inlined_call_operand.vmem [shape: f32[1,2], index: 6, kind: input, shape index: {}]
  %s7 = inlined_call_operand.vmem [shape: f32[512,2], index: 7, kind: output, shape index: {}]
  %s8 = sld [smem:[#allocation0]]
  $region61: #{neural_net_forward.1} parent=0
    _
  %s10 = ssub.s32 1, %s8
  %s11 = scalar_select 0, %s10, %s8
  loop: start=0, step=1, limit=4
  $region2: #{neural_net_forward.1} parent=0 // loop_pre_header
    _
  $region3: #{neural_net_forward.1} parent=0 // loop_header
    %s13 = sphi 0, %s17
    %p14 = scmp.ge.s32.totalorder %s13, 4
    %s23 = sphi 0, %s25
    %s26 = sphi 0, %s23
    %s27 = sphi 0, %s26
    %s43 = sphi 0, %s27
    %s47 = sphi 0, %s47
    %s49 = sphi 0, %s47
    %s50 = sphi 0, %s49
    %s64 = sphi 0, %s50
    %s68 = sphi 0, %s68
    %s70 = sphi 0, %s68
    %s71 = sphi 0, %s70
    %s85 = sphi 0, %s71
    %s89 = sphi 0, %s89
    %s91 = sphi 0, %s89
    %s92 = sphi 0, %s91
    %s106 = sphi 0, %s92
    %s110 = sphi 0, %s110
    %s112 = sphi 0, %s110
    %s113 = sphi 0, %s112
    %s127 = sphi 0, %s113
    %s131 = sphi 0, %s131
    %s133 = sphi 0, %s131
    %s134 = sphi 0, %s133
    %s148 = sphi 0, %s134
    %s152 = sphi 0, %s152
    %s154 = sphi 0, %s152
    %s155 = sphi 0, %s154
    %s169 = sphi 0, %s155
    %s175 = sphi 0, %s177
    %s178 = sphi 0, %s175
    %s179 = sphi 0, %s178
    %s195 = sphi 0, %s179
  $region4: #{neural_net_forward.1} parent=0 // loop_header_branch
    %16 = sbr.rel (%p14) target = $region8
  $region5: #{neural_net_forward.1} parent=0 // loop_body
    %s18 = ssub.s32 %s13, 1
    %s19 = ssub.s32 %s13, 2
    %s20 = sadd.s32 %s13, 1
    %s21 = ssub.s32 %s13, %s20
    %p22 = scmp.eq.s32.totalorder %s21, 0
    %s24 = sadd.s32 %s23, 1
    %s25 = scalar_select %p22, %s23, %s24
    %p28 = pneg %p22
    %p29 = scmp.eq.s32.totalorder %s13, 1
    %p30 = por %p28, %p29
    %p31 = scmp.ne.s32.totalorder %s23, %s26
    %p32 = scmp.eq.s32.totalorder %s13, 0
    %p33 = por %p31, %p32
    %p34 = scmp.ne.s32.totalorder %s23, %s26
    %p35 = scmp.eq.s32.totalorder %s18, 1
    %p36 = por %p34, %p35
    %p37 = scmp.ne.s32.totalorder %s26, %s27
    %p38 = scmp.eq.s32.totalorder %s18, 0
    %p39 = por %p37, %p38
    %p40 = scmp.ne.s32.totalorder %s26, %s27
    %p41 = scmp.eq.s32.totalorder %s19, 1
    %p42 = por %p40, %p41
    %p44 = scmp.ne.s32.totalorder %s27, %s43
    %p45 = scmp.eq.s32.totalorder %s19, 0
    %p46 = por %p44, %p45
    %s48 = sadd.s32 %s47, 1
    %p51 = scmp.eq.s32.totalorder %s13, 1
    %p52 = scmp.ne.s32.totalorder %s47, %s49
    %p53 = scmp.eq.s32.totalorder %s13, 0
    %p54 = por %p52, %p53
    %p55 = scmp.ne.s32.totalorder %s47, %s49
    %p56 = scmp.eq.s32.totalorder %s18, 1
    %p57 = por %p55, %p56
    %p58 = scmp.ne.s32.totalorder %s49, %s50
    %p59 = scmp.eq.s32.totalorder %s18, 0
    %p60 = por %p58, %p59
    %p61 = scmp.ne.s32.totalorder %s49, %s50
    %p62 = scmp.eq.s32.totalorder %s19, 1
    %p63 = por %p61, %p62
    %p65 = scmp.ne.s32.totalorder %s50, %s64
    %p66 = scmp.eq.s32.totalorder %s19, 0
    %p67 = por %p65, %p66
    %s69 = sadd.s32 %s68, 1
    %p72 = scmp.eq.s32.totalorder %s13, 1
    %p73 = scmp.ne.s32.totalorder %s68, %s70
    %p74 = scmp.eq.s32.totalorder %s13, 0
    %p75 = por %p73, %p74
    %p76 = scmp.ne.s32.totalorder %s68, %s70
    %p77 = scmp.eq.s32.totalorder %s18, 1
    %p78 = por %p76, %p77
    %p79 = scmp.ne.s32.totalorder %s70, %s71
    %p80 = scmp.eq.s32.totalorder %s18, 0
    %p81 = por %p79, %p80
    %p82 = scmp.ne.s32.totalorder %s70, %s71
    %p83 = scmp.eq.s32.totalorder %s19, 1
    %p84 = por %p82, %p83
    %p86 = scmp.ne.s32.totalorder %s71, %s85
    %p87 = scmp.eq.s32.totalorder %s19, 0
    %p88 = por %p86, %p87
    %s90 = sadd.s32 %s89, 1
    %p93 = scmp.eq.s32.totalorder %s13, 1
    %p94 = scmp.ne.s32.totalorder %s89, %s91
    %p95 = scmp.eq.s32.totalorder %s13, 0
    %p96 = por %p94, %p95
    %p97 = scmp.ne.s32.totalorder %s89, %s91
    %p98 = scmp.eq.s32.totalorder %s18, 1
    %p99 = por %p97, %p98
    %p100 = scmp.ne.s32.totalorder %s91, %s92
    %p101 = scmp.eq.s32.totalorder %s18, 0
    %p102 = por %p100, %p101
    %p103 = scmp.ne.s32.totalorder %s91, %s92
    %p104 = scmp.eq.s32.totalorder %s19, 1
    %p105 = por %p103, %p104
    %p107 = scmp.ne.s32.totalorder %s92, %s106
    %p108 = scmp.eq.s32.totalorder %s19, 0
    %p109 = por %p107, %p108
    %s111 = sadd.s32 %s110, 1
    %p114 = scmp.eq.s32.totalorder %s13, 1
    %p115 = scmp.ne.s32.totalorder %s110, %s112
    %p116 = scmp.eq.s32.totalorder %s13, 0
    %p117 = por %p115, %p116
    %p118 = scmp.ne.s32.totalorder %s110, %s112
    %p119 = scmp.eq.s32.totalorder %s18, 1
    %p120 = por %p118, %p119
    %p121 = scmp.ne.s32.totalorder %s112, %s113
    %p122 = scmp.eq.s32.totalorder %s18, 0
    %p123 = por %p121, %p122
    %p124 = scmp.ne.s32.totalorder %s112, %s113
    %p125 = scmp.eq.s32.totalorder %s19, 1
    %p126 = por %p124, %p125
    %p128 = scmp.ne.s32.totalorder %s113, %s127
    %p129 = scmp.eq.s32.totalorder %s19, 0
    %p130 = por %p128, %p129
    %s132 = sadd.s32 %s131, 1
    %p135 = scmp.eq.s32.totalorder %s13, 1
    %p136 = scmp.ne.s32.totalorder %s131, %s133
    %p137 = scmp.eq.s32.totalorder %s13, 0
    %p138 = por %p136, %p137
    %p139 = scmp.ne.s32.totalorder %s131, %s133
    %p140 = scmp.eq.s32.totalorder %s18, 1
    %p141 = por %p139, %p140
    %p142 = scmp.ne.s32.totalorder %s133, %s134
    %p143 = scmp.eq.s32.totalorder %s18, 0
    %p144 = por %p142, %p143
    %p145 = scmp.ne.s32.totalorder %s133, %s134
    %p146 = scmp.eq.s32.totalorder %s19, 1
    %p147 = por %p145, %p146
    %p149 = scmp.ne.s32.totalorder %s134, %s148
    %p150 = scmp.eq.s32.totalorder %s19, 0
    %p151 = por %p149, %p150
    %s153 = sadd.s32 %s152, 1
    %p156 = scmp.eq.s32.totalorder %s13, 1
    %p157 = scmp.ne.s32.totalorder %s152, %s154
    %p158 = scmp.eq.s32.totalorder %s13, 0
    %p159 = por %p157, %p158
    %p160 = scmp.ne.s32.totalorder %s152, %s154
    %p161 = scmp.eq.s32.totalorder %s18, 1
    %p162 = por %p160, %p161
    %p163 = scmp.ne.s32.totalorder %s154, %s155
    %p164 = scmp.eq.s32.totalorder %s18, 0
    %p165 = por %p163, %p164
    %p166 = scmp.ne.s32.totalorder %s154, %s155
    %p167 = scmp.eq.s32.totalorder %s19, 1
    %p168 = por %p166, %p167
    %p170 = scmp.ne.s32.totalorder %s155, %s169
    %p171 = scmp.eq.s32.totalorder %s19, 0
    %p172 = por %p170, %p171
    %s173 = ssub.s32 %s13, %s20
    %p174 = scmp.eq.s32.totalorder %s173, 0
    %s176 = sadd.s32 %s175, 1
    %s177 = scalar_select %p174, %s175, %s176
    %p180 = pneg %p174
    %p181 = scmp.eq.s32.totalorder %s13, 1
    %p182 = por %p180, %p181
    %p183 = scmp.ne.s32.totalorder %s175, %s178
    %p184 = scmp.eq.s32.totalorder %s13, 0
    %p185 = por %p183, %p184
    %p186 = scmp.ne.s32.totalorder %s175, %s178
    %p187 = scmp.eq.s32.totalorder %s18, 1
    %p188 = por %p186, %p187
    %p189 = scmp.ne.s32.totalorder %s178, %s179
    %p190 = scmp.eq.s32.totalorder %s18, 0
    %p191 = por %p189, %p190
    %p192 = scmp.ne.s32.totalorder %s178, %s179
    %p193 = scmp.eq.s32.totalorder %s19, 1
    %p194 = por %p192, %p193
    %p196 = scmp.ne.s32.totalorder %s179, %s195
    %p197 = scmp.eq.s32.totalorder %s19, 0
    %p198 = por %p196, %p197
    %p199 = scmp.le.s32.totalorder 1, %s13
    %p200 = scmp.lt.s32.totalorder %s13, 3
    %p201 = pnand %p199, %p200
    %p202 = pneg %p201
    // Predicated region
    $region9: #{neural_net_forward.1} parent=5 // pred_check
      _
    $region10: #{neural_net_forward.1} parent=5 // pred_check_branch
      %204 = sbr.rel (%p201) target = $region12
    $region11: #{neural_net_forward.1} parent=5 // pred_region
      %s205 = ssub.s32 %s13, 1
      // Predicated region
      $region13: #{neural_net_forward.1} parent=11 // pred_check
        %p206 = pneg %p60
      $region14: #{neural_net_forward.1} parent=11 // pred_check_branch
        %208 = sbr.rel (%p206) target = $region16
      $region15: #{neural_net_forward.1} parent=11 // pred_region
        _
      $region16: #{neural_net_forward.1} parent=11 // pred_fallthru
        _
      // Predicated region
      $region17: #{neural_net_forward.1} parent=11 // pred_check
        %p209 = pneg %p81
      $region18: #{neural_net_forward.1} parent=11 // pred_check_branch
        %211 = sbr.rel (%p209) target = $region20
      $region19: #{neural_net_forward.1} parent=11 // pred_region
        _
      $region20: #{neural_net_forward.1} parent=11 // pred_fallthru
        _
      // Predicated region
      $region21: #{neural_net_forward.1} parent=11 // pred_check
        %p212 = pneg %p102
      $region22: #{neural_net_forward.1} parent=11 // pred_check_branch
        %214 = sbr.rel (%p212) target = $region24
      $region23: #{neural_net_forward.1} parent=11 // pred_region
        _
      $region24: #{neural_net_forward.1} parent=11 // pred_fallthru
        _
      // Predicated region
      $region25: #{neural_net_forward.1} parent=11 // pred_check
        %p215 = pneg %p123
      $region26: #{neural_net_forward.1} parent=11 // pred_check_branch
        %217 = sbr.rel (%p215) target = $region28
      $region27: #{neural_net_forward.1} parent=11 // pred_region
        _
      $region28: #{neural_net_forward.1} parent=11 // pred_fallthru
        _
      // Predicated region
      $region29: #{neural_net_forward.1} parent=11 // pred_check
        %p218 = pneg %p144
      $region30: #{neural_net_forward.1} parent=11 // pred_check_branch
        %220 = sbr.rel (%p218) target = $region32
      $region31: #{neural_net_forward.1} parent=11 // pred_region
        _
      $region32: #{neural_net_forward.1} parent=11 // pred_fallthru
        _
      // Predicated region
      $region33: #{neural_net_forward.1} parent=11 // pred_check
        %p221 = pneg %p165
      $region34: #{neural_net_forward.1} parent=11 // pred_check_branch
        %223 = sbr.rel (%p221) target = $region36
      $region35: #{neural_net_forward.1} parent=11 // pred_region
        _
      $region36: #{neural_net_forward.1} parent=11 // pred_fallthru
        _
    $region12: #{neural_net_forward.1} parent=5 // pred_fallthru
      _
    %p224 = scmp.lt.s32.totalorder %s13, 2
    // Predicated region
    $region37: #{neural_net_forward.1} parent=5 // pred_check
      %p225 = pneg %p224
    $region38: #{neural_net_forward.1} parent=5 // pred_check_branch
      %227 = sbr.rel (%p225) target = $region40
    $region39: #{neural_net_forward.1} parent=5 // pred_region
      // Predicated region
      $region41: #{neural_net_forward.1} parent=39 // pred_check
        %p228 = pneg %p33
      $region42: #{neural_net_forward.1} parent=39 // pred_check_branch
        %230 = sbr.rel (%p228) target = $region44
      $region43: #{neural_net_forward.1} parent=39 // pred_region
        %s231 = smul.u32 32, %s13
        %p232 = scmp.lt.s32.totalorder %s231, 63
        %s233 = scalar_select %p232, %s231, 63
        %s234 = smul.addr %s233, 8
        %s235 = scalar_lea.vmem %s0, %s234
        %s236 = smul.u32 32, %s13
      $region44: #{neural_net_forward.1} parent=39 // pred_fallthru
        _
    $region40: #{neural_net_forward.1} parent=5 // pred_fallthru
      _
    %p237 = scmp.le.s32.totalorder 1, %s13
    %p238 = scmp.lt.s32.totalorder %s13, 3
    %p239 = pnand %p237, %p238
    %p240 = pneg %p239
    // Predicated region
    $region45: #{neural_net_forward.1} parent=5 // pred_check
      _
    $region46: #{neural_net_forward.1} parent=5 // pred_check_branch
      %242 = sbr.rel (%p239) target = $region48
    $region47: #{neural_net_forward.1} parent=5 // pred_region
      %s243 = ssub.s32 %s13, 1
      %s244 = smul.u32 32, %s18
      %p245 = scmp.lt.s32.totalorder %s244, 63
      %s246 = scalar_select %p245, %s244, 63
      %s247 = smul.addr %s246, 8
      %s248 = scalar_lea.vmem %s0, %s247
      %p249 = pneg %p39
      %p250 = pneg %p36
      %p251 = pneg %p60
      %p252 = pneg %p57
      %p253 = pneg %p81
      %p254 = pneg %p78
      %p255 = pneg %p102
      %p256 = pneg %p99
      %p257 = pneg %p123
      %p258 = pneg %p120
      %p259 = pneg %p144
      %p260 = pneg %p141
      %p261 = pneg %p165
      %p262 = pneg %p162
      %p263 = pneg %p191
      %p264 = pneg %p188
      %s265 = smul.u32 32, %s18
      %p266 = scmp.lt.s32.totalorder %s265, 63
      %s267 = scalar_select %p266, %s265, 63
      %s268 = smul.addr %s267, 8
      %s269 = scalar_lea.vmem %s7, %s268
      %s270 = smul.u32 32, %s18
      %p271 = scmp.lt.s32.totalorder %s270, 63
      %s272 = scalar_select %p271, %s270, 63
      %s273 = smul.addr %s272, 8
      %s274 = scalar_lea.vmem %s0, %s273
      %s275 = smul.u32 32, %s18
      %s276 = smul.u32 32, %s18
      %p277 = scmp.lt.s32.totalorder %s276, 63
      %s278 = scalar_select %p277, %s276, 63
      %s279 = smul.addr %s278, 8
      %s280 = scalar_lea.vmem %s7, %s279
      %s281 = smul.u32 32, %s18
      %v282 = vld [vmem:[%s274] sm:$0xff]
      %v283 = vld [vmem:[%s274 + $0x8] sm:$0xff]
      %v284 = vld [vmem:[%s274 + $0x10] sm:$0xff]
      %v285 = vld [vmem:[%s274 + $0x18] sm:$0xff]
      %v286 = vld [vmem:[%s274 + $0x20] sm:$0xff]
      %v287 = vld [vmem:[%s274 + $0x28] sm:$0xff]
      %v288 = vld [vmem:[%s274 + $0x30] sm:$0xff]
      %v289 = vld [vmem:[%s274 + $0x38] sm:$0xff]
      %v290 = vld [vmem:[%s274 + $0x40] sm:$0xff]
      %v291 = vld [vmem:[%s274 + $0x48] sm:$0xff]
      %v292 = vld [vmem:[%s274 + $0x50] sm:$0xff]
      %v293 = vld [vmem:[%s274 + $0x58] sm:$0xff]
      %v294 = vld [vmem:[%s274 + $0x60] sm:$0xff]
      %v295 = vld [vmem:[%s274 + $0x68] sm:$0xff]
      %v296 = vld [vmem:[%s274 + $0x70] sm:$0xff]
      %v297 = vld [vmem:[%s274 + $0x78] sm:$0xff]
      %v298 = vld [vmem:[%s274 + $0x80] sm:$0xff]
      %v299 = vld [vmem:[%s274 + $0x88] sm:$0xff]
      %v300 = vld [vmem:[%s274 + $0x90] sm:$0xff]
      %v301 = vld [vmem:[%s274 + $0x98] sm:$0xff]
      %v302 = vld [vmem:[%s274 + $0xa0] sm:$0xff]
      %v303 = vld [vmem:[%s274 + $0xa8] sm:$0xff]
      %v304 = vld [vmem:[%s274 + $0xb0] sm:$0xff]
      %v305 = vld [vmem:[%s274 + $0xb8] sm:$0xff]
      %v306 = vld [vmem:[%s274 + $0xc0] sm:$0xff]
      %v307 = vld [vmem:[%s274 + $0xc8] sm:$0xff]
      %v308 = vld [vmem:[%s274 + $0xd0] sm:$0xff]
      %v309 = vld [vmem:[%s274 + $0xd8] sm:$0xff]
      %v310 = vld [vmem:[%s274 + $0xe0] sm:$0xff]
      %v311 = vld [vmem:[%s274 + $0xe8] sm:$0xff]
      %v312 = vld [vmem:[%s274 + $0xf0] sm:$0xff]
      %v313 = vld [vmem:[%s274 + $0xf8] sm:$0xff]
      %v314 = vld [vmem:[%s1] sm:$0xf]
      %v315 = vld [vmem:[%s2] sm:$0x1]
      %317 = vset.pattern.permute.xlu0 0
      %318 = vperm.xlu0 %317, %v282
      %v319 = vpop.permute.xlu0 %318
      %322 = vset.pattern.permute.xlu0 0
      %323 = vperm.xlu0 %322, %v283
      %v324 = vpop.permute.xlu0 %323
      %327 = vset.pattern.permute.xlu0 0
      %328 = vperm.xlu0 %327, %v284
      %v329 = vpop.permute.xlu0 %328
      %332 = vset.pattern.permute.xlu0 0
      %333 = vperm.xlu0 %332, %v285
      %v334 = vpop.permute.xlu0 %333
      %337 = vset.pattern.permute.xlu0 0
      %338 = vperm.xlu0 %337, %v286
      %v339 = vpop.permute.xlu0 %338
      %342 = vset.pattern.permute.xlu0 0
      %343 = vperm.xlu0 %342, %v287
      %v344 = vpop.permute.xlu0 %343
      %347 = vset.pattern.permute.xlu0 0
      %348 = vperm.xlu0 %347, %v288
      %v349 = vpop.permute.xlu0 %348
      %352 = vset.pattern.permute.xlu0 0
      %353 = vperm.xlu0 %352, %v289
      %v354 = vpop.permute.xlu0 %353
      %357 = vset.pattern.permute.xlu0 0
      %358 = vperm.xlu0 %357, %v290
      %v359 = vpop.permute.xlu0 %358
      %362 = vset.pattern.permute.xlu0 0
      %363 = vperm.xlu0 %362, %v291
      %v364 = vpop.permute.xlu0 %363
      %367 = vset.pattern.permute.xlu0 0
      %368 = vperm.xlu0 %367, %v292
      %v369 = vpop.permute.xlu0 %368
      %372 = vset.pattern.permute.xlu0 0
      %373 = vperm.xlu0 %372, %v293
      %v374 = vpop.permute.xlu0 %373
      %377 = vset.pattern.permute.xlu0 0
      %378 = vperm.xlu0 %377, %v294
      %v379 = vpop.permute.xlu0 %378
      %382 = vset.pattern.permute.xlu0 0
      %383 = vperm.xlu0 %382, %v295
      %v384 = vpop.permute.xlu0 %383
      %387 = vset.pattern.permute.xlu0 0
      %388 = vperm.xlu0 %387, %v296
      %v389 = vpop.permute.xlu0 %388
      %392 = vset.pattern.permute.xlu0 0
      %393 = vperm.xlu0 %392, %v297
      %v394 = vpop.permute.xlu0 %393
      %397 = vset.pattern.permute.xlu0 0
      %398 = vperm.xlu0 %397, %v298
      %v399 = vpop.permute.xlu0 %398
      %402 = vset.pattern.permute.xlu0 0
      %403 = vperm.xlu0 %402, %v299
      %v404 = vpop.permute.xlu0 %403
      %407 = vset.pattern.permute.xlu0 0
      %408 = vperm.xlu0 %407, %v300
      %v409 = vpop.permute.xlu0 %408
      %412 = vset.pattern.permute.xlu0 0
      %413 = vperm.xlu0 %412, %v301
      %v414 = vpop.permute.xlu0 %413
      %417 = vset.pattern.permute.xlu0 0
      %418 = vperm.xlu0 %417, %v302
      %v419 = vpop.permute.xlu0 %418
      %422 = vset.pattern.permute.xlu0 0
      %423 = vperm.xlu0 %422, %v303
      %v424 = vpop.permute.xlu0 %423
      %427 = vset.pattern.permute.xlu0 0
      %428 = vperm.xlu0 %427, %v304
      %v429 = vpop.permute.xlu0 %428
      %432 = vset.pattern.permute.xlu0 0
      %433 = vperm.xlu0 %432, %v305
      %v434 = vpop.permute.xlu0 %433
      %437 = vset.pattern.permute.xlu0 0
      %438 = vperm.xlu0 %437, %v306
      %v439 = vpop.permute.xlu0 %438
      %442 = vset.pattern.permute.xlu0 0
      %443 = vperm.xlu0 %442, %v307
      %v444 = vpop.permute.xlu0 %443
      %447 = vset.pattern.permute.xlu0 0
      %448 = vperm.xlu0 %447, %v308
      %v449 = vpop.permute.xlu0 %448
      %452 = vset.pattern.permute.xlu0 0
      %453 = vperm.xlu0 %452, %v309
      %v454 = vpop.permute.xlu0 %453
      %457 = vset.pattern.permute.xlu0 0
      %458 = vperm.xlu0 %457, %v310
      %v459 = vpop.permute.xlu0 %458
      %462 = vset.pattern.permute.xlu0 0
      %463 = vperm.xlu0 %462, %v311
      %v464 = vpop.permute.xlu0 %463
      %467 = vset.pattern.permute.xlu0 0
      %468 = vperm.xlu0 %467, %v312
      %v469 = vpop.permute.xlu0 %468
      %472 = vset.pattern.permute.xlu0 0
      %473 = vperm.xlu0 %472, %v313
      %v474 = vpop.permute.xlu0 %473
      %v476 = vlaneseq
      %v477 = vshrl.u32 %v476, 7
      %v478 = vsub.s32 0, %v477
      %v479 = vrot.slane %v314, %v478
      %v480 = vmul.f32 %v319, %v479
      %v481 = vmul.f32 %v324, %v479
      %v482 = vmul.f32 %v329, %v479
      %v483 = vmul.f32 %v334, %v479
      %v484 = vmul.f32 %v339, %v479
      %v485 = vmul.f32 %v344, %v479
      %v486 = vmul.f32 %v349, %v479
      %v487 = vmul.f32 %v354, %v479
      %v488 = vmul.f32 %v359, %v479
      %v489 = vmul.f32 %v364, %v479
      %v490 = vmul.f32 %v369, %v479
      %v491 = vmul.f32 %v374, %v479
      %v492 = vmul.f32 %v379, %v479
      %v493 = vmul.f32 %v384, %v479
      %v494 = vmul.f32 %v389, %v479
      %v495 = vmul.f32 %v394, %v479
      %v496 = vmul.f32 %v399, %v479
      %v497 = vmul.f32 %v404, %v479
      %v498 = vmul.f32 %v409, %v479
      %v499 = vmul.f32 %v414, %v479
      %v500 = vmul.f32 %v419, %v479
      %v501 = vmul.f32 %v424, %v479
      %v502 = vmul.f32 %v429, %v479
      %v503 = vmul.f32 %v434, %v479
      %v504 = vmul.f32 %v439, %v479
      %v505 = vmul.f32 %v444, %v479
      %v506 = vmul.f32 %v449, %v479
      %v507 = vmul.f32 %v454, %v479
      %v508 = vmul.f32 %v459, %v479
      %v509 = vmul.f32 %v464, %v479
      %v510 = vmul.f32 %v469, %v479
      %v511 = vmul.f32 %v474, %v479
      %v513 = vlaneseq
      %v514 = vshrl.u32 %v513, 7
      %v515 = vsub.s32 0, %v514
      %v516 = vrot.slane %v315, %v515
      %v518 = vadd.f32 %v516, %v480
      %v519 = vadd.f32 %v516, %v481
      %v520 = vadd.f32 %v516, %v482
      %v521 = vadd.f32 %v516, %v483
      %v522 = vadd.f32 %v516, %v484
      %v523 = vadd.f32 %v516, %v485
      %v524 = vadd.f32 %v516, %v486
      %v525 = vadd.f32 %v516, %v487
      %v526 = vadd.f32 %v516, %v488
      %v527 = vadd.f32 %v516, %v489
      %v528 = vadd.f32 %v516, %v490
      %v529 = vadd.f32 %v516, %v491
      %v530 = vadd.f32 %v516, %v492
      %v531 = vadd.f32 %v516, %v493
      %v532 = vadd.f32 %v516, %v494
      %v533 = vadd.f32 %v516, %v495
      %v534 = vadd.f32 %v516, %v496
      %v535 = vadd.f32 %v516, %v497
      %v536 = vadd.f32 %v516, %v498
      %v537 = vadd.f32 %v516, %v499
      %v538 = vadd.f32 %v516, %v500
      %v539 = vadd.f32 %v516, %v501
      %v540 = vadd.f32 %v516, %v502
      %v541 = vadd.f32 %v516, %v503
      %v542 = vadd.f32 %v516, %v504
      %v543 = vadd.f32 %v516, %v505
      %v544 = vadd.f32 %v516, %v506
      %v545 = vadd.f32 %v516, %v507
      %v546 = vadd.f32 %v516, %v508
      %v547 = vadd.f32 %v516, %v509
      %v548 = vadd.f32 %v516, %v510
      %v549 = vadd.f32 %v516, %v511
      %550 = vset.pattern.permute.xlu0 1
      %551 = vperm.xlu0 %550, %v282
      %v552 = vpop.permute.xlu0 %551
      %554 = vset.pattern.permute.xlu0 1
      %555 = vperm.xlu0 %554, %v283
      %v556 = vpop.permute.xlu0 %555
      %558 = vset.pattern.permute.xlu0 1
      %559 = vperm.xlu0 %558, %v284
      %v560 = vpop.permute.xlu0 %559
      %562 = vset.pattern.permute.xlu0 1
      %563 = vperm.xlu0 %562, %v285
      %v564 = vpop.permute.xlu0 %563
      %566 = vset.pattern.permute.xlu0 1
      %567 = vperm.xlu0 %566, %v286
      %v568 = vpop.permute.xlu0 %567
      %570 = vset.pattern.permute.xlu0 1
      %571 = vperm.xlu0 %570, %v287
      %v572 = vpop.permute.xlu0 %571
      %574 = vset.pattern.permute.xlu0 1
      %575 = vperm.xlu0 %574, %v288
      %v576 = vpop.permute.xlu0 %575
      %578 = vset.pattern.permute.xlu0 1
      %579 = vperm.xlu0 %578, %v289
      %v580 = vpop.permute.xlu0 %579
      %582 = vset.pattern.permute.xlu0 1
      %583 = vperm.xlu0 %582, %v290
      %v584 = vpop.permute.xlu0 %583
      %586 = vset.pattern.permute.xlu0 1
      %587 = vperm.xlu0 %586, %v291
      %v588 = vpop.permute.xlu0 %587
      %590 = vset.pattern.permute.xlu0 1
      %591 = vperm.xlu0 %590, %v292
      %v592 = vpop.permute.xlu0 %591
      %594 = vset.pattern.permute.xlu0 1
      %595 = vperm.xlu0 %594, %v293
      %v596 = vpop.permute.xlu0 %595
      %598 = vset.pattern.permute.xlu0 1
      %599 = vperm.xlu0 %598, %v294
      %v600 = vpop.permute.xlu0 %599
      %602 = vset.pattern.permute.xlu0 1
      %603 = vperm.xlu0 %602, %v295
      %v604 = vpop.permute.xlu0 %603
      %606 = vset.pattern.permute.xlu0 1
      %607 = vperm.xlu0 %606, %v296
      %v608 = vpop.permute.xlu0 %607
      %610 = vset.pattern.permute.xlu0 1
      %611 = vperm.xlu0 %610, %v297
      %v612 = vpop.permute.xlu0 %611
      %614 = vset.pattern.permute.xlu0 1
      %615 = vperm.xlu0 %614, %v298
      %v616 = vpop.permute.xlu0 %615
      %618 = vset.pattern.permute.xlu0 1
      %619 = vperm.xlu0 %618, %v299
      %v620 = vpop.permute.xlu0 %619
      %622 = vset.pattern.permute.xlu0 1
      %623 = vperm.xlu0 %622, %v300
      %v624 = vpop.permute.xlu0 %623
      %626 = vset.pattern.permute.xlu0 1
      %627 = vperm.xlu0 %626, %v301
      %v628 = vpop.permute.xlu0 %627
      %630 = vset.pattern.permute.xlu0 1
      %631 = vperm.xlu0 %630, %v302
      %v632 = vpop.permute.xlu0 %631
      %634 = vset.pattern.permute.xlu0 1
      %635 = vperm.xlu0 %634, %v303
      %v636 = vpop.permute.xlu0 %635
      %638 = vset.pattern.permute.xlu0 1
      %639 = vperm.xlu0 %638, %v304
      %v640 = vpop.permute.xlu0 %639
      %642 = vset.pattern.permute.xlu0 1
      %643 = vperm.xlu0 %642, %v305
      %v644 = vpop.permute.xlu0 %643
      %646 = vset.pattern.permute.xlu0 1
      %647 = vperm.xlu0 %646, %v306
      %v648 = vpop.permute.xlu0 %647
      %650 = vset.pattern.permute.xlu0 1
      %651 = vperm.xlu0 %650, %v307
      %v652 = vpop.permute.xlu0 %651
      %654 = vset.pattern.permute.xlu0 1
      %655 = vperm.xlu0 %654, %v308
      %v656 = vpop.permute.xlu0 %655
      %658 = vset.pattern.permute.xlu0 1
      %659 = vperm.xlu0 %658, %v309
      %v660 = vpop.permute.xlu0 %659
      %662 = vset.pattern.permute.xlu0 1
      %663 = vperm.xlu0 %662, %v310
      %v664 = vpop.permute.xlu0 %663
      %666 = vset.pattern.permute.xlu0 1
      %667 = vperm.xlu0 %666, %v311
      %v668 = vpop.permute.xlu0 %667
      %670 = vset.pattern.permute.xlu0 1
      %671 = vperm.xlu0 %670, %v312
      %v672 = vpop.permute.xlu0 %671
      %674 = vset.pattern.permute.xlu0 1
      %675 = vperm.xlu0 %674, %v313
      %v676 = vpop.permute.xlu0 %675
      %v678 = vlaneseq
      %v679 = vshrl.u32 %v678, 7
      %v680 = vsub.s32 1, %v679
      %v681 = vrot.slane %v314, %v680
      %v682 = vmul.f32 %v552, %v681
      %v683 = vmul.f32 %v556, %v681
      %v684 = vmul.f32 %v560, %v681
      %v685 = vmul.f32 %v564, %v681
      %v686 = vmul.f32 %v568, %v681
      %v687 = vmul.f32 %v572, %v681
      %v688 = vmul.f32 %v576, %v681
      %v689 = vmul.f32 %v580, %v681
      %v690 = vmul.f32 %v584, %v681
      %v691 = vmul.f32 %v588, %v681
      %v692 = vmul.f32 %v592, %v681
      %v693 = vmul.f32 %v596, %v681
      %v694 = vmul.f32 %v600, %v681
      %v695 = vmul.f32 %v604, %v681
      %v696 = vmul.f32 %v608, %v681
      %v697 = vmul.f32 %v612, %v681
      %v698 = vmul.f32 %v616, %v681
      %v699 = vmul.f32 %v620, %v681
      %v700 = vmul.f32 %v624, %v681
      %v701 = vmul.f32 %v628, %v681
      %v702 = vmul.f32 %v632, %v681
      %v703 = vmul.f32 %v636, %v681
      %v704 = vmul.f32 %v640, %v681
      %v705 = vmul.f32 %v644, %v681
      %v706 = vmul.f32 %v648, %v681
      %v707 = vmul.f32 %v652, %v681
      %v708 = vmul.f32 %v656, %v681
      %v709 = vmul.f32 %v660, %v681
      %v710 = vmul.f32 %v664, %v681
      %v711 = vmul.f32 %v668, %v681
      %v712 = vmul.f32 %v672, %v681
      %v713 = vmul.f32 %v676, %v681
      %v714 = vadd.f32 %v518, %v682
      %v715 = vadd.f32 %v519, %v683
      %v716 = vadd.f32 %v520, %v684
      %v717 = vadd.f32 %v521, %v685
      %v718 = vadd.f32 %v522, %v686
      %v719 = vadd.f32 %v523, %v687
      %v720 = vadd.f32 %v524, %v688
      %v721 = vadd.f32 %v525, %v689
      %v722 = vadd.f32 %v526, %v690
      %v723 = vadd.f32 %v527, %v691
      %v724 = vadd.f32 %v528, %v692
      %v725 = vadd.f32 %v529, %v693
      %v726 = vadd.f32 %v530, %v694
      %v727 = vadd.f32 %v531, %v695
      %v728 = vadd.f32 %v532, %v696
      %v729 = vadd.f32 %v533, %v697
      %v730 = vadd.f32 %v534, %v698
      %v731 = vadd.f32 %v535, %v699
      %v732 = vadd.f32 %v536, %v700
      %v733 = vadd.f32 %v537, %v701
      %v734 = vadd.f32 %v538, %v702
      %v735 = vadd.f32 %v539, %v703
      %v736 = vadd.f32 %v540, %v704
      %v737 = vadd.f32 %v541, %v705
      %v738 = vadd.f32 %v542, %v706
      %v739 = vadd.f32 %v543, %v707
      %v740 = vadd.f32 %v544, %v708
      %v741 = vadd.f32 %v545, %v709
      %v742 = vadd.f32 %v546, %v710
      %v743 = vadd.f32 %v547, %v711
      %v744 = vadd.f32 %v548, %v712
      %v745 = vadd.f32 %v549, %v713
      %746 = vset.pattern.permute.xlu0 2
      %747 = vperm.xlu0 %746, %v282
      %v748 = vpop.permute.xlu0 %747
      %750 = vset.pattern.permute.xlu0 2
      %751 = vperm.xlu0 %750, %v283
      %v752 = vpop.permute.xlu0 %751
      %754 = vset.pattern.permute.xlu0 2
      %755 = vperm.xlu0 %754, %v284
      %v756 = vpop.permute.xlu0 %755
      %758 = vset.pattern.permute.xlu0 2
      %759 = vperm.xlu0 %758, %v285
      %v760 = vpop.permute.xlu0 %759
      %762 = vset.pattern.permute.xlu0 2
      %763 = vperm.xlu0 %762, %v286
      %v764 = vpop.permute.xlu0 %763
      %766 = vset.pattern.permute.xlu0 2
      %767 = vperm.xlu0 %766, %v287
      %v768 = vpop.permute.xlu0 %767
      %770 = vset.pattern.permute.xlu0 2
      %771 = vperm.xlu0 %770, %v288
      %v772 = vpop.permute.xlu0 %771
      %774 = vset.pattern.permute.xlu0 2
      %775 = vperm.xlu0 %774, %v289
      %v776 = vpop.permute.xlu0 %775
      %778 = vset.pattern.permute.xlu0 2
      %779 = vperm.xlu0 %778, %v290
      %v780 = vpop.permute.xlu0 %779
      %782 = vset.pattern.permute.xlu0 2
      %783 = vperm.xlu0 %782, %v291
      %v784 = vpop.permute.xlu0 %783
      %786 = vset.pattern.permute.xlu0 2
      %787 = vperm.xlu0 %786, %v292
      %v788 = vpop.permute.xlu0 %787
      %790 = vset.pattern.permute.xlu0 2
      %791 = vperm.xlu0 %790, %v293
      %v792 = vpop.permute.xlu0 %791
      %794 = vset.pattern.permute.xlu0 2
      %795 = vperm.xlu0 %794, %v294
      %v796 = vpop.permute.xlu0 %795
      %798 = vset.pattern.permute.xlu0 2
      %799 = vperm.xlu0 %798, %v295
      %v800 = vpop.permute.xlu0 %799
      %802 = vset.pattern.permute.xlu0 2
      %803 = vperm.xlu0 %802, %v296
      %v804 = vpop.permute.xlu0 %803
      %806 = vset.pattern.permute.xlu0 2
      %807 = vperm.xlu0 %806, %v297
      %v808 = vpop.permute.xlu0 %807
      %810 = vset.pattern.permute.xlu0 2
      %811 = vperm.xlu0 %810, %v298
      %v812 = vpop.permute.xlu0 %811
      %814 = vset.pattern.permute.xlu0 2
      %815 = vperm.xlu0 %814, %v299
      %v816 = vpop.permute.xlu0 %815
      %818 = vset.pattern.permute.xlu0 2
      %819 = vperm.xlu0 %818, %v300
      %v820 = vpop.permute.xlu0 %819
      %822 = vset.pattern.permute.xlu0 2
      %823 = vperm.xlu0 %822, %v301
      %v824 = vpop.permute.xlu0 %823
      %826 = vset.pattern.permute.xlu0 2
      %827 = vperm.xlu0 %826, %v302
      %v828 = vpop.permute.xlu0 %827
      %830 = vset.pattern.permute.xlu0 2
      %831 = vperm.xlu0 %830, %v303
      %v832 = vpop.permute.xlu0 %831
      %834 = vset.pattern.permute.xlu0 2
      %835 = vperm.xlu0 %834, %v304
      %v836 = vpop.permute.xlu0 %835
      %838 = vset.pattern.permute.xlu0 2
      %839 = vperm.xlu0 %838, %v305
      %v840 = vpop.permute.xlu0 %839
      %842 = vset.pattern.permute.xlu0 2
      %843 = vperm.xlu0 %842, %v306
      %v844 = vpop.permute.xlu0 %843
      %846 = vset.pattern.permute.xlu0 2
      %847 = vperm.xlu0 %846, %v307
      %v848 = vpop.permute.xlu0 %847
      %850 = vset.pattern.permute.xlu0 2
      %851 = vperm.xlu0 %850, %v308
      %v852 = vpop.permute.xlu0 %851
      %854 = vset.pattern.permute.xlu0 2
      %855 = vperm.xlu0 %854, %v309
      %v856 = vpop.permute.xlu0 %855
      %858 = vset.pattern.permute.xlu0 2
      %859 = vperm.xlu0 %858, %v310
      %v860 = vpop.permute.xlu0 %859
      %862 = vset.pattern.permute.xlu0 2
      %863 = vperm.xlu0 %862, %v311
      %v864 = vpop.permute.xlu0 %863
      %866 = vset.pattern.permute.xlu0 2
      %867 = vperm.xlu0 %866, %v312
      %v868 = vpop.permute.xlu0 %867
      %870 = vset.pattern.permute.xlu0 2
      %871 = vperm.xlu0 %870, %v313
      %v872 = vpop.permute.xlu0 %871
      %v874 = vlaneseq
      %v875 = vshrl.u32 %v874, 7
      %v876 = vsub.s32 2, %v875
      %v877 = vrot.slane %v314, %v876
      %v878 = vmul.f32 %v748, %v877
      %v879 = vmul.f32 %v752, %v877
      %v880 = vmul.f32 %v756, %v877
      %v881 = vmul.f32 %v760, %v877
      %v882 = vmul.f32 %v764, %v877
      %v883 = vmul.f32 %v768, %v877
      %v884 = vmul.f32 %v772, %v877
      %v885 = vmul.f32 %v776, %v877
      %v886 = vmul.f32 %v780, %v877
      %v887 = vmul.f32 %v784, %v877
      %v888 = vmul.f32 %v788, %v877
      %v889 = vmul.f32 %v792, %v877
      %v890 = vmul.f32 %v796, %v877
      %v891 = vmul.f32 %v800, %v877
      %v892 = vmul.f32 %v804, %v877
      %v893 = vmul.f32 %v808, %v877
      %v894 = vmul.f32 %v812, %v877
      %v895 = vmul.f32 %v816, %v877
      %v896 = vmul.f32 %v820, %v877
      %v897 = vmul.f32 %v824, %v877
      %v898 = vmul.f32 %v828, %v877
      %v899 = vmul.f32 %v832, %v877
      %v900 = vmul.f32 %v836, %v877
      %v901 = vmul.f32 %v840, %v877
      %v902 = vmul.f32 %v844, %v877
      %v903 = vmul.f32 %v848, %v877
      %v904 = vmul.f32 %v852, %v877
      %v905 = vmul.f32 %v856, %v877
      %v906 = vmul.f32 %v860, %v877
      %v907 = vmul.f32 %v864, %v877
      %v908 = vmul.f32 %v868, %v877
      %v909 = vmul.f32 %v872, %v877
      %v910 = vadd.f32 %v714, %v878
      %v911 = vadd.f32 %v715, %v879
      %v912 = vadd.f32 %v716, %v880
      %v913 = vadd.f32 %v717, %v881
      %v914 = vadd.f32 %v718, %v882
      %v915 = vadd.f32 %v719, %v883
      %v916 = vadd.f32 %v720, %v884
      %v917 = vadd.f32 %v721, %v885
      %v918 = vadd.f32 %v722, %v886
      %v919 = vadd.f32 %v723, %v887
      %v920 = vadd.f32 %v724, %v888
      %v921 = vadd.f32 %v725, %v889
      %v922 = vadd.f32 %v726, %v890
      %v923 = vadd.f32 %v727, %v891
      %v924 = vadd.f32 %v728, %v892
      %v925 = vadd.f32 %v729, %v893
      %v926 = vadd.f32 %v730, %v894
      %v927 = vadd.f32 %v731, %v895
      %v928 = vadd.f32 %v732, %v896
      %v929 = vadd.f32 %v733, %v897
      %v930 = vadd.f32 %v734, %v898
      %v931 = vadd.f32 %v735, %v899
      %v932 = vadd.f32 %v736, %v900
      %v933 = vadd.f32 %v737, %v901
      %v934 = vadd.f32 %v738, %v902
      %v935 = vadd.f32 %v739, %v903
      %v936 = vadd.f32 %v740, %v904
      %v937 = vadd.f32 %v741, %v905
      %v938 = vadd.f32 %v742, %v906
      %v939 = vadd.f32 %v743, %v907
      %v940 = vadd.f32 %v744, %v908
      %v941 = vadd.f32 %v745, %v909
      %942 = vset.pattern.permute.xlu0 3
      %943 = vperm.xlu0 %942, %v282
      %v944 = vpop.permute.xlu0 %943
      %946 = vset.pattern.permute.xlu0 3
      %947 = vperm.xlu0 %946, %v283
      %v948 = vpop.permute.xlu0 %947
      %950 = vset.pattern.permute.xlu0 3
      %951 = vperm.xlu0 %950, %v284
      %v952 = vpop.permute.xlu0 %951
      %954 = vset.pattern.permute.xlu0 3
      %955 = vperm.xlu0 %954, %v285
      %v956 = vpop.permute.xlu0 %955
      %958 = vset.pattern.permute.xlu0 3
      %959 = vperm.xlu0 %958, %v286
      %v960 = vpop.permute.xlu0 %959
      %962 = vset.pattern.permute.xlu0 3
      %963 = vperm.xlu0 %962, %v287
      %v964 = vpop.permute.xlu0 %963
      %966 = vset.pattern.permute.xlu0 3
      %967 = vperm.xlu0 %966, %v288
      %v968 = vpop.permute.xlu0 %967
      %970 = vset.pattern.permute.xlu0 3
      %971 = vperm.xlu0 %970, %v289
      %v972 = vpop.permute.xlu0 %971
      %974 = vset.pattern.permute.xlu0 3
      %975 = vperm.xlu0 %974, %v290
      %v976 = vpop.permute.xlu0 %975
      %978 = vset.pattern.permute.xlu0 3
      %979 = vperm.xlu0 %978, %v291
      %v980 = vpop.permute.xlu0 %979
      %982 = vset.pattern.permute.xlu0 3
      %983 = vperm.xlu0 %982, %v292
      %v984 = vpop.permute.xlu0 %983
      %986 = vset.pattern.permute.xlu0 3
      %987 = vperm.xlu0 %986, %v293
      %v988 = vpop.permute.xlu0 %987
      %990 = vset.pattern.permute.xlu0 3
      %991 = vperm.xlu0 %990, %v294
      %v992 = vpop.permute.xlu0 %991
      %994 = vset.pattern.permute.xlu0 3
      %995 = vperm.xlu0 %994, %v295
      %v996 = vpop.permute.xlu0 %995
      %998 = vset.pattern.permute.xlu0 3
      %999 = vperm.xlu0 %998, %v296
      %v1000 = vpop.permute.xlu0 %999
      %1002 = vset.pattern.permute.xlu0 3
      %1003 = vperm.xlu0 %1002, %v297
      %v1004 = vpop.permute.xlu0 %1003
      %1006 = vset.pattern.permute.xlu0 3
      %1007 = vperm.xlu0 %1006, %v298
      %v1008 = vpop.permute.xlu0 %1007
      %1010 = vset.pattern.permute.xlu0 3
      %1011 = vperm.xlu0 %1010, %v299
      %v1012 = vpop.permute.xlu0 %1011
      %1014 = vset.pattern.permute.xlu0 3
      %1015 = vperm.xlu0 %1014, %v300
      %v1016 = vpop.permute.xlu0 %1015
      %1018 = vset.pattern.permute.xlu0 3
      %1019 = vperm.xlu0 %1018, %v301
      %v1020 = vpop.permute.xlu0 %1019
      %1022 = vset.pattern.permute.xlu0 3
      %1023 = vperm.xlu0 %1022, %v302
      %v1024 = vpop.permute.xlu0 %1023
      %1026 = vset.pattern.permute.xlu0 3
      %1027 = vperm.xlu0 %1026, %v303
      %v1028 = vpop.permute.xlu0 %1027
      %1030 = vset.pattern.permute.xlu0 3
      %1031 = vperm.xlu0 %1030, %v304
      %v1032 = vpop.permute.xlu0 %1031
      %1034 = vset.pattern.permute.xlu0 3
      %1035 = vperm.xlu0 %1034, %v305
      %v1036 = vpop.permute.xlu0 %1035
      %1038 = vset.pattern.permute.xlu0 3
      %1039 = vperm.xlu0 %1038, %v306
      %v1040 = vpop.permute.xlu0 %1039
      %1042 = vset.pattern.permute.xlu0 3
      %1043 = vperm.xlu0 %1042, %v307
      %v1044 = vpop.permute.xlu0 %1043
      %1046 = vset.pattern.permute.xlu0 3
      %1047 = vperm.xlu0 %1046, %v308
      %v1048 = vpop.permute.xlu0 %1047
      %1050 = vset.pattern.permute.xlu0 3
      %1051 = vperm.xlu0 %1050, %v309
      %v1052 = vpop.permute.xlu0 %1051
      %1054 = vset.pattern.permute.xlu0 3
      %1055 = vperm.xlu0 %1054, %v310
      %v1056 = vpop.permute.xlu0 %1055
      %1058 = vset.pattern.permute.xlu0 3
      %1059 = vperm.xlu0 %1058, %v311
      %v1060 = vpop.permute.xlu0 %1059
      %1062 = vset.pattern.permute.xlu0 3
      %1063 = vperm.xlu0 %1062, %v312
      %v1064 = vpop.permute.xlu0 %1063
      %1066 = vset.pattern.permute.xlu0 3
      %1067 = vperm.xlu0 %1066, %v313
      %v1068 = vpop.permute.xlu0 %1067
      %v1070 = vlaneseq
      %v1071 = vshrl.u32 %v1070, 7
      %v1072 = vsub.s32 3, %v1071
      %v1073 = vrot.slane %v314, %v1072
      %v1074 = vmul.f32 %v944, %v1073
      %v1075 = vmul.f32 %v948, %v1073
      %v1076 = vmul.f32 %v952, %v1073
      %v1077 = vmul.f32 %v956, %v1073
      %v1078 = vmul.f32 %v960, %v1073
      %v1079 = vmul.f32 %v964, %v1073
      %v1080 = vmul.f32 %v968, %v1073
      %v1081 = vmul.f32 %v972, %v1073
      %v1082 = vmul.f32 %v976, %v1073
      %v1083 = vmul.f32 %v980, %v1073
      %v1084 = vmul.f32 %v984, %v1073
      %v1085 = vmul.f32 %v988, %v1073
      %v1086 = vmul.f32 %v992, %v1073
      %v1087 = vmul.f32 %v996, %v1073
      %v1088 = vmul.f32 %v1000, %v1073
      %v1089 = vmul.f32 %v1004, %v1073
      %v1090 = vmul.f32 %v1008, %v1073
      %v1091 = vmul.f32 %v1012, %v1073
      %v1092 = vmul.f32 %v1016, %v1073
      %v1093 = vmul.f32 %v1020, %v1073
      %v1094 = vmul.f32 %v1024, %v1073
      %v1095 = vmul.f32 %v1028, %v1073
      %v1096 = vmul.f32 %v1032, %v1073
      %v1097 = vmul.f32 %v1036, %v1073
      %v1098 = vmul.f32 %v1040, %v1073
      %v1099 = vmul.f32 %v1044, %v1073
      %v1100 = vmul.f32 %v1048, %v1073
      %v1101 = vmul.f32 %v1052, %v1073
      %v1102 = vmul.f32 %v1056, %v1073
      %v1103 = vmul.f32 %v1060, %v1073
      %v1104 = vmul.f32 %v1064, %v1073
      %v1105 = vmul.f32 %v1068, %v1073
      %v1106 = vadd.f32 %v910, %v1074
      %v1107 = vadd.f32 %v911, %v1075
      %v1108 = vadd.f32 %v912, %v1076
      %v1109 = vadd.f32 %v913, %v1077
      %v1110 = vadd.f32 %v914, %v1078
      %v1111 = vadd.f32 %v915, %v1079
      %v1112 = vadd.f32 %v916, %v1080
      %v1113 = vadd.f32 %v917, %v1081
      %v1114 = vadd.f32 %v918, %v1082
      %v1115 = vadd.f32 %v919, %v1083
      %v1116 = vadd.f32 %v920, %v1084
      %v1117 = vadd.f32 %v921, %v1085
      %v1118 = vadd.f32 %v922, %v1086
      %v1119 = vadd.f32 %v923, %v1087
      %v1120 = vadd.f32 %v924, %v1088
      %v1121 = vadd.f32 %v925, %v1089
      %v1122 = vadd.f32 %v926, %v1090
      %v1123 = vadd.f32 %v927, %v1091
      %v1124 = vadd.f32 %v928, %v1092
      %v1125 = vadd.f32 %v929, %v1093
      %v1126 = vadd.f32 %v930, %v1094
      %v1127 = vadd.f32 %v931, %v1095
      %v1128 = vadd.f32 %v932, %v1096
      %v1129 = vadd.f32 %v933, %v1097
      %v1130 = vadd.f32 %v934, %v1098
      %v1131 = vadd.f32 %v935, %v1099
      %v1132 = vadd.f32 %v936, %v1100
      %v1133 = vadd.f32 %v937, %v1101
      %v1134 = vadd.f32 %v938, %v1102
      %v1135 = vadd.f32 %v939, %v1103
      %v1136 = vadd.f32 %v940, %v1104
      %v1137 = vadd.f32 %v941, %v1105
      %v1138 = vmax.f32 %v1106, 0.0
      %v1139 = vmax.f32 %v1107, 0.0
      %v1140 = vmax.f32 %v1108, 0.0
      %v1141 = vmax.f32 %v1109, 0.0
      %v1142 = vmax.f32 %v1110, 0.0
      %v1143 = vmax.f32 %v1111, 0.0
      %v1144 = vmax.f32 %v1112, 0.0
      %v1145 = vmax.f32 %v1113, 0.0
      %v1146 = vmax.f32 %v1114, 0.0
      %v1147 = vmax.f32 %v1115, 0.0
      %v1148 = vmax.f32 %v1116, 0.0
      %v1149 = vmax.f32 %v1117, 0.0
      %v1150 = vmax.f32 %v1118, 0.0
      %v1151 = vmax.f32 %v1119, 0.0
      %v1152 = vmax.f32 %v1120, 0.0
      %v1153 = vmax.f32 %v1121, 0.0
      %v1154 = vmax.f32 %v1122, 0.0
      %v1155 = vmax.f32 %v1123, 0.0
      %v1156 = vmax.f32 %v1124, 0.0
      %v1157 = vmax.f32 %v1125, 0.0
      %v1158 = vmax.f32 %v1126, 0.0
      %v1159 = vmax.f32 %v1127, 0.0
      %v1160 = vmax.f32 %v1128, 0.0
      %v1161 = vmax.f32 %v1129, 0.0
      %v1162 = vmax.f32 %v1130, 0.0
      %v1163 = vmax.f32 %v1131, 0.0
      %v1164 = vmax.f32 %v1132, 0.0
      %v1165 = vmax.f32 %v1133, 0.0
      %v1166 = vmax.f32 %v1134, 0.0
      %v1167 = vmax.f32 %v1135, 0.0
      %v1168 = vmax.f32 %v1136, 0.0
      %v1169 = vmax.f32 %v1137, 0.0
      %v1170 = vld [vmem:[%s3] sm:$0xff]
      %v1171 = vld [vmem:[%s4] sm:$0x1]
      %v1173 = vlaneseq
      %v1174 = vshrl.u32 %v1173, 7
      %v1175 = vsub.s32 0, %v1174
      %v1176 = vrot.slane %v1171, %v1175
      %vm1178 = vcmask 64512
      %v1180 = vsel %vm1178, %v1138, 0
      %v1183 = vsel %vm1178, %v1139, 0
      %v1186 = vsel %vm1178, %v1140, 0
      %v1189 = vsel %vm1178, %v1141, 0
      %v1192 = vsel %vm1178, %v1142, 0
      %v1195 = vsel %vm1178, %v1143, 0
      %v1198 = vsel %vm1178, %v1144, 0
      %v1201 = vsel %vm1178, %v1145, 0
      %v1204 = vsel %vm1178, %v1146, 0
      %v1207 = vsel %vm1178, %v1147, 0
      %v1210 = vsel %vm1178, %v1148, 0
      %v1213 = vsel %vm1178, %v1149, 0
      %v1216 = vsel %vm1178, %v1150, 0
      %v1219 = vsel %vm1178, %v1151, 0
      %v1222 = vsel %vm1178, %v1152, 0
      %v1225 = vsel %vm1178, %v1153, 0
      %v1228 = vsel %vm1178, %v1154, 0
      %v1231 = vsel %vm1178, %v1155, 0
      %v1234 = vsel %vm1178, %v1156, 0
      %v1237 = vsel %vm1178, %v1157, 0
      %v1240 = vsel %vm1178, %v1158, 0
      %v1243 = vsel %vm1178, %v1159, 0
      %v1246 = vsel %vm1178, %v1160, 0
      %v1249 = vsel %vm1178, %v1161, 0
      %v1252 = vsel %vm1178, %v1162, 0
      %v1255 = vsel %vm1178, %v1163, 0
      %v1258 = vsel %vm1178, %v1164, 0
      %v1261 = vsel %vm1178, %v1165, 0
      %v1264 = vsel %vm1178, %v1166, 0
      %v1267 = vsel %vm1178, %v1167, 0
      %v1270 = vsel %vm1178, %v1168, 0
      %v1273 = vsel %vm1178, %v1169, 0
      %1275 = vmatprep.subr.mxu0 0.0
      %1276 = vmatpush1.msra.mxu0 %v1170
      %1277 = vmatprep.subr.mxu0 0.0
      %1278 = vmatpush1.msra.mxu0 0.0
      %1279 = vmatprep.subr.mxu0 0.0
      %1280 = vmatpush1.msra.mxu0 0.0
      %1281 = vmatprep.subr.mxu0 0.0
      %1282 = vmatpush1.msra.mxu0 0.0
      %1283 = vmatprep.subr.mxu0 0.0
      %1284 = vmatpush1.msra.mxu0 0.0
      %1285 = vmatprep.subr.mxu0 0.0
      %1286 = vmatpush1.msra.mxu0 0.0
      %1287 = vmatprep.subr.mxu0 0.0
      %1288 = vmatpush1.msra.mxu0 0.0
      %1289 = vmatprep.subr.mxu0 0.0
      %1290 = vmatpush1.msra.mxu0 0.0
      %1291 = vmatprep.subr.mxu0 0.0
      %1292 = vmatpush1.msra.mxu0 0.0
      %1293 = vmatprep.subr.mxu0 0.0
      %1294 = vmatpush1.msra.mxu0 0.0
      %1295 = vmatprep.subr.mxu0 0.0
      %1296 = vmatpush1.msra.mxu0 0.0
      %1297 = vmatprep.subr.mxu0 0.0
      %1298 = vmatpush1.msra.mxu0 0.0
      %1299 = vmatprep.subr.mxu0 0.0
      %1300 = vmatpush1.msra.mxu0 0.0
      %1301 = vmatprep.subr.mxu0 0.0
      %1302 = vmatpush1.msra.mxu0 0.0
      %1303 = vmatprep.subr.mxu0 0.0
      %1304 = vmatpush1.msra.mxu0 0.0
      %1305 = vmatprep.subr.mxu0 0.0
      %1306 = vmatpush1.msra.mxu0 0.0
      %1307 = vmatprep.subr.mxu0 0.0
      %1308 = vmatpush1.msra.mxu0 0.0
      %1309 = vmatprep.subr.mxu0 0.0
      %1310 = vmatpush1.msra.mxu0 0.0
      %1311 = vmatprep.subr.mxu0 0.0
      %1312 = vmatpush1.msra.mxu0 0.0
      %1313 = vmatprep.subr.mxu0 0.0
      %1314 = vmatpush1.msra.mxu0 0.0
      %1315 = vmatprep.subr.mxu0 0.0
      %1316 = vmatpush1.msra.mxu0 0.0
      %1317 = vmatprep.subr.mxu0 0.0
      %1318 = vmatpush1.msra.mxu0 0.0
      %1319 = vmatprep.subr.mxu0 0.0
      %1320 = vmatpush1.msra.mxu0 0.0
      %1321 = vmatprep.subr.mxu0 0.0
      %1322 = vmatpush1.msra.mxu0 0.0
      %1323 = vmatprep.subr.mxu0 0.0
      %1324 = vmatpush1.msra.mxu0 0.0
      %1325 = vmatprep.subr.mxu0 0.0
      %1326 = vmatpush1.msra.mxu0 0.0
      %1327 = vmatprep.subr.mxu0 0.0
      %1328 = vmatpush1.msra.mxu0 0.0
      %1329 = vmatprep.subr.mxu0 0.0
      %1330 = vmatpush1.msra.mxu0 0.0
      %1331 = vmatprep.subr.mxu0 0.0
      %1332 = vmatpush1.msra.mxu0 0.0
      %1333 = vmatprep.subr.mxu0 0.0
      %1334 = vmatpush1.msra.mxu0 0.0
      %1335 = vmatprep.subr.mxu0 0.0
      %1336 = vmatpush1.msra.mxu0 0.0
      %1337 = vmatprep.subr.mxu0 0.0
      %1338 = vmatpush1.msra.mxu0 0.0
      %1339 = vmatprep.mubr.f32.mxu0 0.0
      %1340 = vmatmul.mubr.f32.gmra.mrb[0].mxu0 %v1180
      %v1341 = vpop.f32.mrb[0].mxu0
      %v1342 = vadd.f32 %v1176, %v1341
      %v1343 = vpop.f32.mrb[0].mxu0
      %1344 = vmatprep.mubr.f32.mxu0 0.0
      %1345 = vmatmul.mubr.f32.gmra.mrb[0].mxu0 %v1183
      %v1346 = vpop.f32.mrb[0].mxu0
      %v1347 = vadd.f32 %v1176, %v1346
      %v1348 = vpop.f32.mrb[0].mxu0
      %1349 = vmatprep.mubr.f32.mxu0 0.0
      %1350 = vmatmul.mubr.f32.gmra.mrb[0].mxu0 %v1186
      %v1351 = vpop.f32.mrb[0].mxu0
      %v1352 = vadd.f32 %v1176, %v1351
      %v1353 = vpop.f32.mrb[0].mxu0
      %1354 = vmatprep.mubr.f32.mxu0 0.0
      %1355 = vmatmul.mubr.f32.gmra.mrb[0].mxu0 %v1189
      %v1356 = vpop.f32.mrb[0].mxu0
      %v1357 = vadd.f32 %v1176, %v1356
      %v1358 = vpop.f32.mrb[0].mxu0
      %1359 = vmatprep.mubr.f32.mxu0 0.0
      %1360 = vmatmul.mubr.f32.gmra.mrb[0].mxu0 %v1192
      %v1361 = vpop.f32.mrb[0].mxu0
      %v1362 = vadd.f32 %v1176, %v1361
      %v1363 = vpop.f32.mrb[0].mxu0
      %1364 = vmatprep.mubr.f32.mxu0 0.0
      %1365 = vmatmul.mubr.f32.gmra.mrb[0].mxu0 %v1195
      %v1366 = vpop.f32.mrb[0].mxu0
      %v1367 = vadd.f32 %v1176, %v1366
      %v1368 = vpop.f32.mrb[0].mxu0
      %1369 = vmatprep.mubr.f32.mxu0 0.0
      %1370 = vmatmul.mubr.f32.gmra.mrb[0].mxu0 %v1198
      %v1371 = vpop.f32.mrb[0].mxu0
      %v1372 = vadd.f32 %v1176, %v1371
      %v1373 = vpop.f32.mrb[0].mxu0
      %1374 = vmatprep.mubr.f32.mxu0 0.0
      %1375 = vmatmul.mubr.f32.gmra.mrb[0].mxu0 %v1201
      %v1376 = vpop.f32.mrb[0].mxu0
      %v1377 = vadd.f32 %v1176, %v1376
      %v1378 = vpop.f32.mrb[0].mxu0
      %1379 = vmatprep.mubr.f32.mxu0 0.0
      %1380 = vmatmul.mubr.f32.gmra.mrb[0].mxu0 %v1204
      %v1381 = vpop.f32.mrb[0].mxu0
      %v1382 = vadd.f32 %v1176, %v1381
      %v1383 = vpop.f32.mrb[0].mxu0
      %1384 = vmatprep.mubr.f32.mxu0 0.0
      %1385 = vmatmul.mubr.f32.gmra.mrb[0].mxu0 %v1207
      %v1386 = vpop.f32.mrb[0].mxu0
      %v1387 = vadd.f32 %v1176, %v1386
      %v1388 = vpop.f32.mrb[0].mxu0
      %1389 = vmatprep.mubr.f32.mxu0 0.0
      %1390 = vmatmul.mubr.f32.gmra.mrb[0].mxu0 %v1210
      %v1391 = vpop.f32.mrb[0].mxu0
      %v1392 = vadd.f32 %v1176, %v1391
      %v1393 = vpop.f32.mrb[0].mxu0
      %1394 = vmatprep.mubr.f32.mxu0 0.0
      %1395 = vmatmul.mubr.f32.gmra.mrb[0].mxu0 %v1213
      %v1396 = vpop.f32.mrb[0].mxu0
      %v1397 = vadd.f32 %v1176, %v1396
      %v1398 = vpop.f32.mrb[0].mxu0
      %1399 = vmatprep.mubr.f32.mxu0 0.0
      %1400 = vmatmul.mubr.f32.gmra.mrb[0].mxu0 %v1216
      %v1401 = vpop.f32.mrb[0].mxu0
      %v1402 = vadd.f32 %v1176, %v1401
      %v1403 = vpop.f32.mrb[0].mxu0
      %1404 = vmatprep.mubr.f32.mxu0 0.0
      %1405 = vmatmul.mubr.f32.gmra.mrb[0].mxu0 %v1219
      %v1406 = vpop.f32.mrb[0].mxu0
      %v1407 = vadd.f32 %v1176, %v1406
      %v1408 = vpop.f32.mrb[0].mxu0
      %1409 = vmatprep.mubr.f32.mxu0 0.0
      %1410 = vmatmul.mubr.f32.gmra.mrb[0].mxu0 %v1222
      %v1411 = vpop.f32.mrb[0].mxu0
      %v1412 = vadd.f32 %v1176, %v1411
      %v1413 = vpop.f32.mrb[0].mxu0
      %1414 = vmatprep.mubr.f32.mxu0 0.0
      %1415 = vmatmul.mubr.f32.gmra.mrb[0].mxu0 %v1225
      %v1416 = vpop.f32.mrb[0].mxu0
      %v1417 = vadd.f32 %v1176, %v1416
      %v1418 = vpop.f32.mrb[0].mxu0
      %1419 = vmatprep.mubr.f32.mxu0 0.0
      %1420 = vmatmul.mubr.f32.gmra.mrb[0].mxu0 %v1228
      %v1421 = vpop.f32.mrb[0].mxu0
      %v1422 = vadd.f32 %v1176, %v1421
      %v1423 = vpop.f32.mrb[0].mxu0
      %1424 = vmatprep.mubr.f32.mxu0 0.0
      %1425 = vmatmul.mubr.f32.gmra.mrb[0].mxu0 %v1231
      %v1426 = vpop.f32.mrb[0].mxu0
      %v1427 = vadd.f32 %v1176, %v1426
      %v1428 = vpop.f32.mrb[0].mxu0
      %1429 = vmatprep.mubr.f32.mxu0 0.0
      %1430 = vmatmul.mubr.f32.gmra.mrb[0].mxu0 %v1234
      %v1431 = vpop.f32.mrb[0].mxu0
      %v1432 = vadd.f32 %v1176, %v1431
      %v1433 = vpop.f32.mrb[0].mxu0
      %1434 = vmatprep.mubr.f32.mxu0 0.0
      %1435 = vmatmul.mubr.f32.gmra.mrb[0].mxu0 %v1237
      %v1436 = vpop.f32.mrb[0].mxu0
      %v1437 = vadd.f32 %v1176, %v1436
      %v1438 = vpop.f32.mrb[0].mxu0
      %1439 = vmatprep.mubr.f32.mxu0 0.0
      %1440 = vmatmul.mubr.f32.gmra.mrb[0].mxu0 %v1240
      %v1441 = vpop.f32.mrb[0].mxu0
      %v1442 = vadd.f32 %v1176, %v1441
      %v1443 = vpop.f32.mrb[0].mxu0
      %1444 = vmatprep.mubr.f32.mxu0 0.0
      %1445 = vmatmul.mubr.f32.gmra.mrb[0].mxu0 %v1243
      %v1446 = vpop.f32.mrb[0].mxu0
      %v1447 = vadd.f32 %v1176, %v1446
      %v1448 = vpop.f32.mrb[0].mxu0
      %1449 = vmatprep.mubr.f32.mxu0 0.0
      %1450 = vmatmul.mubr.f32.gmra.mrb[0].mxu0 %v1246
      %v1451 = vpop.f32.mrb[0].mxu0
      %v1452 = vadd.f32 %v1176, %v1451
      %v1453 = vpop.f32.mrb[0].mxu0
      %1454 = vmatprep.mubr.f32.mxu0 0.0
      %1455 = vmatmul.mubr.f32.gmra.mrb[0].mxu0 %v1249
      %v1456 = vpop.f32.mrb[0].mxu0
      %v1457 = vadd.f32 %v1176, %v1456
      %v1458 = vpop.f32.mrb[0].mxu0
      %1459 = vmatprep.mubr.f32.mxu0 0.0
      %1460 = vmatmul.mubr.f32.gmra.mrb[0].mxu0 %v1252
      %v1461 = vpop.f32.mrb[0].mxu0
      %v1462 = vadd.f32 %v1176, %v1461
      %v1463 = vpop.f32.mrb[0].mxu0
      %1464 = vmatprep.mubr.f32.mxu0 0.0
      %1465 = vmatmul.mubr.f32.gmra.mrb[0].mxu0 %v1255
      %v1466 = vpop.f32.mrb[0].mxu0
      %v1467 = vadd.f32 %v1176, %v1466
      %v1468 = vpop.f32.mrb[0].mxu0
      %1469 = vmatprep.mubr.f32.mxu0 0.0
      %1470 = vmatmul.mubr.f32.gmra.mrb[0].mxu0 %v1258
      %v1471 = vpop.f32.mrb[0].mxu0
      %v1472 = vadd.f32 %v1176, %v1471
      %v1473 = vpop.f32.mrb[0].mxu0
      %1474 = vmatprep.mubr.f32.mxu0 0.0
      %1475 = vmatmul.mubr.f32.gmra.mrb[0].mxu0 %v1261
      %v1476 = vpop.f32.mrb[0].mxu0
      %v1477 = vadd.f32 %v1176, %v1476
      %v1478 = vpop.f32.mrb[0].mxu0
      %1479 = vmatprep.mubr.f32.mxu0 0.0
      %1480 = vmatmul.mubr.f32.gmra.mrb[0].mxu0 %v1264
      %v1481 = vpop.f32.mrb[0].mxu0
      %v1482 = vadd.f32 %v1176, %v1481
      %v1483 = vpop.f32.mrb[0].mxu0
      %1484 = vmatprep.mubr.f32.mxu0 0.0
      %1485 = vmatmul.mubr.f32.gmra.mrb[0].mxu0 %v1267
      %v1486 = vpop.f32.mrb[0].mxu0
      %v1487 = vadd.f32 %v1176, %v1486
      %v1488 = vpop.f32.mrb[0].mxu0
      %1489 = vmatprep.mubr.f32.mxu0 0.0
      %1490 = vmatmul.mubr.f32.gmra.mrb[0].mxu0 %v1270
      %v1491 = vpop.f32.mrb[0].mxu0
      %v1492 = vadd.f32 %v1176, %v1491
      %v1493 = vpop.f32.mrb[0].mxu0
      %1494 = vmatprep.mubr.f32.mxu0 0.0
      %1495 = vmatmul.mubr.f32.gmra.mrb[0].mxu0 %v1273
      %v1496 = vpop.f32.mrb[0].mxu0
      %v1497 = vadd.f32 %v1176, %v1496
      %v1498 = vpop.f32.mrb[0].mxu0
      %1499 = vdwg.mxu0
      %v1500 = vmax.f32 %v1342, 0.0
      %v1501 = vmax.f32 %v1347, 0.0
      %v1502 = vmax.f32 %v1352, 0.0
      %v1503 = vmax.f32 %v1357, 0.0
      %v1504 = vmax.f32 %v1362, 0.0
      %v1505 = vmax.f32 %v1367, 0.0
      %v1506 = vmax.f32 %v1372, 0.0
      %v1507 = vmax.f32 %v1377, 0.0
      %v1508 = vmax.f32 %v1382, 0.0
      %v1509 = vmax.f32 %v1387, 0.0
      %v1510 = vmax.f32 %v1392, 0.0
      %v1511 = vmax.f32 %v1397, 0.0
      %v1512 = vmax.f32 %v1402, 0.0
      %v1513 = vmax.f32 %v1407, 0.0
      %v1514 = vmax.f32 %v1412, 0.0
      %v1515 = vmax.f32 %v1417, 0.0
      %v1516 = vmax.f32 %v1422, 0.0
      %v1517 = vmax.f32 %v1427, 0.0
      %v1518 = vmax.f32 %v1432, 0.0
      %v1519 = vmax.f32 %v1437, 0.0
      %v1520 = vmax.f32 %v1442, 0.0
      %v1521 = vmax.f32 %v1447, 0.0
      %v1522 = vmax.f32 %v1452, 0.0
      %v1523 = vmax.f32 %v1457, 0.0
      %v1524 = vmax.f32 %v1462, 0.0
      %v1525 = vmax.f32 %v1467, 0.0
      %v1526 = vmax.f32 %v1472, 0.0
      %v1527 = vmax.f32 %v1477, 0.0
      %v1528 = vmax.f32 %v1482, 0.0
      %v1529 = vmax.f32 %v1487, 0.0
      %v1530 = vmax.f32 %v1492, 0.0
      %v1531 = vmax.f32 %v1497, 0.0
      %v1532 = vld [vmem:[%s5] sm:$0x1f]
      %v1533 = vld [vmem:[%s6] sm:$0x1]
      %1535 = vset.pattern.permute.xlu0 0
      %1536 = vperm.xlu0 %1535, %v1500
      %v1537 = vpop.permute.xlu0 %1536
      %1540 = vset.pattern.permute.xlu0 0
      %1541 = vperm.xlu0 %1540, %v1501
      %v1542 = vpop.permute.xlu0 %1541
      %1545 = vset.pattern.permute.xlu0 0
      %1546 = vperm.xlu0 %1545, %v1502
      %v1547 = vpop.permute.xlu0 %1546
      %1550 = vset.pattern.permute.xlu0 0
      %1551 = vperm.xlu0 %1550, %v1503
      %v1552 = vpop.permute.xlu0 %1551
      %1555 = vset.pattern.permute.xlu0 0
      %1556 = vperm.xlu0 %1555, %v1504
      %v1557 = vpop.permute.xlu0 %1556
      %1560 = vset.pattern.permute.xlu0 0
      %1561 = vperm.xlu0 %1560, %v1505
      %v1562 = vpop.permute.xlu0 %1561
      %1565 = vset.pattern.permute.xlu0 0
      %1566 = vperm.xlu0 %1565, %v1506
      %v1567 = vpop.permute.xlu0 %1566
      %1570 = vset.pattern.permute.xlu0 0
      %1571 = vperm.xlu0 %1570, %v1507
      %v1572 = vpop.permute.xlu0 %1571
      %1575 = vset.pattern.permute.xlu0 0
      %1576 = vperm.xlu0 %1575, %v1508
      %v1577 = vpop.permute.xlu0 %1576
      %1580 = vset.pattern.permute.xlu0 0
      %1581 = vperm.xlu0 %1580, %v1509
      %v1582 = vpop.permute.xlu0 %1581
      %1585 = vset.pattern.permute.xlu0 0
      %1586 = vperm.xlu0 %1585, %v1510
      %v1587 = vpop.permute.xlu0 %1586
      %1590 = vset.pattern.permute.xlu0 0
      %1591 = vperm.xlu0 %1590, %v1511
      %v1592 = vpop.permute.xlu0 %1591
      %1595 = vset.pattern.permute.xlu0 0
      %1596 = vperm.xlu0 %1595, %v1512
      %v1597 = vpop.permute.xlu0 %1596
      %1600 = vset.pattern.permute.xlu0 0
      %1601 = vperm.xlu0 %1600, %v1513
      %v1602 = vpop.permute.xlu0 %1601
      %1605 = vset.pattern.permute.xlu0 0
      %1606 = vperm.xlu0 %1605, %v1514
      %v1607 = vpop.permute.xlu0 %1606
      %1610 = vset.pattern.permute.xlu0 0
      %1611 = vperm.xlu0 %1610, %v1515
      %v1612 = vpop.permute.xlu0 %1611
      %1615 = vset.pattern.permute.xlu0 0
      %1616 = vperm.xlu0 %1615, %v1516
      %v1617 = vpop.permute.xlu0 %1616
      %1620 = vset.pattern.permute.xlu0 0
      %1621 = vperm.xlu0 %1620, %v1517
      %v1622 = vpop.permute.xlu0 %1621
      %1625 = vset.pattern.permute.xlu0 0
      %1626 = vperm.xlu0 %1625, %v1518
      %v1627 = vpop.permute.xlu0 %1626
      %1630 = vset.pattern.permute.xlu0 0
      %1631 = vperm.xlu0 %1630, %v1519
      %v1632 = vpop.permute.xlu0 %1631
      %1635 = vset.pattern.permute.xlu0 0
      %1636 = vperm.xlu0 %1635, %v1520
      %v1637 = vpop.permute.xlu0 %1636
      %1640 = vset.pattern.permute.xlu0 0
      %1641 = vperm.xlu0 %1640, %v1521
      %v1642 = vpop.permute.xlu0 %1641
      %1645 = vset.pattern.permute.xlu0 0
      %1646 = vperm.xlu0 %1645, %v1522
      %v1647 = vpop.permute.xlu0 %1646
      %1650 = vset.pattern.permute.xlu0 0
      %1651 = vperm.xlu0 %1650, %v1523
      %v1652 = vpop.permute.xlu0 %1651
      %1655 = vset.pattern.permute.xlu0 0
      %1656 = vperm.xlu0 %1655, %v1524
      %v1657 = vpop.permute.xlu0 %1656
      %1660 = vset.pattern.permute.xlu0 0
      %1661 = vperm.xlu0 %1660, %v1525
      %v1662 = vpop.permute.xlu0 %1661
      %1665 = vset.pattern.permute.xlu0 0
      %1666 = vperm.xlu0 %1665, %v1526
      %v1667 = vpop.permute.xlu0 %1666
      %1670 = vset.pattern.permute.xlu0 0
      %1671 = vperm.xlu0 %1670, %v1527
      %v1672 = vpop.permute.xlu0 %1671
      %1675 = vset.pattern.permute.xlu0 0
      %1676 = vperm.xlu0 %1675, %v1528
      %v1677 = vpop.permute.xlu0 %1676
      %1680 = vset.pattern.permute.xlu0 0
      %1681 = vperm.xlu0 %1680, %v1529
      %v1682 = vpop.permute.xlu0 %1681
      %1685 = vset.pattern.permute.xlu0 0
      %1686 = vperm.xlu0 %1685, %v1530
      %v1687 = vpop.permute.xlu0 %1686
      %1690 = vset.pattern.permute.xlu0 0
      %1691 = vperm.xlu0 %1690, %v1531
      %v1692 = vpop.permute.xlu0 %1691
      %v1694 = vlaneseq
      %v1695 = vshrl.u32 %v1694, 7
      %v1696 = vsub.s32 0, %v1695
      %v1697 = vrot.slane %v1532, %v1696
      %v1698 = vmul.f32 %v1537, %v1697
      %v1699 = vmul.f32 %v1542, %v1697
      %v1700 = vmul.f32 %v1547, %v1697
      %v1701 = vmul.f32 %v1552, %v1697
      %v1702 = vmul.f32 %v1557, %v1697
      %v1703 = vmul.f32 %v1562, %v1697
      %v1704 = vmul.f32 %v1567, %v1697
      %v1705 = vmul.f32 %v1572, %v1697
      %v1706 = vmul.f32 %v1577, %v1697
      %v1707 = vmul.f32 %v1582, %v1697
      %v1708 = vmul.f32 %v1587, %v1697
      %v1709 = vmul.f32 %v1592, %v1697
      %v1710 = vmul.f32 %v1597, %v1697
      %v1711 = vmul.f32 %v1602, %v1697
      %v1712 = vmul.f32 %v1607, %v1697
      %v1713 = vmul.f32 %v1612, %v1697
      %v1714 = vmul.f32 %v1617, %v1697
      %v1715 = vmul.f32 %v1622, %v1697
      %v1716 = vmul.f32 %v1627, %v1697
      %v1717 = vmul.f32 %v1632, %v1697
      %v1718 = vmul.f32 %v1637, %v1697
      %v1719 = vmul.f32 %v1642, %v1697
      %v1720 = vmul.f32 %v1647, %v1697
      %v1721 = vmul.f32 %v1652, %v1697
      %v1722 = vmul.f32 %v1657, %v1697
      %v1723 = vmul.f32 %v1662, %v1697
      %v1724 = vmul.f32 %v1667, %v1697
      %v1725 = vmul.f32 %v1672, %v1697
      %v1726 = vmul.f32 %v1677, %v1697
      %v1727 = vmul.f32 %v1682, %v1697
      %v1728 = vmul.f32 %v1687, %v1697
      %v1729 = vmul.f32 %v1692, %v1697
      %v1731 = vlaneseq
      %v1732 = vshrl.u32 %v1731, 7
      %v1733 = vsub.s32 0, %v1732
      %v1734 = vrot.slane %v1533, %v1733
      %v1736 = vadd.f32 %v1734, %v1698
      %v1737 = vadd.f32 %v1734, %v1699
      %v1738 = vadd.f32 %v1734, %v1700
      %v1739 = vadd.f32 %v1734, %v1701
      %v1740 = vadd.f32 %v1734, %v1702
      %v1741 = vadd.f32 %v1734, %v1703
      %v1742 = vadd.f32 %v1734, %v1704
      %v1743 = vadd.f32 %v1734, %v1705
      %v1744 = vadd.f32 %v1734, %v1706
      %v1745 = vadd.f32 %v1734, %v1707
      %v1746 = vadd.f32 %v1734, %v1708
      %v1747 = vadd.f32 %v1734, %v1709
      %v1748 = vadd.f32 %v1734, %v1710
      %v1749 = vadd.f32 %v1734, %v1711
      %v1750 = vadd.f32 %v1734, %v1712
      %v1751 = vadd.f32 %v1734, %v1713
      %v1752 = vadd.f32 %v1734, %v1714
      %v1753 = vadd.f32 %v1734, %v1715
      %v1754 = vadd.f32 %v1734, %v1716
      %v1755 = vadd.f32 %v1734, %v1717
      %v1756 = vadd.f32 %v1734, %v1718
      %v1757 = vadd.f32 %v1734, %v1719
      %v1758 = vadd.f32 %v1734, %v1720
      %v1759 = vadd.f32 %v1734, %v1721
      %v1760 = vadd.f32 %v1734, %v1722
      %v1761 = vadd.f32 %v1734, %v1723
      %v1762 = vadd.f32 %v1734, %v1724
      %v1763 = vadd.f32 %v1734, %v1725
      %v1764 = vadd.f32 %v1734, %v1726
      %v1765 = vadd.f32 %v1734, %v1727
      %v1766 = vadd.f32 %v1734, %v1728
      %v1767 = vadd.f32 %v1734, %v1729
      %1768 = vset.pattern.permute.xlu0 1
      %1769 = vperm.xlu0 %1768, %v1500
      %v1770 = vpop.permute.xlu0 %1769
      %1772 = vset.pattern.permute.xlu0 1
      %1773 = vperm.xlu0 %1772, %v1501
      %v1774 = vpop.permute.xlu0 %1773
      %1776 = vset.pattern.permute.xlu0 1
      %1777 = vperm.xlu0 %1776, %v1502
      %v1778 = vpop.permute.xlu0 %1777
      %1780 = vset.pattern.permute.xlu0 1
      %1781 = vperm.xlu0 %1780, %v1503
      %v1782 = vpop.permute.xlu0 %1781
      %1784 = vset.pattern.permute.xlu0 1
      %1785 = vperm.xlu0 %1784, %v1504
      %v1786 = vpop.permute.xlu0 %1785
      %1788 = vset.pattern.permute.xlu0 1
      %1789 = vperm.xlu0 %1788, %v1505
      %v1790 = vpop.permute.xlu0 %1789
      %1792 = vset.pattern.permute.xlu0 1
      %1793 = vperm.xlu0 %1792, %v1506
      %v1794 = vpop.permute.xlu0 %1793
      %1796 = vset.pattern.permute.xlu0 1
      %1797 = vperm.xlu0 %1796, %v1507
      %v1798 = vpop.permute.xlu0 %1797
      %1800 = vset.pattern.permute.xlu0 1
      %1801 = vperm.xlu0 %1800, %v1508
      %v1802 = vpop.permute.xlu0 %1801
      %1804 = vset.pattern.permute.xlu0 1
      %1805 = vperm.xlu0 %1804, %v1509
      %v1806 = vpop.permute.xlu0 %1805
      %1808 = vset.pattern.permute.xlu0 1
      %1809 = vperm.xlu0 %1808, %v1510
      %v1810 = vpop.permute.xlu0 %1809
      %1812 = vset.pattern.permute.xlu0 1
      %1813 = vperm.xlu0 %1812, %v1511
      %v1814 = vpop.permute.xlu0 %1813
      %1816 = vset.pattern.permute.xlu0 1
      %1817 = vperm.xlu0 %1816, %v1512
      %v1818 = vpop.permute.xlu0 %1817
      %1820 = vset.pattern.permute.xlu0 1
      %1821 = vperm.xlu0 %1820, %v1513
      %v1822 = vpop.permute.xlu0 %1821
      %1824 = vset.pattern.permute.xlu0 1
      %1825 = vperm.xlu0 %1824, %v1514
      %v1826 = vpop.permute.xlu0 %1825
      %1828 = vset.pattern.permute.xlu0 1
      %1829 = vperm.xlu0 %1828, %v1515
      %v1830 = vpop.permute.xlu0 %1829
      %1832 = vset.pattern.permute.xlu0 1
      %1833 = vperm.xlu0 %1832, %v1516
      %v1834 = vpop.permute.xlu0 %1833
      %1836 = vset.pattern.permute.xlu0 1
      %1837 = vperm.xlu0 %1836, %v1517
      %v1838 = vpop.permute.xlu0 %1837
      %1840 = vset.pattern.permute.xlu0 1
      %1841 = vperm.xlu0 %1840, %v1518
      %v1842 = vpop.permute.xlu0 %1841
      %1844 = vset.pattern.permute.xlu0 1
      %1845 = vperm.xlu0 %1844, %v1519
      %v1846 = vpop.permute.xlu0 %1845
      %1848 = vset.pattern.permute.xlu0 1
      %1849 = vperm.xlu0 %1848, %v1520
      %v1850 = vpop.permute.xlu0 %1849
      %1852 = vset.pattern.permute.xlu0 1
      %1853 = vperm.xlu0 %1852, %v1521
      %v1854 = vpop.permute.xlu0 %1853
      %1856 = vset.pattern.permute.xlu0 1
      %1857 = vperm.xlu0 %1856, %v1522
      %v1858 = vpop.permute.xlu0 %1857
      %1860 = vset.pattern.permute.xlu0 1
      %1861 = vperm.xlu0 %1860, %v1523
      %v1862 = vpop.permute.xlu0 %1861
      %1864 = vset.pattern.permute.xlu0 1
      %1865 = vperm.xlu0 %1864, %v1524
      %v1866 = vpop.permute.xlu0 %1865
      %1868 = vset.pattern.permute.xlu0 1
      %1869 = vperm.xlu0 %1868, %v1525
      %v1870 = vpop.permute.xlu0 %1869
      %1872 = vset.pattern.permute.xlu0 1
      %1873 = vperm.xlu0 %1872, %v1526
      %v1874 = vpop.permute.xlu0 %1873
      %1876 = vset.pattern.permute.xlu0 1
      %1877 = vperm.xlu0 %1876, %v1527
      %v1878 = vpop.permute.xlu0 %1877
      %1880 = vset.pattern.permute.xlu0 1
      %1881 = vperm.xlu0 %1880, %v1528
      %v1882 = vpop.permute.xlu0 %1881
      %1884 = vset.pattern.permute.xlu0 1
      %1885 = vperm.xlu0 %1884, %v1529
      %v1886 = vpop.permute.xlu0 %1885
      %1888 = vset.pattern.permute.xlu0 1
      %1889 = vperm.xlu0 %1888, %v1530
      %v1890 = vpop.permute.xlu0 %1889
      %1892 = vset.pattern.permute.xlu0 1
      %1893 = vperm.xlu0 %1892, %v1531
      %v1894 = vpop.permute.xlu0 %1893
      %v1896 = vlaneseq
      %v1897 = vshrl.u32 %v1896, 7
      %v1898 = vsub.s32 1, %v1897
      %v1899 = vrot.slane %v1532, %v1898
      %v1900 = vmul.f32 %v1770, %v1899
      %v1901 = vmul.f32 %v1774, %v1899
      %v1902 = vmul.f32 %v1778, %v1899
      %v1903 = vmul.f32 %v1782, %v1899
      %v1904 = vmul.f32 %v1786, %v1899
      %v1905 = vmul.f32 %v1790, %v1899
      %v1906 = vmul.f32 %v1794, %v1899
      %v1907 = vmul.f32 %v1798, %v1899
      %v1908 = vmul.f32 %v1802, %v1899
      %v1909 = vmul.f32 %v1806, %v1899
      %v1910 = vmul.f32 %v1810, %v1899
      %v1911 = vmul.f32 %v1814, %v1899
      %v1912 = vmul.f32 %v1818, %v1899
      %v1913 = vmul.f32 %v1822, %v1899
      %v1914 = vmul.f32 %v1826, %v1899
      %v1915 = vmul.f32 %v1830, %v1899
      %v1916 = vmul.f32 %v1834, %v1899
      %v1917 = vmul.f32 %v1838, %v1899
      %v1918 = vmul.f32 %v1842, %v1899
      %v1919 = vmul.f32 %v1846, %v1899
      %v1920 = vmul.f32 %v1850, %v1899
      %v1921 = vmul.f32 %v1854, %v1899
      %v1922 = vmul.f32 %v1858, %v1899
      %v1923 = vmul.f32 %v1862, %v1899
      %v1924 = vmul.f32 %v1866, %v1899
      %v1925 = vmul.f32 %v1870, %v1899
      %v1926 = vmul.f32 %v1874, %v1899
      %v1927 = vmul.f32 %v1878, %v1899
      %v1928 = vmul.f32 %v1882, %v1899
      %v1929 = vmul.f32 %v1886, %v1899
      %v1930 = vmul.f32 %v1890, %v1899
      %v1931 = vmul.f32 %v1894, %v1899
      %v1932 = vadd.f32 %v1736, %v1900
      %v1933 = vadd.f32 %v1737, %v1901
      %v1934 = vadd.f32 %v1738, %v1902
      %v1935 = vadd.f32 %v1739, %v1903
      %v1936 = vadd.f32 %v1740, %v1904
      %v1937 = vadd.f32 %v1741, %v1905
      %v1938 = vadd.f32 %v1742, %v1906
      %v1939 = vadd.f32 %v1743, %v1907
      %v1940 = vadd.f32 %v1744, %v1908
      %v1941 = vadd.f32 %v1745, %v1909
      %v1942 = vadd.f32 %v1746, %v1910
      %v1943 = vadd.f32 %v1747, %v1911
      %v1944 = vadd.f32 %v1748, %v1912
      %v1945 = vadd.f32 %v1749, %v1913
      %v1946 = vadd.f32 %v1750, %v1914
      %v1947 = vadd.f32 %v1751, %v1915
      %v1948 = vadd.f32 %v1752, %v1916
      %v1949 = vadd.f32 %v1753, %v1917
      %v1950 = vadd.f32 %v1754, %v1918
      %v1951 = vadd.f32 %v1755, %v1919
      %v1952 = vadd.f32 %v1756, %v1920
      %v1953 = vadd.f32 %v1757, %v1921
      %v1954 = vadd.f32 %v1758, %v1922
      %v1955 = vadd.f32 %v1759, %v1923
      %v1956 = vadd.f32 %v1760, %v1924
      %v1957 = vadd.f32 %v1761, %v1925
      %v1958 = vadd.f32 %v1762, %v1926
      %v1959 = vadd.f32 %v1763, %v1927
      %v1960 = vadd.f32 %v1764, %v1928
      %v1961 = vadd.f32 %v1765, %v1929
      %v1962 = vadd.f32 %v1766, %v1930
      %v1963 = vadd.f32 %v1767, %v1931
      %1964 = vset.pattern.permute.xlu0 2
      %1965 = vperm.xlu0 %1964, %v1500
      %v1966 = vpop.permute.xlu0 %1965
      %1968 = vset.pattern.permute.xlu0 2
      %1969 = vperm.xlu0 %1968, %v1501
      %v1970 = vpop.permute.xlu0 %1969
      %1972 = vset.pattern.permute.xlu0 2
      %1973 = vperm.xlu0 %1972, %v1502
      %v1974 = vpop.permute.xlu0 %1973
      %1976 = vset.pattern.permute.xlu0 2
      %1977 = vperm.xlu0 %1976, %v1503
      %v1978 = vpop.permute.xlu0 %1977
      %1980 = vset.pattern.permute.xlu0 2
      %1981 = vperm.xlu0 %1980, %v1504
      %v1982 = vpop.permute.xlu0 %1981
      %1984 = vset.pattern.permute.xlu0 2
      %1985 = vperm.xlu0 %1984, %v1505
      %v1986 = vpop.permute.xlu0 %1985
      %1988 = vset.pattern.permute.xlu0 2
      %1989 = vperm.xlu0 %1988, %v1506
      %v1990 = vpop.permute.xlu0 %1989
      %1992 = vset.pattern.permute.xlu0 2
      %1993 = vperm.xlu0 %1992, %v1507
      %v1994 = vpop.permute.xlu0 %1993
      %1996 = vset.pattern.permute.xlu0 2
      %1997 = vperm.xlu0 %1996, %v1508
      %v1998 = vpop.permute.xlu0 %1997
      %2000 = vset.pattern.permute.xlu0 2
      %2001 = vperm.xlu0 %2000, %v1509
      %v2002 = vpop.permute.xlu0 %2001
      %2004 = vset.pattern.permute.xlu0 2
      %2005 = vperm.xlu0 %2004, %v1510
      %v2006 = vpop.permute.xlu0 %2005
      %2008 = vset.pattern.permute.xlu0 2
      %2009 = vperm.xlu0 %2008, %v1511
      %v2010 = vpop.permute.xlu0 %2009
      %2012 = vset.pattern.permute.xlu0 2
      %2013 = vperm.xlu0 %2012, %v1512
      %v2014 = vpop.permute.xlu0 %2013
      %2016 = vset.pattern.permute.xlu0 2
      %2017 = vperm.xlu0 %2016, %v1513
      %v2018 = vpop.permute.xlu0 %2017
      %2020 = vset.pattern.permute.xlu0 2
      %2021 = vperm.xlu0 %2020, %v1514
      %v2022 = vpop.permute.xlu0 %2021
      %2024 = vset.pattern.permute.xlu0 2
      %2025 = vperm.xlu0 %2024, %v1515
      %v2026 = vpop.permute.xlu0 %2025
      %2028 = vset.pattern.permute.xlu0 2
      %2029 = vperm.xlu0 %2028, %v1516
      %v2030 = vpop.permute.xlu0 %2029
      %2032 = vset.pattern.permute.xlu0 2
      %2033 = vperm.xlu0 %2032, %v1517
      %v2034 = vpop.permute.xlu0 %2033
      %2036 = vset.pattern.permute.xlu0 2
      %2037 = vperm.xlu0 %2036, %v1518
      %v2038 = vpop.permute.xlu0 %2037
      %2040 = vset.pattern.permute.xlu0 2
      %2041 = vperm.xlu0 %2040, %v1519
      %v2042 = vpop.permute.xlu0 %2041
      %2044 = vset.pattern.permute.xlu0 2
      %2045 = vperm.xlu0 %2044, %v1520
      %v2046 = vpop.permute.xlu0 %2045
      %2048 = vset.pattern.permute.xlu0 2
      %2049 = vperm.xlu0 %2048, %v1521
      %v2050 = vpop.permute.xlu0 %2049
      %2052 = vset.pattern.permute.xlu0 2
      %2053 = vperm.xlu0 %2052, %v1522
      %v2054 = vpop.permute.xlu0 %2053
      %2056 = vset.pattern.permute.xlu0 2
      %2057 = vperm.xlu0 %2056, %v1523
      %v2058 = vpop.permute.xlu0 %2057
      %2060 = vset.pattern.permute.xlu0 2
      %2061 = vperm.xlu0 %2060, %v1524
      %v2062 = vpop.permute.xlu0 %2061
      %2064 = vset.pattern.permute.xlu0 2
      %2065 = vperm.xlu0 %2064, %v1525
      %v2066 = vpop.permute.xlu0 %2065
      %2068 = vset.pattern.permute.xlu0 2
      %2069 = vperm.xlu0 %2068, %v1526
      %v2070 = vpop.permute.xlu0 %2069
      %2072 = vset.pattern.permute.xlu0 2
      %2073 = vperm.xlu0 %2072, %v1527
      %v2074 = vpop.permute.xlu0 %2073
      %2076 = vset.pattern.permute.xlu0 2
      %2077 = vperm.xlu0 %2076, %v1528
      %v2078 = vpop.permute.xlu0 %2077
      %2080 = vset.pattern.permute.xlu0 2
      %2081 = vperm.xlu0 %2080, %v1529
      %v2082 = vpop.permute.xlu0 %2081
      %2084 = vset.pattern.permute.xlu0 2
      %2085 = vperm.xlu0 %2084, %v1530
      %v2086 = vpop.permute.xlu0 %2085
      %2088 = vset.pattern.permute.xlu0 2
      %2089 = vperm.xlu0 %2088, %v1531
      %v2090 = vpop.permute.xlu0 %2089
      %v2092 = vlaneseq
      %v2093 = vshrl.u32 %v2092, 7
      %v2094 = vsub.s32 2, %v2093
      %v2095 = vrot.slane %v1532, %v2094
      %v2096 = vmul.f32 %v1966, %v2095
      %v2097 = vmul.f32 %v1970, %v2095
      %v2098 = vmul.f32 %v1974, %v2095
      %v2099 = vmul.f32 %v1978, %v2095
      %v2100 = vmul.f32 %v1982, %v2095
      %v2101 = vmul.f32 %v1986, %v2095
      %v2102 = vmul.f32 %v1990, %v2095
      %v2103 = vmul.f32 %v1994, %v2095
      %v2104 = vmul.f32 %v1998, %v2095
      %v2105 = vmul.f32 %v2002, %v2095
      %v2106 = vmul.f32 %v2006, %v2095
      %v2107 = vmul.f32 %v2010, %v2095
      %v2108 = vmul.f32 %v2014, %v2095
      %v2109 = vmul.f32 %v2018, %v2095
      %v2110 = vmul.f32 %v2022, %v2095
      %v2111 = vmul.f32 %v2026, %v2095
      %v2112 = vmul.f32 %v2030, %v2095
      %v2113 = vmul.f32 %v2034, %v2095
      %v2114 = vmul.f32 %v2038, %v2095
      %v2115 = vmul.f32 %v2042, %v2095
      %v2116 = vmul.f32 %v2046, %v2095
      %v2117 = vmul.f32 %v2050, %v2095
      %v2118 = vmul.f32 %v2054, %v2095
      %v2119 = vmul.f32 %v2058, %v2095
      %v2120 = vmul.f32 %v2062, %v2095
      %v2121 = vmul.f32 %v2066, %v2095
      %v2122 = vmul.f32 %v2070, %v2095
      %v2123 = vmul.f32 %v2074, %v2095
      %v2124 = vmul.f32 %v2078, %v2095
      %v2125 = vmul.f32 %v2082, %v2095
      %v2126 = vmul.f32 %v2086, %v2095
      %v2127 = vmul.f32 %v2090, %v2095
      %v2128 = vadd.f32 %v1932, %v2096
      %v2129 = vadd.f32 %v1933, %v2097
      %v2130 = vadd.f32 %v1934, %v2098
      %v2131 = vadd.f32 %v1935, %v2099
      %v2132 = vadd.f32 %v1936, %v2100
      %v2133 = vadd.f32 %v1937, %v2101
      %v2134 = vadd.f32 %v1938, %v2102
      %v2135 = vadd.f32 %v1939, %v2103
      %v2136 = vadd.f32 %v1940, %v2104
      %v2137 = vadd.f32 %v1941, %v2105
      %v2138 = vadd.f32 %v1942, %v2106
      %v2139 = vadd.f32 %v1943, %v2107
      %v2140 = vadd.f32 %v1944, %v2108
      %v2141 = vadd.f32 %v1945, %v2109
      %v2142 = vadd.f32 %v1946, %v2110
      %v2143 = vadd.f32 %v1947, %v2111
      %v2144 = vadd.f32 %v1948, %v2112
      %v2145 = vadd.f32 %v1949, %v2113
      %v2146 = vadd.f32 %v1950, %v2114
      %v2147 = vadd.f32 %v1951, %v2115
      %v2148 = vadd.f32 %v1952, %v2116
      %v2149 = vadd.f32 %v1953, %v2117
      %v2150 = vadd.f32 %v1954, %v2118
      %v2151 = vadd.f32 %v1955, %v2119
      %v2152 = vadd.f32 %v1956, %v2120
      %v2153 = vadd.f32 %v1957, %v2121
      %v2154 = vadd.f32 %v1958, %v2122
      %v2155 = vadd.f32 %v1959, %v2123
      %v2156 = vadd.f32 %v1960, %v2124
      %v2157 = vadd.f32 %v1961, %v2125
      %v2158 = vadd.f32 %v1962, %v2126
      %v2159 = vadd.f32 %v1963, %v2127
      %2160 = vset.pattern.permute.xlu0 3
      %2161 = vperm.xlu0 %2160, %v1500
      %v2162 = vpop.permute.xlu0 %2161
      %2164 = vset.pattern.permute.xlu0 3
      %2165 = vperm.xlu0 %2164, %v1501
      %v2166 = vpop.permute.xlu0 %2165
      %2168 = vset.pattern.permute.xlu0 3
      %2169 = vperm.xlu0 %2168, %v1502
      %v2170 = vpop.permute.xlu0 %2169
      %2172 = vset.pattern.permute.xlu0 3
      %2173 = vperm.xlu0 %2172, %v1503
      %v2174 = vpop.permute.xlu0 %2173
      %2176 = vset.pattern.permute.xlu0 3
      %2177 = vperm.xlu0 %2176, %v1504
      %v2178 = vpop.permute.xlu0 %2177
      %2180 = vset.pattern.permute.xlu0 3
      %2181 = vperm.xlu0 %2180, %v1505
      %v2182 = vpop.permute.xlu0 %2181
      %2184 = vset.pattern.permute.xlu0 3
      %2185 = vperm.xlu0 %2184, %v1506
      %v2186 = vpop.permute.xlu0 %2185
      %2188 = vset.pattern.permute.xlu0 3
      %2189 = vperm.xlu0 %2188, %v1507
      %v2190 = vpop.permute.xlu0 %2189
      %2192 = vset.pattern.permute.xlu0 3
      %2193 = vperm.xlu0 %2192, %v1508
      %v2194 = vpop.permute.xlu0 %2193
      %2196 = vset.pattern.permute.xlu0 3
      %2197 = vperm.xlu0 %2196, %v1509
      %v2198 = vpop.permute.xlu0 %2197
      %2200 = vset.pattern.permute.xlu0 3
      %2201 = vperm.xlu0 %2200, %v1510
      %v2202 = vpop.permute.xlu0 %2201
      %2204 = vset.pattern.permute.xlu0 3
      %2205 = vperm.xlu0 %2204, %v1511
      %v2206 = vpop.permute.xlu0 %2205
      %2208 = vset.pattern.permute.xlu0 3
      %2209 = vperm.xlu0 %2208, %v1512
      %v2210 = vpop.permute.xlu0 %2209
      %2212 = vset.pattern.permute.xlu0 3
      %2213 = vperm.xlu0 %2212, %v1513
      %v2214 = vpop.permute.xlu0 %2213
      %2216 = vset.pattern.permute.xlu0 3
      %2217 = vperm.xlu0 %2216, %v1514
      %v2218 = vpop.permute.xlu0 %2217
      %2220 = vset.pattern.permute.xlu0 3
      %2221 = vperm.xlu0 %2220, %v1515
      %v2222 = vpop.permute.xlu0 %2221
      %2224 = vset.pattern.permute.xlu0 3
      %2225 = vperm.xlu0 %2224, %v1516
      %v2226 = vpop.permute.xlu0 %2225
      %2228 = vset.pattern.permute.xlu0 3
      %2229 = vperm.xlu0 %2228, %v1517
      %v2230 = vpop.permute.xlu0 %2229
      %2232 = vset.pattern.permute.xlu0 3
      %2233 = vperm.xlu0 %2232, %v1518
      %v2234 = vpop.permute.xlu0 %2233
      %2236 = vset.pattern.permute.xlu0 3
      %2237 = vperm.xlu0 %2236, %v1519
      %v2238 = vpop.permute.xlu0 %2237
      %2240 = vset.pattern.permute.xlu0 3
      %2241 = vperm.xlu0 %2240, %v1520
      %v2242 = vpop.permute.xlu0 %2241
      %2244 = vset.pattern.permute.xlu0 3
      %2245 = vperm.xlu0 %2244, %v1521
      %v2246 = vpop.permute.xlu0 %2245
      %2248 = vset.pattern.permute.xlu0 3
      %2249 = vperm.xlu0 %2248, %v1522
      %v2250 = vpop.permute.xlu0 %2249
      %2252 = vset.pattern.permute.xlu0 3
      %2253 = vperm.xlu0 %2252, %v1523
      %v2254 = vpop.permute.xlu0 %2253
      %2256 = vset.pattern.permute.xlu0 3
      %2257 = vperm.xlu0 %2256, %v1524
      %v2258 = vpop.permute.xlu0 %2257
      %2260 = vset.pattern.permute.xlu0 3
      %2261 = vperm.xlu0 %2260, %v1525
      %v2262 = vpop.permute.xlu0 %2261
      %2264 = vset.pattern.permute.xlu0 3
      %2265 = vperm.xlu0 %2264, %v1526
      %v2266 = vpop.permute.xlu0 %2265
      %2268 = vset.pattern.permute.xlu0 3
      %2269 = vperm.xlu0 %2268, %v1527
      %v2270 = vpop.permute.xlu0 %2269
      %2272 = vset.pattern.permute.xlu0 3
      %2273 = vperm.xlu0 %2272, %v1528
      %v2274 = vpop.permute.xlu0 %2273
      %2276 = vset.pattern.permute.xlu0 3
      %2277 = vperm.xlu0 %2276, %v1529
      %v2278 = vpop.permute.xlu0 %2277
      %2280 = vset.pattern.permute.xlu0 3
      %2281 = vperm.xlu0 %2280, %v1530
      %v2282 = vpop.permute.xlu0 %2281
      %2284 = vset.pattern.permute.xlu0 3
      %2285 = vperm.xlu0 %2284, %v1531
      %v2286 = vpop.permute.xlu0 %2285
      %v2288 = vlaneseq
      %v2289 = vshrl.u32 %v2288, 7
      %v2290 = vsub.s32 3, %v2289
      %v2291 = vrot.slane %v1532, %v2290
      %v2292 = vmul.f32 %v2162, %v2291
      %v2293 = vmul.f32 %v2166, %v2291
      %v2294 = vmul.f32 %v2170, %v2291
      %v2295 = vmul.f32 %v2174, %v2291
      %v2296 = vmul.f32 %v2178, %v2291
      %v2297 = vmul.f32 %v2182, %v2291
      %v2298 = vmul.f32 %v2186, %v2291
      %v2299 = vmul.f32 %v2190, %v2291
      %v2300 = vmul.f32 %v2194, %v2291
      %v2301 = vmul.f32 %v2198, %v2291
      %v2302 = vmul.f32 %v2202, %v2291
      %v2303 = vmul.f32 %v2206, %v2291
      %v2304 = vmul.f32 %v2210, %v2291
      %v2305 = vmul.f32 %v2214, %v2291
      %v2306 = vmul.f32 %v2218, %v2291
      %v2307 = vmul.f32 %v2222, %v2291
      %v2308 = vmul.f32 %v2226, %v2291
      %v2309 = vmul.f32 %v2230, %v2291
      %v2310 = vmul.f32 %v2234, %v2291
      %v2311 = vmul.f32 %v2238, %v2291
      %v2312 = vmul.f32 %v2242, %v2291
      %v2313 = vmul.f32 %v2246, %v2291
      %v2314 = vmul.f32 %v2250, %v2291
      %v2315 = vmul.f32 %v2254, %v2291
      %v2316 = vmul.f32 %v2258, %v2291
      %v2317 = vmul.f32 %v2262, %v2291
      %v2318 = vmul.f32 %v2266, %v2291
      %v2319 = vmul.f32 %v2270, %v2291
      %v2320 = vmul.f32 %v2274, %v2291
      %v2321 = vmul.f32 %v2278, %v2291
      %v2322 = vmul.f32 %v2282, %v2291
      %v2323 = vmul.f32 %v2286, %v2291
      %v2324 = vadd.f32 %v2128, %v2292
      %v2325 = vadd.f32 %v2129, %v2293
      %v2326 = vadd.f32 %v2130, %v2294
      %v2327 = vadd.f32 %v2131, %v2295
      %v2328 = vadd.f32 %v2132, %v2296
      %v2329 = vadd.f32 %v2133, %v2297
      %v2330 = vadd.f32 %v2134, %v2298
      %v2331 = vadd.f32 %v2135, %v2299
      %v2332 = vadd.f32 %v2136, %v2300
      %v2333 = vadd.f32 %v2137, %v2301
      %v2334 = vadd.f32 %v2138, %v2302
      %v2335 = vadd.f32 %v2139, %v2303
      %v2336 = vadd.f32 %v2140, %v2304
      %v2337 = vadd.f32 %v2141, %v2305
      %v2338 = vadd.f32 %v2142, %v2306
      %v2339 = vadd.f32 %v2143, %v2307
      %v2340 = vadd.f32 %v2144, %v2308
      %v2341 = vadd.f32 %v2145, %v2309
      %v2342 = vadd.f32 %v2146, %v2310
      %v2343 = vadd.f32 %v2147, %v2311
      %v2344 = vadd.f32 %v2148, %v2312
      %v2345 = vadd.f32 %v2149, %v2313
      %v2346 = vadd.f32 %v2150, %v2314
      %v2347 = vadd.f32 %v2151, %v2315
      %v2348 = vadd.f32 %v2152, %v2316
      %v2349 = vadd.f32 %v2153, %v2317
      %v2350 = vadd.f32 %v2154, %v2318
      %v2351 = vadd.f32 %v2155, %v2319
      %v2352 = vadd.f32 %v2156, %v2320
      %v2353 = vadd.f32 %v2157, %v2321
      %v2354 = vadd.f32 %v2158, %v2322
      %v2355 = vadd.f32 %v2159, %v2323
      %2356 = vset.pattern.permute.xlu0 4
      %2357 = vperm.xlu0 %2356, %v1500
      %v2358 = vpop.permute.xlu0 %2357
      %2360 = vset.pattern.permute.xlu0 4
      %2361 = vperm.xlu0 %2360, %v1501
      %v2362 = vpop.permute.xlu0 %2361
      %2364 = vset.pattern.permute.xlu0 4
      %2365 = vperm.xlu0 %2364, %v1502
      %v2366 = vpop.permute.xlu0 %2365
      %2368 = vset.pattern.permute.xlu0 4
      %2369 = vperm.xlu0 %2368, %v1503
      %v2370 = vpop.permute.xlu0 %2369
      %2372 = vset.pattern.permute.xlu0 4
      %2373 = vperm.xlu0 %2372, %v1504
      %v2374 = vpop.permute.xlu0 %2373
      %2376 = vset.pattern.permute.xlu0 4
      %2377 = vperm.xlu0 %2376, %v1505
      %v2378 = vpop.permute.xlu0 %2377
      %2380 = vset.pattern.permute.xlu0 4
      %2381 = vperm.xlu0 %2380, %v1506
      %v2382 = vpop.permute.xlu0 %2381
      %2384 = vset.pattern.permute.xlu0 4
      %2385 = vperm.xlu0 %2384, %v1507
      %v2386 = vpop.permute.xlu0 %2385
      %2388 = vset.pattern.permute.xlu0 4
      %2389 = vperm.xlu0 %2388, %v1508
      %v2390 = vpop.permute.xlu0 %2389
      %2392 = vset.pattern.permute.xlu0 4
      %2393 = vperm.xlu0 %2392, %v1509
      %v2394 = vpop.permute.xlu0 %2393
      %2396 = vset.pattern.permute.xlu0 4
      %2397 = vperm.xlu0 %2396, %v1510
      %v2398 = vpop.permute.xlu0 %2397
      %2400 = vset.pattern.permute.xlu0 4
      %2401 = vperm.xlu0 %2400, %v1511
      %v2402 = vpop.permute.xlu0 %2401
      %2404 = vset.pattern.permute.xlu0 4
      %2405 = vperm.xlu0 %2404, %v1512
      %v2406 = vpop.permute.xlu0 %2405
      %2408 = vset.pattern.permute.xlu0 4
      %2409 = vperm.xlu0 %2408, %v1513
      %v2410 = vpop.permute.xlu0 %2409
      %2412 = vset.pattern.permute.xlu0 4
      %2413 = vperm.xlu0 %2412, %v1514
      %v2414 = vpop.permute.xlu0 %2413
      %2416 = vset.pattern.permute.xlu0 4
      %2417 = vperm.xlu0 %2416, %v1515
      %v2418 = vpop.permute.xlu0 %2417
      %2420 = vset.pattern.permute.xlu0 4
      %2421 = vperm.xlu0 %2420, %v1516
      %v2422 = vpop.permute.xlu0 %2421
      %2424 = vset.pattern.permute.xlu0 4
      %2425 = vperm.xlu0 %2424, %v1517
      %v2426 = vpop.permute.xlu0 %2425
      %2428 = vset.pattern.permute.xlu0 4
      %2429 = vperm.xlu0 %2428, %v1518
      %v2430 = vpop.permute.xlu0 %2429
      %2432 = vset.pattern.permute.xlu0 4
      %2433 = vperm.xlu0 %2432, %v1519
      %v2434 = vpop.permute.xlu0 %2433
      %2436 = vset.pattern.permute.xlu0 4
      %2437 = vperm.xlu0 %2436, %v1520
      %v2438 = vpop.permute.xlu0 %2437
      %2440 = vset.pattern.permute.xlu0 4
      %2441 = vperm.xlu0 %2440, %v1521
      %v2442 = vpop.permute.xlu0 %2441
      %2444 = vset.pattern.permute.xlu0 4
      %2445 = vperm.xlu0 %2444, %v1522
      %v2446 = vpop.permute.xlu0 %2445
      %2448 = vset.pattern.permute.xlu0 4
      %2449 = vperm.xlu0 %2448, %v1523
      %v2450 = vpop.permute.xlu0 %2449
      %2452 = vset.pattern.permute.xlu0 4
      %2453 = vperm.xlu0 %2452, %v1524
      %v2454 = vpop.permute.xlu0 %2453
      %2456 = vset.pattern.permute.xlu0 4
      %2457 = vperm.xlu0 %2456, %v1525
      %v2458 = vpop.permute.xlu0 %2457
      %2460 = vset.pattern.permute.xlu0 4
      %2461 = vperm.xlu0 %2460, %v1526
      %v2462 = vpop.permute.xlu0 %2461
      %2464 = vset.pattern.permute.xlu0 4
      %2465 = vperm.xlu0 %2464, %v1527
      %v2466 = vpop.permute.xlu0 %2465
      %2468 = vset.pattern.permute.xlu0 4
      %2469 = vperm.xlu0 %2468, %v1528
      %v2470 = vpop.permute.xlu0 %2469
      %2472 = vset.pattern.permute.xlu0 4
      %2473 = vperm.xlu0 %2472, %v1529
      %v2474 = vpop.permute.xlu0 %2473
      %2476 = vset.pattern.permute.xlu0 4
      %2477 = vperm.xlu0 %2476, %v1530
      %v2478 = vpop.permute.xlu0 %2477
      %2480 = vset.pattern.permute.xlu0 4
      %2481 = vperm.xlu0 %2480, %v1531
      %v2482 = vpop.permute.xlu0 %2481
      %v2484 = vlaneseq
      %v2485 = vshrl.u32 %v2484, 7
      %v2486 = vsub.s32 4, %v2485
      %v2487 = vrot.slane %v1532, %v2486
      %v2488 = vmul.f32 %v2358, %v2487
      %v2489 = vmul.f32 %v2362, %v2487
      %v2490 = vmul.f32 %v2366, %v2487
      %v2491 = vmul.f32 %v2370, %v2487
      %v2492 = vmul.f32 %v2374, %v2487
      %v2493 = vmul.f32 %v2378, %v2487
      %v2494 = vmul.f32 %v2382, %v2487
      %v2495 = vmul.f32 %v2386, %v2487
      %v2496 = vmul.f32 %v2390, %v2487
      %v2497 = vmul.f32 %v2394, %v2487
      %v2498 = vmul.f32 %v2398, %v2487
      %v2499 = vmul.f32 %v2402, %v2487
      %v2500 = vmul.f32 %v2406, %v2487
      %v2501 = vmul.f32 %v2410, %v2487
      %v2502 = vmul.f32 %v2414, %v2487
      %v2503 = vmul.f32 %v2418, %v2487
      %v2504 = vmul.f32 %v2422, %v2487
      %v2505 = vmul.f32 %v2426, %v2487
      %v2506 = vmul.f32 %v2430, %v2487
      %v2507 = vmul.f32 %v2434, %v2487
      %v2508 = vmul.f32 %v2438, %v2487
      %v2509 = vmul.f32 %v2442, %v2487
      %v2510 = vmul.f32 %v2446, %v2487
      %v2511 = vmul.f32 %v2450, %v2487
      %v2512 = vmul.f32 %v2454, %v2487
      %v2513 = vmul.f32 %v2458, %v2487
      %v2514 = vmul.f32 %v2462, %v2487
      %v2515 = vmul.f32 %v2466, %v2487
      %v2516 = vmul.f32 %v2470, %v2487
      %v2517 = vmul.f32 %v2474, %v2487
      %v2518 = vmul.f32 %v2478, %v2487
      %v2519 = vmul.f32 %v2482, %v2487
      %v2520 = vadd.f32 %v2324, %v2488
      %v2521 = vadd.f32 %v2325, %v2489
      %v2522 = vadd.f32 %v2326, %v2490
      %v2523 = vadd.f32 %v2327, %v2491
      %v2524 = vadd.f32 %v2328, %v2492
      %v2525 = vadd.f32 %v2329, %v2493
      %v2526 = vadd.f32 %v2330, %v2494
      %v2527 = vadd.f32 %v2331, %v2495
      %v2528 = vadd.f32 %v2332, %v2496
      %v2529 = vadd.f32 %v2333, %v2497
      %v2530 = vadd.f32 %v2334, %v2498
      %v2531 = vadd.f32 %v2335, %v2499
      %v2532 = vadd.f32 %v2336, %v2500
      %v2533 = vadd.f32 %v2337, %v2501
      %v2534 = vadd.f32 %v2338, %v2502
      %v2535 = vadd.f32 %v2339, %v2503
      %v2536 = vadd.f32 %v2340, %v2504
      %v2537 = vadd.f32 %v2341, %v2505
      %v2538 = vadd.f32 %v2342, %v2506
      %v2539 = vadd.f32 %v2343, %v2507
      %v2540 = vadd.f32 %v2344, %v2508
      %v2541 = vadd.f32 %v2345, %v2509
      %v2542 = vadd.f32 %v2346, %v2510
      %v2543 = vadd.f32 %v2347, %v2511
      %v2544 = vadd.f32 %v2348, %v2512
      %v2545 = vadd.f32 %v2349, %v2513
      %v2546 = vadd.f32 %v2350, %v2514
      %v2547 = vadd.f32 %v2351, %v2515
      %v2548 = vadd.f32 %v2352, %v2516
      %v2549 = vadd.f32 %v2353, %v2517
      %v2550 = vadd.f32 %v2354, %v2518
      %v2551 = vadd.f32 %v2355, %v2519
      %v2552 = vmax.f32 %v2520, 0.0
      %v2553 = vmax.f32 %v2521, 0.0
      %v2554 = vmax.f32 %v2522, 0.0
      %v2555 = vmax.f32 %v2523, 0.0
      %v2556 = vmax.f32 %v2524, 0.0
      %v2557 = vmax.f32 %v2525, 0.0
      %v2558 = vmax.f32 %v2526, 0.0
      %v2559 = vmax.f32 %v2527, 0.0
      %v2560 = vmax.f32 %v2528, 0.0
      %v2561 = vmax.f32 %v2529, 0.0
      %v2562 = vmax.f32 %v2530, 0.0
      %v2563 = vmax.f32 %v2531, 0.0
      %v2564 = vmax.f32 %v2532, 0.0
      %v2565 = vmax.f32 %v2533, 0.0
      %v2566 = vmax.f32 %v2534, 0.0
      %v2567 = vmax.f32 %v2535, 0.0
      %v2568 = vmax.f32 %v2536, 0.0
      %v2569 = vmax.f32 %v2537, 0.0
      %v2570 = vmax.f32 %v2538, 0.0
      %v2571 = vmax.f32 %v2539, 0.0
      %v2572 = vmax.f32 %v2540, 0.0
      %v2573 = vmax.f32 %v2541, 0.0
      %v2574 = vmax.f32 %v2542, 0.0
      %v2575 = vmax.f32 %v2543, 0.0
      %v2576 = vmax.f32 %v2544, 0.0
      %v2577 = vmax.f32 %v2545, 0.0
      %v2578 = vmax.f32 %v2546, 0.0
      %v2579 = vmax.f32 %v2547, 0.0
      %v2580 = vmax.f32 %v2548, 0.0
      %v2581 = vmax.f32 %v2549, 0.0
      %v2582 = vmax.f32 %v2550, 0.0
      %v2583 = vmax.f32 %v2551, 0.0
      %vm2584 = vcmask 15360
      %v2585 = vsel %vm2584, %v2552, -inf
      %v2586 = vrot.slane %v2585, 4
      %v2587 = vmax.f32 %v2585, %v2586
      %v2588 = vrot.slane %v2587, 2
      %v2589 = vmax.f32 %v2587, %v2588
      %v2590 = vrot.slane %v2589, 1
      %v2591 = vmax.f32 %v2589, %v2590
      %v2592 = vsub.f32 %v2552, %v2591
      %v2593 = vmul.f32 %v2592, 1.442695
      %v2594 = vpow.pop %v2593
      %v2595 = vsel %vm2584, %v2594, 0.0
      %v2596 = vrot.slane %v2595, 4
      %v2597 = vadd.f32 %v2595, %v2596
      %v2598 = vrot.slane %v2597, 2
      %v2599 = vadd.f32 %v2597, %v2598
      %v2600 = vrot.slane %v2599, 1
      %v2601 = vadd.f32 %v2599, %v2600
      %v2602 = vrcp.pop %v2601
      %v2603 = vmul.f32 %v2594, %v2602
      %2604 = vst.msk [vmem:[%s280] sm:$0xff] %vm2584, %v2603
      %v2605 = vsel %vm2584, %v2553, -inf
      %v2606 = vrot.slane %v2605, 4
      %v2607 = vmax.f32 %v2605, %v2606
      %v2608 = vrot.slane %v2607, 2
      %v2609 = vmax.f32 %v2607, %v2608
      %v2610 = vrot.slane %v2609, 1
      %v2611 = vmax.f32 %v2609, %v2610
      %v2612 = vsub.f32 %v2553, %v2611
      %v2613 = vmul.f32 %v2612, 1.442695
      %v2614 = vpow.pop %v2613
      %v2615 = vsel %vm2584, %v2614, 0.0
      %v2616 = vrot.slane %v2615, 4
      %v2617 = vadd.f32 %v2615, %v2616
      %v2618 = vrot.slane %v2617, 2
      %v2619 = vadd.f32 %v2617, %v2618
      %v2620 = vrot.slane %v2619, 1
      %v2621 = vadd.f32 %v2619, %v2620
      %v2622 = vrcp.pop %v2621
      %v2623 = vmul.f32 %v2614, %v2622
      %2624 = vst.msk [vmem:[%s280 + $0x8] sm:$0xff] %vm2584, %v2623
      %v2625 = vsel %vm2584, %v2554, -inf
      %v2626 = vrot.slane %v2625, 4
      %v2627 = vmax.f32 %v2625, %v2626
      %v2628 = vrot.slane %v2627, 2
      %v2629 = vmax.f32 %v2627, %v2628
      %v2630 = vrot.slane %v2629, 1
      %v2631 = vmax.f32 %v2629, %v2630
      %v2632 = vsub.f32 %v2554, %v2631
      %v2633 = vmul.f32 %v2632, 1.442695
      %v2634 = vpow.pop %v2633
      %v2635 = vsel %vm2584, %v2634, 0.0
      %v2636 = vrot.slane %v2635, 4
      %v2637 = vadd.f32 %v2635, %v2636
      %v2638 = vrot.slane %v2637, 2
      %v2639 = vadd.f32 %v2637, %v2638
      %v2640 = vrot.slane %v2639, 1
      %v2641 = vadd.f32 %v2639, %v2640
      %v2642 = vrcp.pop %v2641
      %v2643 = vmul.f32 %v2634, %v2642
      %2644 = vst.msk [vmem:[%s280 + $0x10] sm:$0xff] %vm2584, %v2643
      %v2645 = vsel %vm2584, %v2555, -inf
      %v2646 = vrot.slane %v2645, 4
      %v2647 = vmax.f32 %v2645, %v2646
      %v2648 = vrot.slane %v2647, 2
      %v2649 = vmax.f32 %v2647, %v2648
      %v2650 = vrot.slane %v2649, 1
      %v2651 = vmax.f32 %v2649, %v2650
      %v2652 = vsub.f32 %v2555, %v2651
      %v2653 = vmul.f32 %v2652, 1.442695
      %v2654 = vpow.pop %v2653
      %v2655 = vsel %vm2584, %v2654, 0.0
      %v2656 = vrot.slane %v2655, 4
      %v2657 = vadd.f32 %v2655, %v2656
      %v2658 = vrot.slane %v2657, 2
      %v2659 = vadd.f32 %v2657, %v2658
      %v2660 = vrot.slane %v2659, 1
      %v2661 = vadd.f32 %v2659, %v2660
      %v2662 = vrcp.pop %v2661
      %v2663 = vmul.f32 %v2654, %v2662
      %2664 = vst.msk [vmem:[%s280 + $0x18] sm:$0xff] %vm2584, %v2663
      %v2665 = vsel %vm2584, %v2556, -inf
      %v2666 = vrot.slane %v2665, 4
      %v2667 = vmax.f32 %v2665, %v2666
      %v2668 = vrot.slane %v2667, 2
      %v2669 = vmax.f32 %v2667, %v2668
      %v2670 = vrot.slane %v2669, 1
      %v2671 = vmax.f32 %v2669, %v2670
      %v2672 = vsub.f32 %v2556, %v2671
      %v2673 = vmul.f32 %v2672, 1.442695
      %v2674 = vpow.pop %v2673
      %v2675 = vsel %vm2584, %v2674, 0.0
      %v2676 = vrot.slane %v2675, 4
      %v2677 = vadd.f32 %v2675, %v2676
      %v2678 = vrot.slane %v2677, 2
      %v2679 = vadd.f32 %v2677, %v2678
      %v2680 = vrot.slane %v2679, 1
      %v2681 = vadd.f32 %v2679, %v2680
      %v2682 = vrcp.pop %v2681
      %v2683 = vmul.f32 %v2674, %v2682
      %2684 = vst.msk [vmem:[%s280 + $0x20] sm:$0xff] %vm2584, %v2683
      %v2685 = vsel %vm2584, %v2557, -inf
      %v2686 = vrot.slane %v2685, 4
      %v2687 = vmax.f32 %v2685, %v2686
      %v2688 = vrot.slane %v2687, 2
      %v2689 = vmax.f32 %v2687, %v2688
      %v2690 = vrot.slane %v2689, 1
      %v2691 = vmax.f32 %v2689, %v2690
      %v2692 = vsub.f32 %v2557, %v2691
      %v2693 = vmul.f32 %v2692, 1.442695
      %v2694 = vpow.pop %v2693
      %v2695 = vsel %vm2584, %v2694, 0.0
      %v2696 = vrot.slane %v2695, 4
      %v2697 = vadd.f32 %v2695, %v2696
      %v2698 = vrot.slane %v2697, 2
      %v2699 = vadd.f32 %v2697, %v2698
      %v2700 = vrot.slane %v2699, 1
      %v2701 = vadd.f32 %v2699, %v2700
      %v2702 = vrcp.pop %v2701
      %v2703 = vmul.f32 %v2694, %v2702
      %2704 = vst.msk [vmem:[%s280 + $0x28] sm:$0xff] %vm2584, %v2703
      %v2705 = vsel %vm2584, %v2558, -inf
      %v2706 = vrot.slane %v2705, 4
      %v2707 = vmax.f32 %v2705, %v2706
      %v2708 = vrot.slane %v2707, 2
      %v2709 = vmax.f32 %v2707, %v2708
      %v2710 = vrot.slane %v2709, 1
      %v2711 = vmax.f32 %v2709, %v2710
      %v2712 = vsub.f32 %v2558, %v2711
      %v2713 = vmul.f32 %v2712, 1.442695
      %v2714 = vpow.pop %v2713
      %v2715 = vsel %vm2584, %v2714, 0.0
      %v2716 = vrot.slane %v2715, 4
      %v2717 = vadd.f32 %v2715, %v2716
      %v2718 = vrot.slane %v2717, 2
      %v2719 = vadd.f32 %v2717, %v2718
      %v2720 = vrot.slane %v2719, 1
      %v2721 = vadd.f32 %v2719, %v2720
      %v2722 = vrcp.pop %v2721
      %v2723 = vmul.f32 %v2714, %v2722
      %2724 = vst.msk [vmem:[%s280 + $0x30] sm:$0xff] %vm2584, %v2723
      %v2725 = vsel %vm2584, %v2559, -inf
      %v2726 = vrot.slane %v2725, 4
      %v2727 = vmax.f32 %v2725, %v2726
      %v2728 = vrot.slane %v2727, 2
      %v2729 = vmax.f32 %v2727, %v2728
      %v2730 = vrot.slane %v2729, 1
      %v2731 = vmax.f32 %v2729, %v2730
      %v2732 = vsub.f32 %v2559, %v2731
      %v2733 = vmul.f32 %v2732, 1.442695
      %v2734 = vpow.pop %v2733
      %v2735 = vsel %vm2584, %v2734, 0.0
      %v2736 = vrot.slane %v2735, 4
      %v2737 = vadd.f32 %v2735, %v2736
      %v2738 = vrot.slane %v2737, 2
      %v2739 = vadd.f32 %v2737, %v2738
      %v2740 = vrot.slane %v2739, 1
      %v2741 = vadd.f32 %v2739, %v2740
      %v2742 = vrcp.pop %v2741
      %v2743 = vmul.f32 %v2734, %v2742
      %2744 = vst.msk [vmem:[%s280 + $0x38] sm:$0xff] %vm2584, %v2743
      %v2745 = vsel %vm2584, %v2560, -inf
      %v2746 = vrot.slane %v2745, 4
      %v2747 = vmax.f32 %v2745, %v2746
      %v2748 = vrot.slane %v2747, 2
      %v2749 = vmax.f32 %v2747, %v2748
      %v2750 = vrot.slane %v2749, 1
      %v2751 = vmax.f32 %v2749, %v2750
      %v2752 = vsub.f32 %v2560, %v2751
      %v2753 = vmul.f32 %v2752, 1.442695
      %v2754 = vpow.pop %v2753
      %v2755 = vsel %vm2584, %v2754, 0.0
      %v2756 = vrot.slane %v2755, 4
      %v2757 = vadd.f32 %v2755, %v2756
      %v2758 = vrot.slane %v2757, 2
      %v2759 = vadd.f32 %v2757, %v2758
      %v2760 = vrot.slane %v2759, 1
      %v2761 = vadd.f32 %v2759, %v2760
      %v2762 = vrcp.pop %v2761
      %v2763 = vmul.f32 %v2754, %v2762
      %2764 = vst.msk [vmem:[%s280 + $0x40] sm:$0xff] %vm2584, %v2763
      %v2765 = vsel %vm2584, %v2561, -inf
      %v2766 = vrot.slane %v2765, 4
      %v2767 = vmax.f32 %v2765, %v2766
      %v2768 = vrot.slane %v2767, 2
      %v2769 = vmax.f32 %v2767, %v2768
      %v2770 = vrot.slane %v2769, 1
      %v2771 = vmax.f32 %v2769, %v2770
      %v2772 = vsub.f32 %v2561, %v2771
      %v2773 = vmul.f32 %v2772, 1.442695
      %v2774 = vpow.pop %v2773
      %v2775 = vsel %vm2584, %v2774, 0.0
      %v2776 = vrot.slane %v2775, 4
      %v2777 = vadd.f32 %v2775, %v2776
      %v2778 = vrot.slane %v2777, 2
      %v2779 = vadd.f32 %v2777, %v2778
      %v2780 = vrot.slane %v2779, 1
      %v2781 = vadd.f32 %v2779, %v2780
      %v2782 = vrcp.pop %v2781
      %v2783 = vmul.f32 %v2774, %v2782
      %2784 = vst.msk [vmem:[%s280 + $0x48] sm:$0xff] %vm2584, %v2783
      %v2785 = vsel %vm2584, %v2562, -inf
      %v2786 = vrot.slane %v2785, 4
      %v2787 = vmax.f32 %v2785, %v2786
      %v2788 = vrot.slane %v2787, 2
      %v2789 = vmax.f32 %v2787, %v2788
      %v2790 = vrot.slane %v2789, 1
      %v2791 = vmax.f32 %v2789, %v2790
      %v2792 = vsub.f32 %v2562, %v2791
      %v2793 = vmul.f32 %v2792, 1.442695
      %v2794 = vpow.pop %v2793
      %v2795 = vsel %vm2584, %v2794, 0.0
      %v2796 = vrot.slane %v2795, 4
      %v2797 = vadd.f32 %v2795, %v2796
      %v2798 = vrot.slane %v2797, 2
      %v2799 = vadd.f32 %v2797, %v2798
      %v2800 = vrot.slane %v2799, 1
      %v2801 = vadd.f32 %v2799, %v2800
      %v2802 = vrcp.pop %v2801
      %v2803 = vmul.f32 %v2794, %v2802
      %2804 = vst.msk [vmem:[%s280 + $0x50] sm:$0xff] %vm2584, %v2803
      %v2805 = vsel %vm2584, %v2563, -inf
      %v2806 = vrot.slane %v2805, 4
      %v2807 = vmax.f32 %v2805, %v2806
      %v2808 = vrot.slane %v2807, 2
      %v2809 = vmax.f32 %v2807, %v2808
      %v2810 = vrot.slane %v2809, 1
      %v2811 = vmax.f32 %v2809, %v2810
      %v2812 = vsub.f32 %v2563, %v2811
      %v2813 = vmul.f32 %v2812, 1.442695
      %v2814 = vpow.pop %v2813
      %v2815 = vsel %vm2584, %v2814, 0.0
      %v2816 = vrot.slane %v2815, 4
      %v2817 = vadd.f32 %v2815, %v2816
      %v2818 = vrot.slane %v2817, 2
      %v2819 = vadd.f32 %v2817, %v2818
      %v2820 = vrot.slane %v2819, 1
      %v2821 = vadd.f32 %v2819, %v2820
      %v2822 = vrcp.pop %v2821
      %v2823 = vmul.f32 %v2814, %v2822
      %2824 = vst.msk [vmem:[%s280 + $0x58] sm:$0xff] %vm2584, %v2823
      %v2825 = vsel %vm2584, %v2564, -inf
      %v2826 = vrot.slane %v2825, 4
      %v2827 = vmax.f32 %v2825, %v2826
      %v2828 = vrot.slane %v2827, 2
      %v2829 = vmax.f32 %v2827, %v2828
      %v2830 = vrot.slane %v2829, 1
      %v2831 = vmax.f32 %v2829, %v2830
      %v2832 = vsub.f32 %v2564, %v2831
      %v2833 = vmul.f32 %v2832, 1.442695
      %v2834 = vpow.pop %v2833
      %v2835 = vsel %vm2584, %v2834, 0.0
      %v2836 = vrot.slane %v2835, 4
      %v2837 = vadd.f32 %v2835, %v2836
      %v2838 = vrot.slane %v2837, 2
      %v2839 = vadd.f32 %v2837, %v2838
      %v2840 = vrot.slane %v2839, 1
      %v2841 = vadd.f32 %v2839, %v2840
      %v2842 = vrcp.pop %v2841
      %v2843 = vmul.f32 %v2834, %v2842
      %2844 = vst.msk [vmem:[%s280 + $0x60] sm:$0xff] %vm2584, %v2843
      %v2845 = vsel %vm2584, %v2565, -inf
      %v2846 = vrot.slane %v2845, 4
      %v2847 = vmax.f32 %v2845, %v2846
      %v2848 = vrot.slane %v2847, 2
      %v2849 = vmax.f32 %v2847, %v2848
      %v2850 = vrot.slane %v2849, 1
      %v2851 = vmax.f32 %v2849, %v2850
      %v2852 = vsub.f32 %v2565, %v2851
      %v2853 = vmul.f32 %v2852, 1.442695
      %v2854 = vpow.pop %v2853
      %v2855 = vsel %vm2584, %v2854, 0.0
      %v2856 = vrot.slane %v2855, 4
      %v2857 = vadd.f32 %v2855, %v2856
      %v2858 = vrot.slane %v2857, 2
      %v2859 = vadd.f32 %v2857, %v2858
      %v2860 = vrot.slane %v2859, 1
      %v2861 = vadd.f32 %v2859, %v2860
      %v2862 = vrcp.pop %v2861
      %v2863 = vmul.f32 %v2854, %v2862
      %2864 = vst.msk [vmem:[%s280 + $0x68] sm:$0xff] %vm2584, %v2863
      %v2865 = vsel %vm2584, %v2566, -inf
      %v2866 = vrot.slane %v2865, 4
      %v2867 = vmax.f32 %v2865, %v2866
      %v2868 = vrot.slane %v2867, 2
      %v2869 = vmax.f32 %v2867, %v2868
      %v2870 = vrot.slane %v2869, 1
      %v2871 = vmax.f32 %v2869, %v2870
      %v2872 = vsub.f32 %v2566, %v2871
      %v2873 = vmul.f32 %v2872, 1.442695
      %v2874 = vpow.pop %v2873
      %v2875 = vsel %vm2584, %v2874, 0.0
      %v2876 = vrot.slane %v2875, 4
      %v2877 = vadd.f32 %v2875, %v2876
      %v2878 = vrot.slane %v2877, 2
      %v2879 = vadd.f32 %v2877, %v2878
      %v2880 = vrot.slane %v2879, 1
      %v2881 = vadd.f32 %v2879, %v2880
      %v2882 = vrcp.pop %v2881
      %v2883 = vmul.f32 %v2874, %v2882
      %2884 = vst.msk [vmem:[%s280 + $0x70] sm:$0xff] %vm2584, %v2883
      %v2885 = vsel %vm2584, %v2567, -inf
      %v2886 = vrot.slane %v2885, 4
      %v2887 = vmax.f32 %v2885, %v2886
      %v2888 = vrot.slane %v2887, 2
      %v2889 = vmax.f32 %v2887, %v2888
      %v2890 = vrot.slane %v2889, 1
      %v2891 = vmax.f32 %v2889, %v2890
      %v2892 = vsub.f32 %v2567, %v2891
      %v2893 = vmul.f32 %v2892, 1.442695
      %v2894 = vpow.pop %v2893
      %v2895 = vsel %vm2584, %v2894, 0.0
      %v2896 = vrot.slane %v2895, 4
      %v2897 = vadd.f32 %v2895, %v2896
      %v2898 = vrot.slane %v2897, 2
      %v2899 = vadd.f32 %v2897, %v2898
      %v2900 = vrot.slane %v2899, 1
      %v2901 = vadd.f32 %v2899, %v2900
      %v2902 = vrcp.pop %v2901
      %v2903 = vmul.f32 %v2894, %v2902
      %2904 = vst.msk [vmem:[%s280 + $0x78] sm:$0xff] %vm2584, %v2903
      %v2905 = vsel %vm2584, %v2568, -inf
      %v2906 = vrot.slane %v2905, 4
      %v2907 = vmax.f32 %v2905, %v2906
      %v2908 = vrot.slane %v2907, 2
      %v2909 = vmax.f32 %v2907, %v2908
      %v2910 = vrot.slane %v2909, 1
      %v2911 = vmax.f32 %v2909, %v2910
      %v2912 = vsub.f32 %v2568, %v2911
      %v2913 = vmul.f32 %v2912, 1.442695
      %v2914 = vpow.pop %v2913
      %v2915 = vsel %vm2584, %v2914, 0.0
      %v2916 = vrot.slane %v2915, 4
      %v2917 = vadd.f32 %v2915, %v2916
      %v2918 = vrot.slane %v2917, 2
      %v2919 = vadd.f32 %v2917, %v2918
      %v2920 = vrot.slane %v2919, 1
      %v2921 = vadd.f32 %v2919, %v2920
      %v2922 = vrcp.pop %v2921
      %v2923 = vmul.f32 %v2914, %v2922
      %2924 = vst.msk [vmem:[%s280 + $0x80] sm:$0xff] %vm2584, %v2923
      %v2925 = vsel %vm2584, %v2569, -inf
      %v2926 = vrot.slane %v2925, 4
      %v2927 = vmax.f32 %v2925, %v2926
      %v2928 = vrot.slane %v2927, 2
      %v2929 = vmax.f32 %v2927, %v2928
      %v2930 = vrot.slane %v2929, 1
      %v2931 = vmax.f32 %v2929, %v2930
      %v2932 = vsub.f32 %v2569, %v2931
      %v2933 = vmul.f32 %v2932, 1.442695
      %v2934 = vpow.pop %v2933
      %v2935 = vsel %vm2584, %v2934, 0.0
      %v2936 = vrot.slane %v2935, 4
      %v2937 = vadd.f32 %v2935, %v2936
      %v2938 = vrot.slane %v2937, 2
      %v2939 = vadd.f32 %v2937, %v2938
      %v2940 = vrot.slane %v2939, 1
      %v2941 = vadd.f32 %v2939, %v2940
      %v2942 = vrcp.pop %v2941
      %v2943 = vmul.f32 %v2934, %v2942
      %2944 = vst.msk [vmem:[%s280 + $0x88] sm:$0xff] %vm2584, %v2943
      %v2945 = vsel %vm2584, %v2570, -inf
      %v2946 = vrot.slane %v2945, 4
      %v2947 = vmax.f32 %v2945, %v2946
      %v2948 = vrot.slane %v2947, 2
      %v2949 = vmax.f32 %v2947, %v2948
      %v2950 = vrot.slane %v2949, 1
      %v2951 = vmax.f32 %v2949, %v2950
      %v2952 = vsub.f32 %v2570, %v2951
      %v2953 = vmul.f32 %v2952, 1.442695
      %v2954 = vpow.pop %v2953
      %v2955 = vsel %vm2584, %v2954, 0.0
      %v2956 = vrot.slane %v2955, 4
      %v2957 = vadd.f32 %v2955, %v2956
      %v2958 = vrot.slane %v2957, 2
      %v2959 = vadd.f32 %v2957, %v2958
      %v2960 = vrot.slane %v2959, 1
      %v2961 = vadd.f32 %v2959, %v2960
      %v2962 = vrcp.pop %v2961
      %v2963 = vmul.f32 %v2954, %v2962
      %2964 = vst.msk [vmem:[%s280 + $0x90] sm:$0xff] %vm2584, %v2963
      %v2965 = vsel %vm2584, %v2571, -inf
      %v2966 = vrot.slane %v2965, 4
      %v2967 = vmax.f32 %v2965, %v2966
      %v2968 = vrot.slane %v2967, 2
      %v2969 = vmax.f32 %v2967, %v2968
      %v2970 = vrot.slane %v2969, 1
      %v2971 = vmax.f32 %v2969, %v2970
      %v2972 = vsub.f32 %v2571, %v2971
      %v2973 = vmul.f32 %v2972, 1.442695
      %v2974 = vpow.pop %v2973
      %v2975 = vsel %vm2584, %v2974, 0.0
      %v2976 = vrot.slane %v2975, 4
      %v2977 = vadd.f32 %v2975, %v2976
      %v2978 = vrot.slane %v2977, 2
      %v2979 = vadd.f32 %v2977, %v2978
      %v2980 = vrot.slane %v2979, 1
      %v2981 = vadd.f32 %v2979, %v2980
      %v2982 = vrcp.pop %v2981
      %v2983 = vmul.f32 %v2974, %v2982
      %2984 = vst.msk [vmem:[%s280 + $0x98] sm:$0xff] %vm2584, %v2983
      %v2985 = vsel %vm2584, %v2572, -inf
      %v2986 = vrot.slane %v2985, 4
      %v2987 = vmax.f32 %v2985, %v2986
      %v2988 = vrot.slane %v2987, 2
      %v2989 = vmax.f32 %v2987, %v2988
      %v2990 = vrot.slane %v2989, 1
      %v2991 = vmax.f32 %v2989, %v2990
      %v2992 = vsub.f32 %v2572, %v2991
      %v2993 = vmul.f32 %v2992, 1.442695
      %v2994 = vpow.pop %v2993
      %v2995 = vsel %vm2584, %v2994, 0.0
      %v2996 = vrot.slane %v2995, 4
      %v2997 = vadd.f32 %v2995, %v2996
      %v2998 = vrot.slane %v2997, 2
      %v2999 = vadd.f32 %v2997, %v2998
      %v3000 = vrot.slane %v2999, 1
      %v3001 = vadd.f32 %v2999, %v3000
      %v3002 = vrcp.pop %v3001
      %v3003 = vmul.f32 %v2994, %v3002
      %3004 = vst.msk [vmem:[%s280 + $0xa0] sm:$0xff] %vm2584, %v3003
      %v3005 = vsel %vm2584, %v2573, -inf
      %v3006 = vrot.slane %v3005, 4
      %v3007 = vmax.f32 %v3005, %v3006
      %v3008 = vrot.slane %v3007, 2
      %v3009 = vmax.f32 %v3007, %v3008
      %v3010 = vrot.slane %v3009, 1
      %v3011 = vmax.f32 %v3009, %v3010
      %v3012 = vsub.f32 %v2573, %v3011
      %v3013 = vmul.f32 %v3012, 1.442695
      %v3014 = vpow.pop %v3013
      %v3015 = vsel %vm2584, %v3014, 0.0
      %v3016 = vrot.slane %v3015, 4
      %v3017 = vadd.f32 %v3015, %v3016
      %v3018 = vrot.slane %v3017, 2
      %v3019 = vadd.f32 %v3017, %v3018
      %v3020 = vrot.slane %v3019, 1
      %v3021 = vadd.f32 %v3019, %v3020
      %v3022 = vrcp.pop %v3021
      %v3023 = vmul.f32 %v3014, %v3022
      %3024 = vst.msk [vmem:[%s280 + $0xa8] sm:$0xff] %vm2584, %v3023
      %v3025 = vsel %vm2584, %v2574, -inf
      %v3026 = vrot.slane %v3025, 4
      %v3027 = vmax.f32 %v3025, %v3026
      %v3028 = vrot.slane %v3027, 2
      %v3029 = vmax.f32 %v3027, %v3028
      %v3030 = vrot.slane %v3029, 1
      %v3031 = vmax.f32 %v3029, %v3030
      %v3032 = vsub.f32 %v2574, %v3031
      %v3033 = vmul.f32 %v3032, 1.442695
      %v3034 = vpow.pop %v3033
      %v3035 = vsel %vm2584, %v3034, 0.0
      %v3036 = vrot.slane %v3035, 4
      %v3037 = vadd.f32 %v3035, %v3036
      %v3038 = vrot.slane %v3037, 2
      %v3039 = vadd.f32 %v3037, %v3038
      %v3040 = vrot.slane %v3039, 1
      %v3041 = vadd.f32 %v3039, %v3040
      %v3042 = vrcp.pop %v3041
      %v3043 = vmul.f32 %v3034, %v3042
      %3044 = vst.msk [vmem:[%s280 + $0xb0] sm:$0xff] %vm2584, %v3043
      %v3045 = vsel %vm2584, %v2575, -inf
      %v3046 = vrot.slane %v3045, 4
      %v3047 = vmax.f32 %v3045, %v3046
      %v3048 = vrot.slane %v3047, 2
      %v3049 = vmax.f32 %v3047, %v3048
      %v3050 = vrot.slane %v3049, 1
      %v3051 = vmax.f32 %v3049, %v3050
      %v3052 = vsub.f32 %v2575, %v3051
      %v3053 = vmul.f32 %v3052, 1.442695
      %v3054 = vpow.pop %v3053
      %v3055 = vsel %vm2584, %v3054, 0.0
      %v3056 = vrot.slane %v3055, 4
      %v3057 = vadd.f32 %v3055, %v3056
      %v3058 = vrot.slane %v3057, 2
      %v3059 = vadd.f32 %v3057, %v3058
      %v3060 = vrot.slane %v3059, 1
      %v3061 = vadd.f32 %v3059, %v3060
      %v3062 = vrcp.pop %v3061
      %v3063 = vmul.f32 %v3054, %v3062
      %3064 = vst.msk [vmem:[%s280 + $0xb8] sm:$0xff] %vm2584, %v3063
      %v3065 = vsel %vm2584, %v2576, -inf
      %v3066 = vrot.slane %v3065, 4
      %v3067 = vmax.f32 %v3065, %v3066
      %v3068 = vrot.slane %v3067, 2
      %v3069 = vmax.f32 %v3067, %v3068
      %v3070 = vrot.slane %v3069, 1
      %v3071 = vmax.f32 %v3069, %v3070
      %v3072 = vsub.f32 %v2576, %v3071
      %v3073 = vmul.f32 %v3072, 1.442695
      %v3074 = vpow.pop %v3073
      %v3075 = vsel %vm2584, %v3074, 0.0
      %v3076 = vrot.slane %v3075, 4
      %v3077 = vadd.f32 %v3075, %v3076
      %v3078 = vrot.slane %v3077, 2
      %v3079 = vadd.f32 %v3077, %v3078
      %v3080 = vrot.slane %v3079, 1
      %v3081 = vadd.f32 %v3079, %v3080
      %v3082 = vrcp.pop %v3081
      %v3083 = vmul.f32 %v3074, %v3082
      %3084 = vst.msk [vmem:[%s280 + $0xc0] sm:$0xff] %vm2584, %v3083
      %v3085 = vsel %vm2584, %v2577, -inf
      %v3086 = vrot.slane %v3085, 4
      %v3087 = vmax.f32 %v3085, %v3086
      %v3088 = vrot.slane %v3087, 2
      %v3089 = vmax.f32 %v3087, %v3088
      %v3090 = vrot.slane %v3089, 1
      %v3091 = vmax.f32 %v3089, %v3090
      %v3092 = vsub.f32 %v2577, %v3091
      %v3093 = vmul.f32 %v3092, 1.442695
      %v3094 = vpow.pop %v3093
      %v3095 = vsel %vm2584, %v3094, 0.0
      %v3096 = vrot.slane %v3095, 4
      %v3097 = vadd.f32 %v3095, %v3096
      %v3098 = vrot.slane %v3097, 2
      %v3099 = vadd.f32 %v3097, %v3098
      %v3100 = vrot.slane %v3099, 1
      %v3101 = vadd.f32 %v3099, %v3100
      %v3102 = vrcp.pop %v3101
      %v3103 = vmul.f32 %v3094, %v3102
      %3104 = vst.msk [vmem:[%s280 + $0xc8] sm:$0xff] %vm2584, %v3103
      %v3105 = vsel %vm2584, %v2578, -inf
      %v3106 = vrot.slane %v3105, 4
      %v3107 = vmax.f32 %v3105, %v3106
      %v3108 = vrot.slane %v3107, 2
      %v3109 = vmax.f32 %v3107, %v3108
      %v3110 = vrot.slane %v3109, 1
      %v3111 = vmax.f32 %v3109, %v3110
      %v3112 = vsub.f32 %v2578, %v3111
      %v3113 = vmul.f32 %v3112, 1.442695
      %v3114 = vpow.pop %v3113
      %v3115 = vsel %vm2584, %v3114, 0.0
      %v3116 = vrot.slane %v3115, 4
      %v3117 = vadd.f32 %v3115, %v3116
      %v3118 = vrot.slane %v3117, 2
      %v3119 = vadd.f32 %v3117, %v3118
      %v3120 = vrot.slane %v3119, 1
      %v3121 = vadd.f32 %v3119, %v3120
      %v3122 = vrcp.pop %v3121
      %v3123 = vmul.f32 %v3114, %v3122
      %3124 = vst.msk [vmem:[%s280 + $0xd0] sm:$0xff] %vm2584, %v3123
      %v3125 = vsel %vm2584, %v2579, -inf
      %v3126 = vrot.slane %v3125, 4
      %v3127 = vmax.f32 %v3125, %v3126
      %v3128 = vrot.slane %v3127, 2
      %v3129 = vmax.f32 %v3127, %v3128
      %v3130 = vrot.slane %v3129, 1
      %v3131 = vmax.f32 %v3129, %v3130
      %v3132 = vsub.f32 %v2579, %v3131
      %v3133 = vmul.f32 %v3132, 1.442695
      %v3134 = vpow.pop %v3133
      %v3135 = vsel %vm2584, %v3134, 0.0
      %v3136 = vrot.slane %v3135, 4
      %v3137 = vadd.f32 %v3135, %v3136
      %v3138 = vrot.slane %v3137, 2
      %v3139 = vadd.f32 %v3137, %v3138
      %v3140 = vrot.slane %v3139, 1
      %v3141 = vadd.f32 %v3139, %v3140
      %v3142 = vrcp.pop %v3141
      %v3143 = vmul.f32 %v3134, %v3142
      %3144 = vst.msk [vmem:[%s280 + $0xd8] sm:$0xff] %vm2584, %v3143
      %v3145 = vsel %vm2584, %v2580, -inf
      %v3146 = vrot.slane %v3145, 4
      %v3147 = vmax.f32 %v3145, %v3146
      %v3148 = vrot.slane %v3147, 2
      %v3149 = vmax.f32 %v3147, %v3148
      %v3150 = vrot.slane %v3149, 1
      %v3151 = vmax.f32 %v3149, %v3150
      %v3152 = vsub.f32 %v2580, %v3151
      %v3153 = vmul.f32 %v3152, 1.442695
      %v3154 = vpow.pop %v3153
      %v3155 = vsel %vm2584, %v3154, 0.0
      %v3156 = vrot.slane %v3155, 4
      %v3157 = vadd.f32 %v3155, %v3156
      %v3158 = vrot.slane %v3157, 2
      %v3159 = vadd.f32 %v3157, %v3158
      %v3160 = vrot.slane %v3159, 1
      %v3161 = vadd.f32 %v3159, %v3160
      %v3162 = vrcp.pop %v3161
      %v3163 = vmul.f32 %v3154, %v3162
      %3164 = vst.msk [vmem:[%s280 + $0xe0] sm:$0xff] %vm2584, %v3163
      %v3165 = vsel %vm2584, %v2581, -inf
      %v3166 = vrot.slane %v3165, 4
      %v3167 = vmax.f32 %v3165, %v3166
      %v3168 = vrot.slane %v3167, 2
      %v3169 = vmax.f32 %v3167, %v3168
      %v3170 = vrot.slane %v3169, 1
      %v3171 = vmax.f32 %v3169, %v3170
      %v3172 = vsub.f32 %v2581, %v3171
      %v3173 = vmul.f32 %v3172, 1.442695
      %v3174 = vpow.pop %v3173
      %v3175 = vsel %vm2584, %v3174, 0.0
      %v3176 = vrot.slane %v3175, 4
      %v3177 = vadd.f32 %v3175, %v3176
      %v3178 = vrot.slane %v3177, 2
      %v3179 = vadd.f32 %v3177, %v3178
      %v3180 = vrot.slane %v3179, 1
      %v3181 = vadd.f32 %v3179, %v3180
      %v3182 = vrcp.pop %v3181
      %v3183 = vmul.f32 %v3174, %v3182
      %3184 = vst.msk [vmem:[%s280 + $0xe8] sm:$0xff] %vm2584, %v3183
      %v3185 = vsel %vm2584, %v2582, -inf
      %v3186 = vrot.slane %v3185, 4
      %v3187 = vmax.f32 %v3185, %v3186
      %v3188 = vrot.slane %v3187, 2
      %v3189 = vmax.f32 %v3187, %v3188
      %v3190 = vrot.slane %v3189, 1
      %v3191 = vmax.f32 %v3189, %v3190
      %v3192 = vsub.f32 %v2582, %v3191
      %v3193 = vmul.f32 %v3192, 1.442695
      %v3194 = vpow.pop %v3193
      %v3195 = vsel %vm2584, %v3194, 0.0
      %v3196 = vrot.slane %v3195, 4
      %v3197 = vadd.f32 %v3195, %v3196
      %v3198 = vrot.slane %v3197, 2
      %v3199 = vadd.f32 %v3197, %v3198
      %v3200 = vrot.slane %v3199, 1
      %v3201 = vadd.f32 %v3199, %v3200
      %v3202 = vrcp.pop %v3201
      %v3203 = vmul.f32 %v3194, %v3202
      %3204 = vst.msk [vmem:[%s280 + $0xf0] sm:$0xff] %vm2584, %v3203
      %v3205 = vsel %vm2584, %v2583, -inf
      %v3206 = vrot.slane %v3205, 4
      %v3207 = vmax.f32 %v3205, %v3206
      %v3208 = vrot.slane %v3207, 2
      %v3209 = vmax.f32 %v3207, %v3208
      %v3210 = vrot.slane %v3209, 1
      %v3211 = vmax.f32 %v3209, %v3210
      %v3212 = vsub.f32 %v2583, %v3211
      %v3213 = vmul.f32 %v3212, 1.442695
      %v3214 = vpow.pop %v3213
      %v3215 = vsel %vm2584, %v3214, 0.0
      %v3216 = vrot.slane %v3215, 4
      %v3217 = vadd.f32 %v3215, %v3216
      %v3218 = vrot.slane %v3217, 2
      %v3219 = vadd.f32 %v3217, %v3218
      %v3220 = vrot.slane %v3219, 1
      %v3221 = vadd.f32 %v3219, %v3220
      %v3222 = vrcp.pop %v3221
      %v3223 = vmul.f32 %v3214, %v3222
      %3224 = vst.msk [vmem:[%s280 + $0xf8] sm:$0xff] %vm2584, %v3223
      %s3225 = smul.u32 32, %s18
      %p3226 = scmp.lt.s32.totalorder %s3225, 63
      %s3227 = scalar_select %p3226, %s3225, 63
      %s3228 = smul.addr %s3227, 8
      %s3229 = scalar_lea.vmem %s7, %s3228
      // Predicated region
      $region49: #{neural_net_forward.1} parent=47 // pred_check
        %p3230 = pneg %p188
      $region50: #{neural_net_forward.1} parent=47 // pred_check_branch
        %3232 = sbr.rel (%p3230) target = $region52
      $region51: #{neural_net_forward.1} parent=47 // pred_region
        %s3233 = smul.u32 32, %s18
      $region52: #{neural_net_forward.1} parent=47 // pred_fallthru
        _
    $region48: #{neural_net_forward.1} parent=5 // pred_fallthru
      _
    %p3234 = scmp.le.s32.totalorder 2, %s13
    // Predicated region
    $region53: #{neural_net_forward.1} parent=5 // pred_check
      %p3235 = pneg %p3234
    $region54: #{neural_net_forward.1} parent=5 // pred_check_branch
      %3237 = sbr.rel (%p3235) target = $region56
    $region55: #{neural_net_forward.1} parent=5 // pred_region
      %s3238 = ssub.s32 %s13, 2
      // Predicated region
      $region57: #{neural_net_forward.1} parent=55 // pred_check
        %p3239 = pneg %p194
      $region58: #{neural_net_forward.1} parent=55 // pred_check_branch
        %3241 = sbr.rel (%p3239) target = $region60
      $region59: #{neural_net_forward.1} parent=55 // pred_region
        %s3242 = smul.u32 32, %s19
        %p3243 = scmp.lt.s32.totalorder %s3242, 63
        %s3244 = scalar_select %p3243, %s3242, 63
        %s3245 = smul.addr %s3244, 8
        %s3246 = scalar_lea.vmem %s7, %s3245
      $region60: #{neural_net_forward.1} parent=55 // pred_fallthru
        _
    $region56: #{neural_net_forward.1} parent=5 // pred_fallthru
      _
  $region6: #{neural_net_forward.1} parent=0 // loop_footer
    %s17 = sadd.s32 1, %s13
  $region7: #{neural_net_forward.1} parent=0 // loop_footer_branch
    %12 = sbr.rel target = $region3
  $region8: #{neural_net_forward.1} parent=0 // loop_exit
    _

</llo_original>
